<compile_context>
chip_gen: v7x
topology: tpu7x:2x2x1
jax: 0.10.0
libtpu: 0.0.40
codegen_flags: <defaults>
</compile_context>

<pallas_src>
import jax
import jax.numpy as jnp
from jax import lax
from jax.experimental import pallas as pl
from jax.experimental.pallas import tpu as pltpu


_TAPS = [(dh, dw) for dh in range(3) for dw in range(3)]


def _use_im2col(c_in, c_out):
    # Fold the 9 taps into the contraction only while the patch scratch stays small.
    return 9 * max(c_in, c_out) <= 512


def _make_resblock_kernel(H, W, C_in, C_out, mode, use_im2col):
    """mode: 'same' (C_out==C_in), 'up' (C_out>C_in), 'down' (C_out<C_in)."""
    f32 = jnp.float32
    bf16 = jnp.bfloat16

    def _fill_padded(pad_ref, interior, c):
        # Zero ONLY the 1-pixel halo; the interior is fully overwritten right after.
        pad_ref[0:1, :, :] = jnp.zeros((1, W + 2, c), f32)
        pad_ref[H + 1:H + 2, :, :] = jnp.zeros((1, W + 2, c), f32)
        pad_ref[:, 0:1, :] = jnp.zeros((H + 2, 1, c), f32)
        pad_ref[:, W + 1:W + 2, :] = jnp.zeros((H + 2, 1, c), f32)
        pad_ref[1:H + 1, 1:W + 1, :] = interior

    def _conv_im2col(pad_ref, patch_ref, w_ref, b, c):
        # Pack the 9 shifted taps into one (H*W, 9*c) bf16 patch, then a single
        # MXU contraction with K = 9*c (f32 accumulation).
        for t, (dh, dw) in enumerate(_TAPS):
            patch_ref[:, t * c:(t + 1) * c] = (
                pad_ref[dh:dh + H, dw:dw + W, :].reshape(H * W, c).astype(bf16))
        acc = jnp.dot(patch_ref[...], w_ref[...], preferred_element_type=f32)
        return acc + b                                          # (H*W, C_out) f32

    def _conv_taps(pad_ref, w_ref, b, c):
        # Fallback for large channel counts: 9 bf16 dots, f32 accumulation.
        acc = jnp.zeros((H * W, C_out), f32)
        for t, (dh, dw) in enumerate(_TAPS):
            patch = pad_ref[dh:dh + H, dw:dw + W, :].reshape(H * W, c).astype(bf16)
            acc = acc + jnp.dot(patch, w_ref[t * c:(t + 1) * c, :],
                                preferred_element_type=f32)
        return acc + b

    def _body(x_ref, w1_ref, b1_ref, w2_ref, b2_ref, o_ref,
              xpad_ref, hpad_ref, p1_ref, p2_ref):
        x = x_ref[0].astype(f32)                                # (H, W, C_in), bf16 stream
        _fill_padded(xpad_ref, x, C_in)

        # conv1 + bias + ReLU (ReLU/bias in f32 on the VPU).
        if use_im2col:
            h = _conv_im2col(xpad_ref, p1_ref, w1_ref, b1_ref[...], C_in)
        else:
            h = _conv_taps(xpad_ref, w1_ref, b1_ref[...], C_in)
        h = jnp.maximum(h, 0.0)                                 # (H*W, C_out) f32

        # Pad the intermediate for conv2 (stays in VMEM, never hits HBM).
        _fill_padded(hpad_ref, h.reshape(H, W, C_out), C_out)

        # conv2 + bias
        if use_im2col:
            y = _conv_im2col(hpad_ref, p2_ref, w2_ref, b2_ref[...], C_out)
        else:
            y = _conv_taps(hpad_ref, w2_ref, b2_ref[...], C_out)

        # Residual path (static Python branch, resolved at trace time).
        if mode == "same":
            out = y + x.reshape(H * W, C_in)
            o_ref[0] = out.reshape(H, W, C_out).astype(o_ref.dtype)
        elif mode == "down":
            out = y + h                                         # residual = relu(conv1(x))
            o_ref[0] = out.reshape(H, W, C_out).astype(o_ref.dtype)
        else:  # "up": residual = x on the first C_in channels, zero elsewhere.
            x2d = x.reshape(H * W, C_in)
            o_ref[0, :, :, 0:C_in] = (
                (y[:, 0:C_in] + x2d).reshape(H, W, C_in).astype(o_ref.dtype))
            o_ref[0, :, :, C_in:C_out] = (
                y[:, C_in:C_out].reshape(H, W, C_out - C_in).astype(o_ref.dtype))

    if use_im2col:
        def kernel(x_ref, w1_ref, b1_ref, w2_ref, b2_ref, o_ref,
                   xpad_ref, hpad_ref, p1_ref, p2_ref):
            _body(x_ref, w1_ref, b1_ref, w2_ref, b2_ref, o_ref,
                  xpad_ref, hpad_ref, p1_ref, p2_ref)
    else:
        def kernel(x_ref, w1_ref, b1_ref, w2_ref, b2_ref, o_ref,
                   xpad_ref, hpad_ref):
            _body(x_ref, w1_ref, b1_ref, w2_ref, b2_ref, o_ref,
                  xpad_ref, hpad_ref, None, None)
    return kernel


def prepare_params(w1, b1, w2, b2):
    """One-time layout + dtype conversion of PyTorch-style parameters.

    w*: (C_out, C_in, 3, 3) OIHW -> (9*C_in, C_out) bf16 "im2col" weight matrix
        (row order = (tap, channel), tap order dh-major, matching the kernel).
    b*: (C_out,) -> (1, C_out) f32.
    """
    def flat(w):
        hwio = jnp.transpose(jnp.asarray(w, jnp.float32), (2, 3, 1, 0))  # (3,3,Cin,Cout)
        return hwio.reshape(-1, hwio.shape[-1]).astype(jnp.bfloat16)      # (9*Cin, Cout)

    return (flat(w1), jnp.asarray(b1, jnp.float32).reshape(1, -1),
            flat(w2), jnp.asarray(b2, jnp.float32).reshape(1, -1))


def resblock_forward_nhwc(x_nhwc, params, out_dtype=jnp.bfloat16):
    """NHWC-in / NHWC-out ResBlock (use this when chaining blocks: no transposes,
    bf16 activations between blocks)."""
    w1, b1, w2, b2 = params
    B, H, W, C_in = x_nhwc.shape
    C_out = w1.shape[-1]
    assert w1.shape == (9 * C_in, C_out) and w2.shape == (9 * C_out, C_out)

    if C_out > C_in:
        mode = "up"
    elif C_out < C_in:
        mode = "down"
    else:
        mode = "same"
    use_im2col = _use_im2col(C_in, C_out)

    x = x_nhwc.astype(jnp.bfloat16)              # bf16 HBM stream (halves input bytes)

    in_specs = [
        pl.BlockSpec((1, H, W, C_in), lambda b: (b, 0, 0, 0)),
        # Constant index maps -> weights/biases stay resident in VMEM across the grid.
        # (For very large C, pin these to a single buffer; tiny here.)
        pl.BlockSpec((9 * C_in, C_out), lambda b: (0, 0)),
        pl.BlockSpec((1, C_out), lambda b: (0, 0)),
        pl.BlockSpec((9 * C_out, C_out), lambda b: (0, 0)),
        pl.BlockSpec((1, C_out), lambda b: (0, 0)),
    ]
    scratch = [
        pltpu.VMEM((H + 2, W + 2, C_in), jnp.float32),    # padded x (f32, see NOTE)
        pltpu.VMEM((H + 2, W + 2, C_out), jnp.float32),   # padded relu(conv1)
    ]
    if use_im2col:
        scratch += [
            pltpu.VMEM((H * W, 9 * C_in), jnp.bfloat16),  # im2col patch for conv1
            pltpu.VMEM((H * W, 9 * C_out), jnp.bfloat16), # im2col patch for conv2
        ]

    kernel = _make_resblock_kernel(H, W, C_in, C_out, mode, use_im2col)

    flops = B * H * W * 9 * 2 * (C_in * C_out + C_out * C_out)
    bytes_accessed = int(x.size * 2 + w1.size * 2 + w2.size * 2
                         + (b1.size + b2.size) * 4
                         + B * H * W * C_out * jnp.dtype(out_dtype).itemsize)

    # Generation-aware scoped-VMEM budget: raise v5e's small default, stay well
    # inside v7x's 64 MiB physical VMEM.
    try:
        vmem_cap = pltpu.get_tpu_info().vmem_capacity_bytes
    except Exception:
        vmem_cap = 64 * 1024 * 1024
    vmem_limit = int(min(vmem_cap * 3 // 4, 112 * 1024 * 1024))

    # TODO(synk): for large H*W add an H-tile grid axis (1-row halo) and tile the
    # M dimension of the dots; for C_out << 128 emit a lane-dense output layout.
    out = pl.pallas_call(
        kernel,
        out_shape=jax.ShapeDtypeStruct((B, H, W, C_out), out_dtype),
        grid_spec=pltpu.PrefetchScalarGridSpec(
            num_scalar_prefetch=0,
            grid=(B,),
            in_specs=in_specs,
            out_specs=pl.BlockSpec((1, H, W, C_out), lambda b: (b, 0, 0, 0)),
            scratch_shapes=scratch),
        compiler_params=pltpu.CompilerParams(
            dimension_semantics=("parallel",),
            vmem_limit_bytes=vmem_limit),
        cost_estimate=pl.CostEstimate(
            flops=flops, transcendentals=0, bytes_accessed=bytes_accessed),
    )(x, w1, b1, w2, b2)
    return out


def resblock_forward(x_nchw, params, out_dtype=jnp.float32):
    """PyTorch-compatible interface: (B, C_in, H, W) NCHW -> (B, C_out, H, W)."""
    x = jnp.transpose(x_nchw, (0, 2, 3, 1))                  # NCHW -> NHWC
    out = resblock_forward_nhwc(x, params, out_dtype=out_dtype)
    return jnp.transpose(out, (0, 3, 1, 2))                  # NHWC -> NCHW


# ----------------------------- reference & test -----------------------------

def _conv3x3_ref(x, w, b):
    y = lax.conv_general_dilated(
        x, w, window_strides=(1, 1), padding=((1, 1), (1, 1)),
        dimension_numbers=("NCHW", "OIHW", "NCHW"),
        preferred_element_type=jnp.float32)
    return y + b.reshape(1, -1, 1, 1)


def resblock_reference(x, w1, b1, w2, b2, mxu_dtype=None):
    """Reference forward. mxu_dtype=bfloat16 mirrors the kernel's numerics
    (bf16 matmul operands, f32 accumulation); mxu_dtype=None is the exact f32 spec."""
    if mxu_dtype is None:
        q = lambda a: a
    else:
        q = lambda a: a.astype(mxu_dtype).astype(jnp.float32)
    c_in, c_out = x.shape[1], w1.shape[0]
    xq, w1q, w2q = q(x), q(w1), q(w2)
    h = jax.nn.relu(_conv3x3_ref(xq, w1q, b1))
    y = _conv3x3_ref(q(h), w2q, b2)
    if c_out > c_in:
        pad = jnp.zeros((x.shape[0], c_out - c_in, x.shape[2], x.shape[3]), x.dtype)
        return jnp.concatenate([xq, pad], axis=1) + y
    elif c_out < c_in:
        return h + y
    else:
        return xq + y


def _make_block_params(key, c_in, c_out):
    k1, k2, k3, k4 = jax.random.split(key, 4)
    w1 = jax.random.normal(k1, (c_out, c_in, 3, 3), jnp.float32) / jnp.sqrt(9.0 * c_in)
    b1 = jax.random.normal(k2, (c_out,), jnp.float32) * 0.05
    w2 = jax.random.normal(k3, (c_out, c_out, 3, 3), jnp.float32) / jnp.sqrt(9.0 * c_out)
    b2 = jax.random.normal(k4, (c_out,), jnp.float32) * 0.05
    return w1, b1, w2, b2


if __name__ == "__main__":
    key = jax.random.PRNGKey(0)
    B, H, W = 2, 16, 16

    # Exercise all three forward branches: same / channel-up / channel-down.
    for c_in, c_out in [(4, 4), (4, 8), (8, 4)]:
        key, kx, kp = jax.random.split(key, 3)
        x = jax.random.normal(kx, (B, c_in, H, W), jnp.float32)
        w1, b1, w2, b2 = _make_block_params(kp, c_in, c_out)

        params = prepare_params(w1, b1, w2, b2)   # one-time layout/dtype conversion
        out = resblock_forward(x, params)         # NCHW in -> NCHW f32 out
        out = jax.block_until_ready(out)
        assert out.shape == (B, c_out, H, W)

        # Tight check against a reference that mirrors the kernel's bf16-operand /
        # f32-accumulate numerics.
        ref_bf16 = resblock_reference(x, w1, b1, w2, b2, mxu_dtype=jnp.bfloat16)
        assert jnp.allclose(out, ref_bf16, atol=5e-3, rtol=5e-3), \
            f"mismatch vs bf16-matched reference (C_in={c_in}, C_out={c_out})"

        # Loose sanity check against the exact f32 spec (bf16 MXU precision).
        ref_f32 = resblock_reference(x, w1, b1, w2, b2)
        assert jnp.allclose(out, ref_f32, atol=1e-1, rtol=1e-1), \
            f"mismatch vs f32 reference (C_in={c_in}, C_out={c_out})"

    print("KERNEL_OK")
</pallas_src>

<mosaic_0001>
module attributes {stable_mosaic.version = 11 : i64} {
  func.func @kernel(%arg0: i32, %arg1: memref<1x16x16x4xbf16, #tpu.memory_space<vmem>>, %arg2: memref<36x4xbf16, #tpu.memory_space<vmem>>, %arg3: memref<1x4xf32, #tpu.memory_space<vmem>>, %arg4: memref<36x4xbf16, #tpu.memory_space<vmem>>, %arg5: memref<1x4xf32, #tpu.memory_space<vmem>>, %arg6: memref<1x16x16x4xf32, #tpu.memory_space<vmem>>, %arg7: memref<18x18x4xf32, #tpu.memory_space<vmem>>, %arg8: memref<18x18x4xf32, #tpu.memory_space<vmem>>, %arg9: memref<256x36xbf16, #tpu.memory_space<vmem>>, %arg10: memref<256x36xbf16, #tpu.memory_space<vmem>>) attributes {dimension_semantics = [#tpu.dimension_semantics<parallel>], iteration_bounds = array<i64: 2>, scalar_prefetch = 0 : i64, scratch_operands = 4 : i64, tpu.core_type = #tpu.core_type<tc>, window_params = [{transform_indices = @transform_0, window_bounds = array<i64: 1, 16, 16, 4>}, {pipeline_mode = #tpu.pipeline_mode<synchronous>, transform_indices = @transform_1, window_bounds = array<i64: 36, 4>}, {pipeline_mode = #tpu.pipeline_mode<synchronous>, transform_indices = @transform_2, window_bounds = array<i64: 1, 4>}, {pipeline_mode = #tpu.pipeline_mode<synchronous>, transform_indices = @transform_3, window_bounds = array<i64: 36, 4>}, {pipeline_mode = #tpu.pipeline_mode<synchronous>, transform_indices = @transform_4, window_bounds = array<i64: 1, 4>}, {transform_indices = @transform_5, window_bounds = array<i64: 1, 16, 16, 4>}]} {
    %c0 = arith.constant 0 : index
    %c0_0 = arith.constant 0 : index
    %c0_1 = arith.constant 0 : index
    %c0_2 = arith.constant 0 : index
    %0 = vector.load %arg1[%c0, %c0_0, %c0_1, %c0_2] : memref<1x16x16x4xbf16, #tpu.memory_space<vmem>>, vector<1x16x16x4xbf16>
    %1 = vector.shape_cast %0 : vector<1x16x16x4xbf16> to vector<16x16x4xbf16>
    %2 = arith.extf %1 : vector<16x16x4xbf16> to vector<16x16x4xf32>
    %cst = arith.constant 0.000000e+00 : f32
    %3 = vector.broadcast %cst : f32 to vector<1x18x4xf32>
    %c0_3 = arith.constant 0 : index
    %c0_4 = arith.constant 0 : index
    %c0_5 = arith.constant 0 : index
    %4 = vector.load %arg7[%c0_3, %c0_4, %c0_5] : memref<18x18x4xf32, #tpu.memory_space<vmem>>, vector<1x18x4xf32>
    tpu.vector_store %arg7[%c0_3, %c0_4, %c0_5], %3 {strides = array<i32>} : memref<18x18x4xf32, #tpu.memory_space<vmem>>, vector<1x18x4xf32>,
    %cst_6 = arith.constant 0.000000e+00 : f32
    %5 = vector.broadcast %cst_6 : f32 to vector<1x18x4xf32>
    %c17 = arith.constant 17 : index
    %c0_7 = arith.constant 0 : index
    %c0_8 = arith.constant 0 : index
    %6 = vector.load %arg7[%c17, %c0_7, %c0_8] : memref<18x18x4xf32, #tpu.memory_space<vmem>>, vector<1x18x4xf32>
    tpu.vector_store %arg7[%c17, %c0_7, %c0_8], %5 {strides = array<i32>} : memref<18x18x4xf32, #tpu.memory_space<vmem>>, vector<1x18x4xf32>,
    %cst_9 = arith.constant 0.000000e+00 : f32
    %7 = vector.broadcast %cst_9 : f32 to vector<18x1x4xf32>
    %c0_10 = arith.constant 0 : index
    %c0_11 = arith.constant 0 : index
    %c0_12 = arith.constant 0 : index
    %8 = vector.load %arg7[%c0_10, %c0_11, %c0_12] : memref<18x18x4xf32, #tpu.memory_space<vmem>>, vector<18x1x4xf32>
    tpu.vector_store %arg7[%c0_10, %c0_11, %c0_12], %7 {strides = array<i32>} : memref<18x18x4xf32, #tpu.memory_space<vmem>>, vector<18x1x4xf32>,
    %cst_13 = arith.constant 0.000000e+00 : f32
    %9 = vector.broadcast %cst_13 : f32 to vector<18x1x4xf32>
    %c0_14 = arith.constant 0 : index
    %c17_15 = arith.constant 17 : index
    %c0_16 = arith.constant 0 : index
    %10 = vector.load %arg7[%c0_14, %c17_15, %c0_16] : memref<18x18x4xf32, #tpu.memory_space<vmem>>, vector<18x1x4xf32>
    tpu.vector_store %arg7[%c0_14, %c17_15, %c0_16], %9 {strides = array<i32>} : memref<18x18x4xf32, #tpu.memory_space<vmem>>, vector<18x1x4xf32>,
    %c1 = arith.constant 1 : index
    %c1_17 = arith.constant 1 : index
    %c0_18 = arith.constant 0 : index
    %11 = vector.load %arg7[%c1, %c1_17, %c0_18] : memref<18x18x4xf32, #tpu.memory_space<vmem>>, vector<16x16x4xf32>
    tpu.vector_store %arg7[%c1, %c1_17, %c0_18], %2 {strides = array<i32>} : memref<18x18x4xf32, #tpu.memory_space<vmem>>, vector<16x16x4xf32>,
    %c0_19 = arith.constant 0 : index
    %c0_20 = arith.constant 0 : index
    %12 = vector.load %arg3[%c0_19, %c0_20] : memref<1x4xf32, #tpu.memory_space<vmem>>, vector<1x4xf32>
    %c0_21 = arith.constant 0 : index
    %c0_22 = arith.constant 0 : index
    %c0_23 = arith.constant 0 : index
    %13 = vector.load %arg7[%c0_21, %c0_22, %c0_23] : memref<18x18x4xf32, #tpu.memory_space<vmem>>, vector<16x16x4xf32>
    %14 = vector.shape_cast %13 : vector<16x16x4xf32> to vector<256x4xf32>
    %15 = arith.truncf %14 : vector<256x4xf32> to vector<256x4xbf16>
    %c0_24 = arith.constant 0 : index
    %c0_25 = arith.constant 0 : index
    %16 = vector.load %arg9[%c0_24, %c0_25] : memref<256x36xbf16, #tpu.memory_space<vmem>>, vector<256x4xbf16>
    tpu.vector_store %arg9[%c0_24, %c0_25], %15 {strides = array<i32>} : memref<256x36xbf16, #tpu.memory_space<vmem>>, vector<256x4xbf16>,
    %c0_26 = arith.constant 0 : index
    %c1_27 = arith.constant 1 : index
    %c0_28 = arith.constant 0 : index
    %17 = vector.load %arg7[%c0_26, %c1_27, %c0_28] : memref<18x18x4xf32, #tpu.memory_space<vmem>>, vector<16x16x4xf32>
    %18 = vector.shape_cast %17 : vector<16x16x4xf32> to vector<256x4xf32>
    %19 = arith.truncf %18 : vector<256x4xf32> to vector<256x4xbf16>
    %c0_29 = arith.constant 0 : index
    %c4 = arith.constant 4 : index
    %20 = vector.load %arg9[%c0_29, %c4] : memref<256x36xbf16, #tpu.memory_space<vmem>>, vector<256x4xbf16>
    tpu.vector_store %arg9[%c0_29, %c4], %19 {strides = array<i32>} : memref<256x36xbf16, #tpu.memory_space<vmem>>, vector<256x4xbf16>,
    %c0_30 = arith.constant 0 : index
    %c2 = arith.constant 2 : index
    %c0_31 = arith.constant 0 : index
    %21 = vector.load %arg7[%c0_30, %c2, %c0_31] : memref<18x18x4xf32, #tpu.memory_space<vmem>>, vector<16x16x4xf32>
    %22 = vector.shape_cast %21 : vector<16x16x4xf32> to vector<256x4xf32>
    %23 = arith.truncf %22 : vector<256x4xf32> to vector<256x4xbf16>
    %c0_32 = arith.constant 0 : index
    %c8 = arith.constant 8 : index
    %24 = vector.load %arg9[%c0_32, %c8] : memref<256x36xbf16, #tpu.memory_space<vmem>>, vector<256x4xbf16>
    tpu.vector_store %arg9[%c0_32, %c8], %23 {strides = array<i32>} : memref<256x36xbf16, #tpu.memory_space<vmem>>, vector<256x4xbf16>,
    %c1_33 = arith.constant 1 : index
    %c0_34 = arith.constant 0 : index
    %c0_35 = arith.constant 0 : index
    %25 = vector.load %arg7[%c1_33, %c0_34, %c0_35] : memref<18x18x4xf32, #tpu.memory_space<vmem>>, vector<16x16x4xf32>
    %26 = vector.shape_cast %25 : vector<16x16x4xf32> to vector<256x4xf32>
    %27 = arith.truncf %26 : vector<256x4xf32> to vector<256x4xbf16>
    %c0_36 = arith.constant 0 : index
    %c12 = arith.constant 12 : index
    %28 = vector.load %arg9[%c0_36, %c12] : memref<256x36xbf16, #tpu.memory_space<vmem>>, vector<256x4xbf16>
    tpu.vector_store %arg9[%c0_36, %c12], %27 {strides = array<i32>} : memref<256x36xbf16, #tpu.memory_space<vmem>>, vector<256x4xbf16>,
    %c1_37 = arith.constant 1 : index
    %c1_38 = arith.constant 1 : index
    %c0_39 = arith.constant 0 : index
    %29 = vector.load %arg7[%c1_37, %c1_38, %c0_39] : memref<18x18x4xf32, #tpu.memory_space<vmem>>, vector<16x16x4xf32>
    %30 = vector.shape_cast %29 : vector<16x16x4xf32> to vector<256x4xf32>
    %31 = arith.truncf %30 : vector<256x4xf32> to vector<256x4xbf16>
    %c0_40 = arith.constant 0 : index
    %c16 = arith.constant 16 : index
    %32 = vector.load %arg9[%c0_40, %c16] : memref<256x36xbf16, #tpu.memory_space<vmem>>, vector<256x4xbf16>
    tpu.vector_store %arg9[%c0_40, %c16], %31 {strides = array<i32>} : memref<256x36xbf16, #tpu.memory_space<vmem>>, vector<256x4xbf16>,
    %c1_41 = arith.constant 1 : index
    %c2_42 = arith.constant 2 : index
    %c0_43 = arith.constant 0 : index
    %33 = vector.load %arg7[%c1_41, %c2_42, %c0_43] : memref<18x18x4xf32, #tpu.memory_space<vmem>>, vector<16x16x4xf32>
    %34 = vector.shape_cast %33 : vector<16x16x4xf32> to vector<256x4xf32>
    %35 = arith.truncf %34 : vector<256x4xf32> to vector<256x4xbf16>
    %c0_44 = arith.constant 0 : index
    %c20 = arith.constant 20 : index
    %36 = vector.load %arg9[%c0_44, %c20] : memref<256x36xbf16, #tpu.memory_space<vmem>>, vector<256x4xbf16>
    tpu.vector_store %arg9[%c0_44, %c20], %35 {strides = array<i32>} : memref<256x36xbf16, #tpu.memory_space<vmem>>, vector<256x4xbf16>,
    %c2_45 = arith.constant 2 : index
    %c0_46 = arith.constant 0 : index
    %c0_47 = arith.constant 0 : index
    %37 = vector.load %arg7[%c2_45, %c0_46, %c0_47] : memref<18x18x4xf32, #tpu.memory_space<vmem>>, vector<16x16x4xf32>
    %38 = vector.shape_cast %37 : vector<16x16x4xf32> to vector<256x4xf32>
    %39 = arith.truncf %38 : vector<256x4xf32> to vector<256x4xbf16>
    %c0_48 = arith.constant 0 : index
    %c24 = arith.constant 24 : index
    %40 = vector.load %arg9[%c0_48, %c24] : memref<256x36xbf16, #tpu.memory_space<vmem>>, vector<256x4xbf16>
    tpu.vector_store %arg9[%c0_48, %c24], %39 {strides = array<i32>} : memref<256x36xbf16, #tpu.memory_space<vmem>>, vector<256x4xbf16>,
    %c2_49 = arith.constant 2 : index
    %c1_50 = arith.constant 1 : index
    %c0_51 = arith.constant 0 : index
    %41 = vector.load %arg7[%c2_49, %c1_50, %c0_51] : memref<18x18x4xf32, #tpu.memory_space<vmem>>, vector<16x16x4xf32>
    %42 = vector.shape_cast %41 : vector<16x16x4xf32> to vector<256x4xf32>
    %43 = arith.truncf %42 : vector<256x4xf32> to vector<256x4xbf16>
    %c0_52 = arith.constant 0 : index
    %c28 = arith.constant 28 : index
    %44 = vector.load %arg9[%c0_52, %c28] : memref<256x36xbf16, #tpu.memory_space<vmem>>, vector<256x4xbf16>
    tpu.vector_store %arg9[%c0_52, %c28], %43 {strides = array<i32>} : memref<256x36xbf16, #tpu.memory_space<vmem>>, vector<256x4xbf16>,
    %c2_53 = arith.constant 2 : index
    %c2_54 = arith.constant 2 : index
    %c0_55 = arith.constant 0 : index
    %45 = vector.load %arg7[%c2_53, %c2_54, %c0_55] : memref<18x18x4xf32, #tpu.memory_space<vmem>>, vector<16x16x4xf32>
    %46 = vector.shape_cast %45 : vector<16x16x4xf32> to vector<256x4xf32>
    %47 = arith.truncf %46 : vector<256x4xf32> to vector<256x4xbf16>
    %c0_56 = arith.constant 0 : index
    %c32 = arith.constant 32 : index
    %48 = vector.load %arg9[%c0_56, %c32] : memref<256x36xbf16, #tpu.memory_space<vmem>>, vector<256x4xbf16>
    tpu.vector_store %arg9[%c0_56, %c32], %47 {strides = array<i32>} : memref<256x36xbf16, #tpu.memory_space<vmem>>, vector<256x4xbf16>,
    %c0_57 = arith.constant 0 : index
    %c0_58 = arith.constant 0 : index
    %49 = vector.load %arg9[%c0_57, %c0_58] : memref<256x36xbf16, #tpu.memory_space<vmem>>, vector<256x36xbf16>
    %c0_59 = arith.constant 0 : index
    %c0_60 = arith.constant 0 : index
    %50 = vector.load %arg2[%c0_59, %c0_60] : memref<36x4xbf16, #tpu.memory_space<vmem>>, vector<36x4xbf16>
    %cst_61 = arith.constant dense<0.000000e+00> : vector<256x4xf32>
    %51 = tpu.matmul %49, %50, %cst_61 {dimension_numbers = #tpu.dot_dimension_numbers<[1], [0], [0], [1], [0, 0, 1, 1], [], []>} : vector<256x36xbf16>, vector<36x4xbf16>, vector<256x4xf32> -> vector<256x4xf32>
    %52 = vector.broadcast %12 : vector<1x4xf32> to vector<256x4xf32>
    %53 = arith.addf %51, %52 : vector<256x4xf32>
    %cst_62 = arith.constant 0.000000e+00 : f32
    %54 = vector.broadcast %cst_62 : f32 to vector<256x4xf32>
    %55 = arith.maximumf %53, %54 : vector<256x4xf32>
    %56 = vector.shape_cast %55 : vector<256x4xf32> to vector<16x16x4xf32>
    %cst_63 = arith.constant 0.000000e+00 : f32
    %57 = vector.broadcast %cst_63 : f32 to vector<1x18x4xf32>
    %c0_64 = arith.constant 0 : index
    %c0_65 = arith.constant 0 : index
    %c0_66 = arith.constant 0 : index
    %58 = vector.load %arg8[%c0_64, %c0_65, %c0_66] : memref<18x18x4xf32, #tpu.memory_space<vmem>>, vector<1x18x4xf32>
    tpu.vector_store %arg8[%c0_64, %c0_65, %c0_66], %57 {strides = array<i32>} : memref<18x18x4xf32, #tpu.memory_space<vmem>>, vector<1x18x4xf32>,
    %cst_67 = arith.constant 0.000000e+00 : f32
    %59 = vector.broadcast %cst_67 : f32 to vector<1x18x4xf32>
    %c17_68 = arith.constant 17 : index
    %c0_69 = arith.constant 0 : index
    %c0_70 = arith.constant 0 : index
    %60 = vector.load %arg8[%c17_68, %c0_69, %c0_70] : memref<18x18x4xf32, #tpu.memory_space<vmem>>, vector<1x18x4xf32>
    tpu.vector_store %arg8[%c17_68, %c0_69, %c0_70], %59 {strides = array<i32>} : memref<18x18x4xf32, #tpu.memory_space<vmem>>, vector<1x18x4xf32>,
    %cst_71 = arith.constant 0.000000e+00 : f32
    %61 = vector.broadcast %cst_71 : f32 to vector<18x1x4xf32>
    %c0_72 = arith.constant 0 : index
    %c0_73 = arith.constant 0 : index
    %c0_74 = arith.constant 0 : index
    %62 = vector.load %arg8[%c0_72, %c0_73, %c0_74] : memref<18x18x4xf32, #tpu.memory_space<vmem>>, vector<18x1x4xf32>
    tpu.vector_store %arg8[%c0_72, %c0_73, %c0_74], %61 {strides = array<i32>} : memref<18x18x4xf32, #tpu.memory_space<vmem>>, vector<18x1x4xf32>,
    %cst_75 = arith.constant 0.000000e+00 : f32
    %63 = vector.broadcast %cst_75 : f32 to vector<18x1x4xf32>
    %c0_76 = arith.constant 0 : index
    %c17_77 = arith.constant 17 : index
    %c0_78 = arith.constant 0 : index
    %64 = vector.load %arg8[%c0_76, %c17_77, %c0_78] : memref<18x18x4xf32, #tpu.memory_space<vmem>>, vector<18x1x4xf32>
    tpu.vector_store %arg8[%c0_76, %c17_77, %c0_78], %63 {strides = array<i32>} : memref<18x18x4xf32, #tpu.memory_space<vmem>>, vector<18x1x4xf32>,
    %c1_79 = arith.constant 1 : index
    %c1_80 = arith.constant 1 : index
    %c0_81 = arith.constant 0 : index
    %65 = vector.load %arg8[%c1_79, %c1_80, %c0_81] : memref<18x18x4xf32, #tpu.memory_space<vmem>>, vector<16x16x4xf32>
    tpu.vector_store %arg8[%c1_79, %c1_80, %c0_81], %56 {strides = array<i32>} : memref<18x18x4xf32, #tpu.memory_space<vmem>>, vector<16x16x4xf32>,
    %c0_82 = arith.constant 0 : index
    %c0_83 = arith.constant 0 : index
    %66 = vector.load %arg5[%c0_82, %c0_83] : memref<1x4xf32, #tpu.memory_space<vmem>>, vector<1x4xf32>
    %c0_84 = arith.constant 0 : index
    %c0_85 = arith.constant 0 : index
    %c0_86 = arith.constant 0 : index
    %67 = vector.load %arg8[%c0_84, %c0_85, %c0_86] : memref<18x18x4xf32, #tpu.memory_space<vmem>>, vector<16x16x4xf32>
    %68 = vector.shape_cast %67 : vector<16x16x4xf32> to vector<256x4xf32>
    %69 = arith.truncf %68 : vector<256x4xf32> to vector<256x4xbf16>
    %c0_87 = arith.constant 0 : index
    %c0_88 = arith.constant 0 : index
    %70 = vector.load %arg10[%c0_87, %c0_88] : memref<256x36xbf16, #tpu.memory_space<vmem>>, vector<256x4xbf16>
    tpu.vector_store %arg10[%c0_87, %c0_88], %69 {strides = array<i32>} : memref<256x36xbf16, #tpu.memory_space<vmem>>, vector<256x4xbf16>,
    %c0_89 = arith.constant 0 : index
    %c1_90 = arith.constant 1 : index
    %c0_91 = arith.constant 0 : index
    %71 = vector.load %arg8[%c0_89, %c1_90, %c0_91] : memref<18x18x4xf32, #tpu.memory_space<vmem>>, vector<16x16x4xf32>
    %72 = vector.shape_cast %71 : vector<16x16x4xf32> to vector<256x4xf32>
    %73 = arith.truncf %72 : vector<256x4xf32> to vector<256x4xbf16>
    %c0_92 = arith.constant 0 : index
    %c4_93 = arith.constant 4 : index
    %74 = vector.load %arg10[%c0_92, %c4_93] : memref<256x36xbf16, #tpu.memory_space<vmem>>, vector<256x4xbf16>
    tpu.vector_store %arg10[%c0_92, %c4_93], %73 {strides = array<i32>} : memref<256x36xbf16, #tpu.memory_space<vmem>>, vector<256x4xbf16>,
    %c0_94 = arith.constant 0 : index
    %c2_95 = arith.constant 2 : index
    %c0_96 = arith.constant 0 : index
    %75 = vector.load %arg8[%c0_94, %c2_95, %c0_96] : memref<18x18x4xf32, #tpu.memory_space<vmem>>, vector<16x16x4xf32>
    %76 = vector.shape_cast %75 : vector<16x16x4xf32> to vector<256x4xf32>
    %77 = arith.truncf %76 : vector<256x4xf32> to vector<256x4xbf16>
    %c0_97 = arith.constant 0 : index
    %c8_98 = arith.constant 8 : index
    %78 = vector.load %arg10[%c0_97, %c8_98] : memref<256x36xbf16, #tpu.memory_space<vmem>>, vector<256x4xbf16>
    tpu.vector_store %arg10[%c0_97, %c8_98], %77 {strides = array<i32>} : memref<256x36xbf16, #tpu.memory_space<vmem>>, vector<256x4xbf16>,
    %c1_99 = arith.constant 1 : index
    %c0_100 = arith.constant 0 : index
    %c0_101 = arith.constant 0 : index
    %79 = vector.load %arg8[%c1_99, %c0_100, %c0_101] : memref<18x18x4xf32, #tpu.memory_space<vmem>>, vector<16x16x4xf32>
    %80 = vector.shape_cast %79 : vector<16x16x4xf32> to vector<256x4xf32>
    %81 = arith.truncf %80 : vector<256x4xf32> to vector<256x4xbf16>
    %c0_102 = arith.constant 0 : index
    %c12_103 = arith.constant 12 : index
    %82 = vector.load %arg10[%c0_102, %c12_103] : memref<256x36xbf16, #tpu.memory_space<vmem>>, vector<256x4xbf16>
    tpu.vector_store %arg10[%c0_102, %c12_103], %81 {strides = array<i32>} : memref<256x36xbf16, #tpu.memory_space<vmem>>, vector<256x4xbf16>,
    %c1_104 = arith.constant 1 : index
    %c1_105 = arith.constant 1 : index
    %c0_106 = arith.constant 0 : index
    %83 = vector.load %arg8[%c1_104, %c1_105, %c0_106] : memref<18x18x4xf32, #tpu.memory_space<vmem>>, vector<16x16x4xf32>
    %84 = vector.shape_cast %83 : vector<16x16x4xf32> to vector<256x4xf32>
    %85 = arith.truncf %84 : vector<256x4xf32> to vector<256x4xbf16>
    %c0_107 = arith.constant 0 : index
    %c16_108 = arith.constant 16 : index
    %86 = vector.load %arg10[%c0_107, %c16_108] : memref<256x36xbf16, #tpu.memory_space<vmem>>, vector<256x4xbf16>
    tpu.vector_store %arg10[%c0_107, %c16_108], %85 {strides = array<i32>} : memref<256x36xbf16, #tpu.memory_space<vmem>>, vector<256x4xbf16>,
    %c1_109 = arith.constant 1 : index
    %c2_110 = arith.constant 2 : index
    %c0_111 = arith.constant 0 : index
    %87 = vector.load %arg8[%c1_109, %c2_110, %c0_111] : memref<18x18x4xf32, #tpu.memory_space<vmem>>, vector<16x16x4xf32>
    %88 = vector.shape_cast %87 : vector<16x16x4xf32> to vector<256x4xf32>
    %89 = arith.truncf %88 : vector<256x4xf32> to vector<256x4xbf16>
    %c0_112 = arith.constant 0 : index
    %c20_113 = arith.constant 20 : index
    %90 = vector.load %arg10[%c0_112, %c20_113] : memref<256x36xbf16, #tpu.memory_space<vmem>>, vector<256x4xbf16>
    tpu.vector_store %arg10[%c0_112, %c20_113], %89 {strides = array<i32>} : memref<256x36xbf16, #tpu.memory_space<vmem>>, vector<256x4xbf16>,
    %c2_114 = arith.constant 2 : index
    %c0_115 = arith.constant 0 : index
    %c0_116 = arith.constant 0 : index
    %91 = vector.load %arg8[%c2_114, %c0_115, %c0_116] : memref<18x18x4xf32, #tpu.memory_space<vmem>>, vector<16x16x4xf32>
    %92 = vector.shape_cast %91 : vector<16x16x4xf32> to vector<256x4xf32>
    %93 = arith.truncf %92 : vector<256x4xf32> to vector<256x4xbf16>
    %c0_117 = arith.constant 0 : index
    %c24_118 = arith.constant 24 : index
    %94 = vector.load %arg10[%c0_117, %c24_118] : memref<256x36xbf16, #tpu.memory_space<vmem>>, vector<256x4xbf16>
    tpu.vector_store %arg10[%c0_117, %c24_118], %93 {strides = array<i32>} : memref<256x36xbf16, #tpu.memory_space<vmem>>, vector<256x4xbf16>,
    %c2_119 = arith.constant 2 : index
    %c1_120 = arith.constant 1 : index
    %c0_121 = arith.constant 0 : index
    %95 = vector.load %arg8[%c2_119, %c1_120, %c0_121] : memref<18x18x4xf32, #tpu.memory_space<vmem>>, vector<16x16x4xf32>
    %96 = vector.shape_cast %95 : vector<16x16x4xf32> to vector<256x4xf32>
    %97 = arith.truncf %96 : vector<256x4xf32> to vector<256x4xbf16>
    %c0_122 = arith.constant 0 : index
    %c28_123 = arith.constant 28 : index
    %98 = vector.load %arg10[%c0_122, %c28_123] : memref<256x36xbf16, #tpu.memory_space<vmem>>, vector<256x4xbf16>
    tpu.vector_store %arg10[%c0_122, %c28_123], %97 {strides = array<i32>} : memref<256x36xbf16, #tpu.memory_space<vmem>>, vector<256x4xbf16>,
    %c2_124 = arith.constant 2 : index
    %c2_125 = arith.constant 2 : index
    %c0_126 = arith.constant 0 : index
    %99 = vector.load %arg8[%c2_124, %c2_125, %c0_126] : memref<18x18x4xf32, #tpu.memory_space<vmem>>, vector<16x16x4xf32>
    %100 = vector.shape_cast %99 : vector<16x16x4xf32> to vector<256x4xf32>
    %101 = arith.truncf %100 : vector<256x4xf32> to vector<256x4xbf16>
    %c0_127 = arith.constant 0 : index
    %c32_128 = arith.constant 32 : index
    %102 = vector.load %arg10[%c0_127, %c32_128] : memref<256x36xbf16, #tpu.memory_space<vmem>>, vector<256x4xbf16>
    tpu.vector_store %arg10[%c0_127, %c32_128], %101 {strides = array<i32>} : memref<256x36xbf16, #tpu.memory_space<vmem>>, vector<256x4xbf16>,
    %c0_129 = arith.constant 0 : index
    %c0_130 = arith.constant 0 : index
    %103 = vector.load %arg10[%c0_129, %c0_130] : memref<256x36xbf16, #tpu.memory_space<vmem>>, vector<256x36xbf16>
    %c0_131 = arith.constant 0 : index
    %c0_132 = arith.constant 0 : index
    %104 = vector.load %arg4[%c0_131, %c0_132] : memref<36x4xbf16, #tpu.memory_space<vmem>>, vector<36x4xbf16>
    %cst_133 = arith.constant dense<0.000000e+00> : vector<256x4xf32>
    %105 = tpu.matmul %103, %104, %cst_133 {dimension_numbers = #tpu.dot_dimension_numbers<[1], [0], [0], [1], [0, 0, 1, 1], [], []>} : vector<256x36xbf16>, vector<36x4xbf16>, vector<256x4xf32> -> vector<256x4xf32>
    %106 = vector.broadcast %66 : vector<1x4xf32> to vector<256x4xf32>
    %107 = arith.addf %105, %106 : vector<256x4xf32>
    %108 = vector.shape_cast %2 : vector<16x16x4xf32> to vector<256x4xf32>
    %109 = arith.addf %107, %108 : vector<256x4xf32>
    %110 = vector.shape_cast %109 : vector<256x4xf32> to vector<16x16x4xf32>
    %c0_134 = arith.constant 0 : index
    %c0_135 = arith.constant 0 : index
    %c0_136 = arith.constant 0 : index
    %c0_137 = arith.constant 0 : index
    %111 = vector.load %arg6[%c0_134, %c0_135, %c0_136, %c0_137] : memref<1x16x16x4xf32, #tpu.memory_space<vmem>>, vector<1x16x16x4xf32>
    %112 = vector.shape_cast %111 : vector<1x16x16x4xf32> to vector<16x16x4xf32>
    %113 = vector.shape_cast %110 : vector<16x16x4xf32> to vector<1x16x16x4xf32>
    tpu.vector_store %arg6[%c0_134, %c0_135, %c0_136, %c0_137], %113 {strides = array<i32>} : memref<1x16x16x4xf32, #tpu.memory_space<vmem>>, vector<1x16x16x4xf32>,
    return
  }
  func.func @transform_0(%arg0: i32) -> (i32, i32, i32, i32) {
    %c0_i32 = arith.constant 0 : i32
    %c0_i32_0 = arith.constant 0 : i32
    %c0_i32_1 = arith.constant 0 : i32
    %c0_i32_2 = arith.constant 0 : i32
    return %arg0, %c0_i32, %c0_i32_0, %c0_i32_1 : i32, i32, i32, i32
  }
  func.func @transform_1(%arg0: i32) -> (i32, i32) {
    %c0_i32 = arith.constant 0 : i32
    %c0_i32_0 = arith.constant 0 : i32
    %c0_i32_1 = arith.constant 0 : i32
    return %c0_i32, %c0_i32_0 : i32, i32
  }
  func.func @transform_2(%arg0: i32) -> (i32, i32) {
    %c0_i32 = arith.constant 0 : i32
    %c0_i32_0 = arith.constant 0 : i32
    %c0_i32_1 = arith.constant 0 : i32
    return %c0_i32, %c0_i32_0 : i32, i32
  }
  func.func @transform_3(%arg0: i32) -> (i32, i32) {
    %c0_i32 = arith.constant 0 : i32
    %c0_i32_0 = arith.constant 0 : i32
    %c0_i32_1 = arith.constant 0 : i32
    return %c0_i32, %c0_i32_0 : i32, i32
  }
  func.func @transform_4(%arg0: i32) -> (i32, i32) {
    %c0_i32 = arith.constant 0 : i32
    %c0_i32_0 = arith.constant 0 : i32
    %c0_i32_1 = arith.constant 0 : i32
    return %c0_i32, %c0_i32_0 : i32, i32
  }
  func.func @transform_5(%arg0: i32) -> (i32, i32, i32, i32) {
    %c0_i32 = arith.constant 0 : i32
    %c0_i32_0 = arith.constant 0 : i32
    %c0_i32_1 = arith.constant 0 : i32
    %c0_i32_2 = arith.constant 0 : i32
    return %arg0, %c0_i32, %c0_i32_0, %c0_i32_1 : i32, i32, i32, i32
  }
}

</mosaic_0001>

<llo_original>
// kernel: tpu_custom_call.1
$region0: #{tpu_custom_call.1}
  #allocation0 [shape = 'u32[]', space=smem, size = 0x4, offset = 0x4, fixed_abs, tag = 'smem constant byte address 0x4 - core index']
  #allocation1 [shape = 'u32[144,128]{1,0:T(1,128)}', space=vmem, size = 0x12000, scoped, tag = 'internal scratch']
  #allocation2 [shape = 'f32[18,18,4]{2,1,0:T(8,128)}', space=vmem, size = 0x36000, scoped, tag = 'scratch operand']
  #allocation3 [shape = 'f32[18,18,4]{2,1,0:T(8,128)}', space=vmem, size = 0x36000, scoped, tag = 'scratch operand']
  #allocation4 [shape = 'bf16[256,36]{1,0:T(16,128)(2,1)}', space=vmem, size = 0x10000, scoped, tag = 'scratch operand']
  #allocation5 [shape = 'bf16[256,36]{1,0:T(16,128)(2,1)}', space=vmem, size = 0x10000, scoped, tag = 'scratch operand']
  %s0 = inlined_call_operand.vmem [shape: bf16[2,16,16,4], index: 0, kind: input, shape index: {}]
  %s1 = inlined_call_operand.vmem [shape: bf16[36,4], index: 1, kind: input, shape index: {}]
  %s2 = inlined_call_operand.vmem [shape: f32[1,4], index: 2, kind: input, shape index: {}]
  %s3 = inlined_call_operand.vmem [shape: bf16[36,4], index: 3, kind: input, shape index: {}]
  %s4 = inlined_call_operand.vmem [shape: f32[1,4], index: 4, kind: input, shape index: {}]
  %s5 = inlined_call_operand.vmem [shape: f32[2,16,16,4], index: 5, kind: output, shape index: {}]
  %s6 = sld [smem:[#allocation0]]
  $region53: #{tpu_custom_call.1} parent=0
    _
  %s8 = ssub.s32 1, %s6
  %s9 = scalar_select 0, %s8, %s6
  loop: start=0, step=1, limit=4
  $region2: #{tpu_custom_call.1} parent=0 // loop_pre_header
    _
  $region3: #{tpu_custom_call.1} parent=0 // loop_header
    %s11 = sphi 0, %s15
    %p12 = scmp.ge.s32.totalorder %s11, 4
    %s21 = sphi 0, %s23
    %s24 = sphi 0, %s21
    %s25 = sphi 0, %s24
    %s41 = sphi 0, %s25
    %s45 = sphi 0, %s45
    %s47 = sphi 0, %s45
    %s48 = sphi 0, %s47
    %s62 = sphi 0, %s48
    %s66 = sphi 0, %s66
    %s68 = sphi 0, %s66
    %s69 = sphi 0, %s68
    %s83 = sphi 0, %s69
    %s87 = sphi 0, %s87
    %s89 = sphi 0, %s87
    %s90 = sphi 0, %s89
    %s104 = sphi 0, %s90
    %s108 = sphi 0, %s108
    %s110 = sphi 0, %s108
    %s111 = sphi 0, %s110
    %s125 = sphi 0, %s111
    %s131 = sphi 0, %s133
    %s134 = sphi 0, %s131
    %s135 = sphi 0, %s134
    %s151 = sphi 0, %s135
  $region4: #{tpu_custom_call.1} parent=0 // loop_header_branch
    %14 = sbr.rel (%p12) target = $region8
  $region5: #{tpu_custom_call.1} parent=0 // loop_body
    %s16 = ssub.s32 %s11, 1
    %s17 = ssub.s32 %s11, 2
    %s18 = sadd.s32 %s11, 1
    %s19 = ssub.s32 %s11, %s18
    %p20 = scmp.eq.s32.totalorder %s19, 0
    %s22 = sadd.s32 %s21, 1
    %s23 = scalar_select %p20, %s21, %s22
    %p26 = pneg %p20
    %p27 = scmp.eq.s32.totalorder %s11, 1
    %p28 = por %p26, %p27
    %p29 = scmp.ne.s32.totalorder %s21, %s24
    %p30 = scmp.eq.s32.totalorder %s11, 0
    %p31 = por %p29, %p30
    %p32 = scmp.ne.s32.totalorder %s21, %s24
    %p33 = scmp.eq.s32.totalorder %s16, 1
    %p34 = por %p32, %p33
    %p35 = scmp.ne.s32.totalorder %s24, %s25
    %p36 = scmp.eq.s32.totalorder %s16, 0
    %p37 = por %p35, %p36
    %p38 = scmp.ne.s32.totalorder %s24, %s25
    %p39 = scmp.eq.s32.totalorder %s17, 1
    %p40 = por %p38, %p39
    %p42 = scmp.ne.s32.totalorder %s25, %s41
    %p43 = scmp.eq.s32.totalorder %s17, 0
    %p44 = por %p42, %p43
    %s46 = sadd.s32 %s45, 1
    %p49 = scmp.eq.s32.totalorder %s11, 1
    %p50 = scmp.ne.s32.totalorder %s45, %s47
    %p51 = scmp.eq.s32.totalorder %s11, 0
    %p52 = por %p50, %p51
    %p53 = scmp.ne.s32.totalorder %s45, %s47
    %p54 = scmp.eq.s32.totalorder %s16, 1
    %p55 = por %p53, %p54
    %p56 = scmp.ne.s32.totalorder %s47, %s48
    %p57 = scmp.eq.s32.totalorder %s16, 0
    %p58 = por %p56, %p57
    %p59 = scmp.ne.s32.totalorder %s47, %s48
    %p60 = scmp.eq.s32.totalorder %s17, 1
    %p61 = por %p59, %p60
    %p63 = scmp.ne.s32.totalorder %s48, %s62
    %p64 = scmp.eq.s32.totalorder %s17, 0
    %p65 = por %p63, %p64
    %s67 = sadd.s32 %s66, 1
    %p70 = scmp.eq.s32.totalorder %s11, 1
    %p71 = scmp.ne.s32.totalorder %s66, %s68
    %p72 = scmp.eq.s32.totalorder %s11, 0
    %p73 = por %p71, %p72
    %p74 = scmp.ne.s32.totalorder %s66, %s68
    %p75 = scmp.eq.s32.totalorder %s16, 1
    %p76 = por %p74, %p75
    %p77 = scmp.ne.s32.totalorder %s68, %s69
    %p78 = scmp.eq.s32.totalorder %s16, 0
    %p79 = por %p77, %p78
    %p80 = scmp.ne.s32.totalorder %s68, %s69
    %p81 = scmp.eq.s32.totalorder %s17, 1
    %p82 = por %p80, %p81
    %p84 = scmp.ne.s32.totalorder %s69, %s83
    %p85 = scmp.eq.s32.totalorder %s17, 0
    %p86 = por %p84, %p85
    %s88 = sadd.s32 %s87, 1
    %p91 = scmp.eq.s32.totalorder %s11, 1
    %p92 = scmp.ne.s32.totalorder %s87, %s89
    %p93 = scmp.eq.s32.totalorder %s11, 0
    %p94 = por %p92, %p93
    %p95 = scmp.ne.s32.totalorder %s87, %s89
    %p96 = scmp.eq.s32.totalorder %s16, 1
    %p97 = por %p95, %p96
    %p98 = scmp.ne.s32.totalorder %s89, %s90
    %p99 = scmp.eq.s32.totalorder %s16, 0
    %p100 = por %p98, %p99
    %p101 = scmp.ne.s32.totalorder %s89, %s90
    %p102 = scmp.eq.s32.totalorder %s17, 1
    %p103 = por %p101, %p102
    %p105 = scmp.ne.s32.totalorder %s90, %s104
    %p106 = scmp.eq.s32.totalorder %s17, 0
    %p107 = por %p105, %p106
    %s109 = sadd.s32 %s108, 1
    %p112 = scmp.eq.s32.totalorder %s11, 1
    %p113 = scmp.ne.s32.totalorder %s108, %s110
    %p114 = scmp.eq.s32.totalorder %s11, 0
    %p115 = por %p113, %p114
    %p116 = scmp.ne.s32.totalorder %s108, %s110
    %p117 = scmp.eq.s32.totalorder %s16, 1
    %p118 = por %p116, %p117
    %p119 = scmp.ne.s32.totalorder %s110, %s111
    %p120 = scmp.eq.s32.totalorder %s16, 0
    %p121 = por %p119, %p120
    %p122 = scmp.ne.s32.totalorder %s110, %s111
    %p123 = scmp.eq.s32.totalorder %s17, 1
    %p124 = por %p122, %p123
    %p126 = scmp.ne.s32.totalorder %s111, %s125
    %p127 = scmp.eq.s32.totalorder %s17, 0
    %p128 = por %p126, %p127
    %s129 = ssub.s32 %s11, %s18
    %p130 = scmp.eq.s32.totalorder %s129, 0
    %s132 = sadd.s32 %s131, 1
    %s133 = scalar_select %p130, %s131, %s132
    %p136 = pneg %p130
    %p137 = scmp.eq.s32.totalorder %s11, 1
    %p138 = por %p136, %p137
    %p139 = scmp.ne.s32.totalorder %s131, %s134
    %p140 = scmp.eq.s32.totalorder %s11, 0
    %p141 = por %p139, %p140
    %p142 = scmp.ne.s32.totalorder %s131, %s134
    %p143 = scmp.eq.s32.totalorder %s16, 1
    %p144 = por %p142, %p143
    %p145 = scmp.ne.s32.totalorder %s134, %s135
    %p146 = scmp.eq.s32.totalorder %s16, 0
    %p147 = por %p145, %p146
    %p148 = scmp.ne.s32.totalorder %s134, %s135
    %p149 = scmp.eq.s32.totalorder %s17, 1
    %p150 = por %p148, %p149
    %p152 = scmp.ne.s32.totalorder %s135, %s151
    %p153 = scmp.eq.s32.totalorder %s17, 0
    %p154 = por %p152, %p153
    %p155 = scmp.le.s32.totalorder 1, %s11
    %p156 = scmp.lt.s32.totalorder %s11, 3
    %p157 = pnand %p155, %p156
    %p158 = pneg %p157
    // Predicated region
    $region9: #{tpu_custom_call.1} parent=5 // pred_check
      _
    $region10: #{tpu_custom_call.1} parent=5 // pred_check_branch
      %160 = sbr.rel (%p157) target = $region12
    $region11: #{tpu_custom_call.1} parent=5 // pred_region
      %s161 = ssub.s32 %s11, 1
      // Predicated region
      $region13: #{tpu_custom_call.1} parent=11 // pred_check
        %p162 = pneg %p58
      $region14: #{tpu_custom_call.1} parent=11 // pred_check_branch
        %164 = sbr.rel (%p162) target = $region16
      $region15: #{tpu_custom_call.1} parent=11 // pred_region
        _
      $region16: #{tpu_custom_call.1} parent=11 // pred_fallthru
        _
      // Predicated region
      $region17: #{tpu_custom_call.1} parent=11 // pred_check
        %p165 = pneg %p79
      $region18: #{tpu_custom_call.1} parent=11 // pred_check_branch
        %167 = sbr.rel (%p165) target = $region20
      $region19: #{tpu_custom_call.1} parent=11 // pred_region
        _
      $region20: #{tpu_custom_call.1} parent=11 // pred_fallthru
        _
      // Predicated region
      $region21: #{tpu_custom_call.1} parent=11 // pred_check
        %p168 = pneg %p100
      $region22: #{tpu_custom_call.1} parent=11 // pred_check_branch
        %170 = sbr.rel (%p168) target = $region24
      $region23: #{tpu_custom_call.1} parent=11 // pred_region
        _
      $region24: #{tpu_custom_call.1} parent=11 // pred_fallthru
        _
      // Predicated region
      $region25: #{tpu_custom_call.1} parent=11 // pred_check
        %p171 = pneg %p121
      $region26: #{tpu_custom_call.1} parent=11 // pred_check_branch
        %173 = sbr.rel (%p171) target = $region28
      $region27: #{tpu_custom_call.1} parent=11 // pred_region
        _
      $region28: #{tpu_custom_call.1} parent=11 // pred_fallthru
        _
    $region12: #{tpu_custom_call.1} parent=5 // pred_fallthru
      _
    %p174 = scmp.lt.s32.totalorder %s11, 2
    // Predicated region
    $region29: #{tpu_custom_call.1} parent=5 // pred_check
      %p175 = pneg %p174
    $region30: #{tpu_custom_call.1} parent=5 // pred_check_branch
      %177 = sbr.rel (%p175) target = $region32
    $region31: #{tpu_custom_call.1} parent=5 // pred_region
      // Predicated region
      $region33: #{tpu_custom_call.1} parent=31 // pred_check
        %p178 = pneg %p31
      $region34: #{tpu_custom_call.1} parent=31 // pred_check_branch
        %180 = sbr.rel (%p178) target = $region36
      $region35: #{tpu_custom_call.1} parent=31 // pred_region
        %p181 = scmp.lt.s32.totalorder %s11, 1
        %s182 = scalar_select %p181, %s11, 1
        %s183 = smul.addr %s182, 32
        %s184 = smul.addr %s183, 4
        %s185 = scalar_lea.vmem %s0, %s184
      $region36: #{tpu_custom_call.1} parent=31 // pred_fallthru
        _
    $region32: #{tpu_custom_call.1} parent=5 // pred_fallthru
      _
    %p186 = scmp.le.s32.totalorder 1, %s11
    %p187 = scmp.lt.s32.totalorder %s11, 3
    %p188 = pnand %p186, %p187
    %p189 = pneg %p188
    // Predicated region
    $region37: #{tpu_custom_call.1} parent=5 // pred_check
      _
    $region38: #{tpu_custom_call.1} parent=5 // pred_check_branch
      %191 = sbr.rel (%p188) target = $region40
    $region39: #{tpu_custom_call.1} parent=5 // pred_region
      %s192 = ssub.s32 %s11, 1
      %p193 = scmp.lt.s32.totalorder %s16, 1
      %s194 = scalar_select %p193, %s16, 1
      %s195 = smul.addr %s194, 32
      %s196 = smul.addr %s195, 4
      %s197 = scalar_lea.vmem %s0, %s196
      %p198 = pneg %p37
      %p199 = pneg %p34
      %p200 = pneg %p58
      %p201 = pneg %p55
      %p202 = pneg %p79
      %p203 = pneg %p76
      %p204 = pneg %p100
      %p205 = pneg %p97
      %p206 = pneg %p121
      %p207 = pneg %p118
      %p208 = pneg %p147
      %p209 = pneg %p144
      %p210 = scmp.lt.s32.totalorder %s16, 1
      %s211 = scalar_select %p210, %s16, 1
      %s212 = smul.addr %s211, 32
      %s213 = smul.addr %s212, 8
      %s214 = scalar_lea.vmem %s5, %s213
      %p215 = scmp.lt.s32.totalorder %s16, 1
      %s216 = scalar_select %p215, %s16, 1
      %s217 = smul.addr %s216, 32
      %s218 = smul.addr %s217, 4
      %s219 = scalar_lea.vmem %s0, %s218
      %p220 = scmp.lt.s32.totalorder %s16, 1
      %s221 = scalar_select %p220, %s16, 1
      %s222 = smul.addr %s221, 32
      %s223 = smul.addr %s222, 8
      %s224 = scalar_lea.vmem %s5, %s223
      %v226 = vld [vmem:[%s219] sm:$0xf]
      %v227 = vld [vmem:[%s219 + $0x4] sm:$0xf]
      %v228 = vld [vmem:[%s219 + $0x8] sm:$0xf]
      %v229 = vld [vmem:[%s219 + $0xc] sm:$0xf]
      %v230 = vld [vmem:[%s219 + $0x10] sm:$0xf]
      %v231 = vld [vmem:[%s219 + $0x14] sm:$0xf]
      %v232 = vld [vmem:[%s219 + $0x18] sm:$0xf]
      %v233 = vld [vmem:[%s219 + $0x1c] sm:$0xf]
      %v234 = vld [vmem:[%s219 + $0x20] sm:$0xf]
      %v235 = vld [vmem:[%s219 + $0x24] sm:$0xf]
      %v236 = vld [vmem:[%s219 + $0x28] sm:$0xf]
      %v237 = vld [vmem:[%s219 + $0x2c] sm:$0xf]
      %v238 = vld [vmem:[%s219 + $0x30] sm:$0xf]
      %v239 = vld [vmem:[%s219 + $0x34] sm:$0xf]
      %v240 = vld [vmem:[%s219 + $0x38] sm:$0xf]
      %v241 = vld [vmem:[%s219 + $0x3c] sm:$0xf]
      %v242 = vld [vmem:[%s219 + $0x40] sm:$0xf]
      %v243 = vld [vmem:[%s219 + $0x44] sm:$0xf]
      %v244 = vld [vmem:[%s219 + $0x48] sm:$0xf]
      %v245 = vld [vmem:[%s219 + $0x4c] sm:$0xf]
      %v246 = vld [vmem:[%s219 + $0x50] sm:$0xf]
      %v247 = vld [vmem:[%s219 + $0x54] sm:$0xf]
      %v248 = vld [vmem:[%s219 + $0x58] sm:$0xf]
      %v249 = vld [vmem:[%s219 + $0x5c] sm:$0xf]
      %v250 = vld [vmem:[%s219 + $0x60] sm:$0xf]
      %v251 = vld [vmem:[%s219 + $0x64] sm:$0xf]
      %v252 = vld [vmem:[%s219 + $0x68] sm:$0xf]
      %v253 = vld [vmem:[%s219 + $0x6c] sm:$0xf]
      %v254 = vld [vmem:[%s219 + $0x70] sm:$0xf]
      %v255 = vld [vmem:[%s219 + $0x74] sm:$0xf]
      %v256 = vld [vmem:[%s219 + $0x78] sm:$0xf]
      %v257 = vld [vmem:[%s219 + $0x7c] sm:$0xf]
      %v258 = vunpack.c.l.bf16 %v226
      %v259 = vunpack.c.l.bf16 %v227
      %v260 = vunpack.c.l.bf16 %v228
      %v261 = vunpack.c.l.bf16 %v229
      %v262 = vunpack.c.l.bf16 %v230
      %v263 = vunpack.c.l.bf16 %v231
      %v264 = vunpack.c.l.bf16 %v232
      %v265 = vunpack.c.l.bf16 %v233
      %v266 = vunpack.c.l.bf16 %v234
      %v267 = vunpack.c.l.bf16 %v235
      %v268 = vunpack.c.l.bf16 %v236
      %v269 = vunpack.c.l.bf16 %v237
      %v270 = vunpack.c.l.bf16 %v238
      %v271 = vunpack.c.l.bf16 %v239
      %v272 = vunpack.c.l.bf16 %v240
      %v273 = vunpack.c.l.bf16 %v241
      %v274 = vunpack.c.l.bf16 %v242
      %v275 = vunpack.c.l.bf16 %v243
      %v276 = vunpack.c.l.bf16 %v244
      %v277 = vunpack.c.l.bf16 %v245
      %v278 = vunpack.c.l.bf16 %v246
      %v279 = vunpack.c.l.bf16 %v247
      %v280 = vunpack.c.l.bf16 %v248
      %v281 = vunpack.c.l.bf16 %v249
      %v282 = vunpack.c.l.bf16 %v250
      %v283 = vunpack.c.l.bf16 %v251
      %v284 = vunpack.c.l.bf16 %v252
      %v285 = vunpack.c.l.bf16 %v253
      %v286 = vunpack.c.l.bf16 %v254
      %v287 = vunpack.c.l.bf16 %v255
      %v288 = vunpack.c.l.bf16 %v256
      %v289 = vunpack.c.l.bf16 %v257
      %vm290 = vcmask 31744
      %291 = vst.msk [vmem:[#allocation2] sm:$0xff] %vm290, 0.0
      %292 = vst.msk [vmem:[#allocation2 + $0x8] sm:$0xff] %vm290, 0.0
      %vm293 = vcmask 25600
      %294 = vst.msk [vmem:[#allocation2 + $0x10] sm:$0x3] %vm293, 0.0
      %s295 = scalar_lea.vmem [#allocation2], 408
      %296 = vst.msk [vmem:[%s295] sm:$0xff] %vm290, 0.0
      %297 = vst.msk [vmem:[%s295 + $0x8] sm:$0xff] %vm290, 0.0
      %298 = vst.msk [vmem:[%s295 + $0x10] sm:$0x3] %vm293, 0.0
      %vm299 = vcmask 24576
      %300 = vst.msk [vmem:[#allocation2] sm:$0x1] %vm299, 0.0
      %301 = vst.msk [vmem:[#allocation2 + $0x18] sm:$0x1] %vm299, 0.0
      %302 = vst.msk [vmem:[#allocation2 + $0x30] sm:$0x1] %vm299, 0.0
      %303 = vst.msk [vmem:[#allocation2 + $0x48] sm:$0x1] %vm299, 0.0
      %304 = vst.msk [vmem:[#allocation2 + $0x60] sm:$0x1] %vm299, 0.0
      %305 = vst.msk [vmem:[#allocation2 + $0x78] sm:$0x1] %vm299, 0.0
      %306 = vst.msk [vmem:[#allocation2 + $0x90] sm:$0x1] %vm299, 0.0
      %307 = vst.msk [vmem:[#allocation2 + $0xa8] sm:$0x1] %vm299, 0.0
      %308 = vst.msk [vmem:[#allocation2 + $0xc0] sm:$0x1] %vm299, 0.0
      %309 = vst.msk [vmem:[#allocation2 + $0xd8] sm:$0x1] %vm299, 0.0
      %310 = vst.msk [vmem:[#allocation2 + $0xf0] sm:$0x1] %vm299, 0.0
      %311 = vst.msk [vmem:[#allocation2 + $0x108] sm:$0x1] %vm299, 0.0
      %312 = vst.msk [vmem:[#allocation2 + $0x120] sm:$0x1] %vm299, 0.0
      %313 = vst.msk [vmem:[#allocation2 + $0x138] sm:$0x1] %vm299, 0.0
      %314 = vst.msk [vmem:[#allocation2 + $0x150] sm:$0x1] %vm299, 0.0
      %315 = vst.msk [vmem:[#allocation2 + $0x168] sm:$0x1] %vm299, 0.0
      %316 = vst.msk [vmem:[#allocation2 + $0x180] sm:$0x1] %vm299, 0.0
      %317 = vst.msk [vmem:[#allocation2 + $0x198] sm:$0x1] %vm299, 0.0
      %318 = vst.msk [vmem:[#allocation2 + $0x11] sm:$0x1] %vm299, 0.0
      %319 = vst.msk [vmem:[#allocation2 + $0x29] sm:$0x1] %vm299, 0.0
      %320 = vst.msk [vmem:[#allocation2 + $0x41] sm:$0x1] %vm299, 0.0
      %321 = vst.msk [vmem:[#allocation2 + $0x59] sm:$0x1] %vm299, 0.0
      %322 = vst.msk [vmem:[#allocation2 + $0x71] sm:$0x1] %vm299, 0.0
      %323 = vst.msk [vmem:[#allocation2 + $0x89] sm:$0x1] %vm299, 0.0
      %324 = vst.msk [vmem:[#allocation2 + $0xa1] sm:$0x1] %vm299, 0.0
      %325 = vst.msk [vmem:[#allocation2 + $0xb9] sm:$0x1] %vm299, 0.0
      %326 = vst.msk [vmem:[#allocation2 + $0xd1] sm:$0x1] %vm299, 0.0
      %327 = vst.msk [vmem:[#allocation2 + $0xe9] sm:$0x1] %vm299, 0.0
      %328 = vst.msk [vmem:[#allocation2 + $0x101] sm:$0x1] %vm299, 0.0
      %329 = vst.msk [vmem:[#allocation2 + $0x119] sm:$0x1] %vm299, 0.0
      %330 = vst.msk [vmem:[#allocation2 + $0x131] sm:$0x1] %vm299, 0.0
      %331 = vst.msk [vmem:[#allocation2 + $0x149] sm:$0x1] %vm299, 0.0
      %332 = vst.msk [vmem:[#allocation2 + $0x161] sm:$0x1] %vm299, 0.0
      %333 = vst.msk [vmem:[#allocation2 + $0x179] sm:$0x1] %vm299, 0.0
      %334 = vst.msk [vmem:[#allocation2 + $0x191] sm:$0x1] %vm299, 0.0
      %335 = vst.msk [vmem:[#allocation2 + $0x1a9] sm:$0x1] %vm299, 0.0
      %s336 = scalar_lea.vmem [#allocation2], 24
      %337 = vst.msk [vmem:[%s336 + $0x1] sm:$0xff] %vm290, %v258
      %338 = vst.msk [vmem:[%s336 + $0x9] sm:$0xff] %vm290, %v259
      %339 = vst.msk [vmem:[%s336 + $0x19] sm:$0xff] %vm290, %v260
      %340 = vst.msk [vmem:[%s336 + $0x21] sm:$0xff] %vm290, %v261
      %341 = vst.msk [vmem:[%s336 + $0x31] sm:$0xff] %vm290, %v262
      %342 = vst.msk [vmem:[%s336 + $0x39] sm:$0xff] %vm290, %v263
      %343 = vst.msk [vmem:[%s336 + $0x49] sm:$0xff] %vm290, %v264
      %344 = vst.msk [vmem:[%s336 + $0x51] sm:$0xff] %vm290, %v265
      %345 = vst.msk [vmem:[%s336 + $0x61] sm:$0xff] %vm290, %v266
      %346 = vst.msk [vmem:[%s336 + $0x69] sm:$0xff] %vm290, %v267
      %347 = vst.msk [vmem:[%s336 + $0x79] sm:$0xff] %vm290, %v268
      %348 = vst.msk [vmem:[%s336 + $0x81] sm:$0xff] %vm290, %v269
      %349 = vst.msk [vmem:[%s336 + $0x91] sm:$0xff] %vm290, %v270
      %350 = vst.msk [vmem:[%s336 + $0x99] sm:$0xff] %vm290, %v271
      %351 = vst.msk [vmem:[%s336 + $0xa9] sm:$0xff] %vm290, %v272
      %352 = vst.msk [vmem:[%s336 + $0xb1] sm:$0xff] %vm290, %v273
      %353 = vst.msk [vmem:[%s336 + $0xc1] sm:$0xff] %vm290, %v274
      %354 = vst.msk [vmem:[%s336 + $0xc9] sm:$0xff] %vm290, %v275
      %355 = vst.msk [vmem:[%s336 + $0xd9] sm:$0xff] %vm290, %v276
      %356 = vst.msk [vmem:[%s336 + $0xe1] sm:$0xff] %vm290, %v277
      %357 = vst.msk [vmem:[%s336 + $0xf1] sm:$0xff] %vm290, %v278
      %358 = vst.msk [vmem:[%s336 + $0xf9] sm:$0xff] %vm290, %v279
      %359 = vst.msk [vmem:[%s336 + $0x109] sm:$0xff] %vm290, %v280
      %360 = vst.msk [vmem:[%s336 + $0x111] sm:$0xff] %vm290, %v281
      %361 = vst.msk [vmem:[%s336 + $0x121] sm:$0xff] %vm290, %v282
      %362 = vst.msk [vmem:[%s336 + $0x129] sm:$0xff] %vm290, %v283
      %363 = vst.msk [vmem:[%s336 + $0x139] sm:$0xff] %vm290, %v284
      %364 = vst.msk [vmem:[%s336 + $0x141] sm:$0xff] %vm290, %v285
      %365 = vst.msk [vmem:[%s336 + $0x151] sm:$0xff] %vm290, %v286
      %366 = vst.msk [vmem:[%s336 + $0x159] sm:$0xff] %vm290, %v287
      %367 = vst.msk [vmem:[%s336 + $0x169] sm:$0xff] %vm290, %v288
      %368 = vst.msk [vmem:[%s336 + $0x171] sm:$0xff] %vm290, %v289
      %v369 = vld [vmem:[%s2] sm:$0x1]
      %v370 = vld [vmem:[#allocation2] sm:$0xff]
      %v371 = vld [vmem:[#allocation2 + $0x8] sm:$0xff]
      %v372 = vld [vmem:[#allocation2 + $0x18] sm:$0xff]
      %v373 = vld [vmem:[#allocation2 + $0x20] sm:$0xff]
      %v374 = vld [vmem:[#allocation2 + $0x30] sm:$0xff]
      %v375 = vld [vmem:[#allocation2 + $0x38] sm:$0xff]
      %v376 = vld [vmem:[#allocation2 + $0x48] sm:$0xff]
      %v377 = vld [vmem:[#allocation2 + $0x50] sm:$0xff]
      %v378 = vld [vmem:[#allocation2 + $0x60] sm:$0xff]
      %v379 = vld [vmem:[#allocation2 + $0x68] sm:$0xff]
      %v380 = vld [vmem:[#allocation2 + $0x78] sm:$0xff]
      %v381 = vld [vmem:[#allocation2 + $0x80] sm:$0xff]
      %v382 = vld [vmem:[#allocation2 + $0x90] sm:$0xff]
      %v383 = vld [vmem:[#allocation2 + $0x98] sm:$0xff]
      %v384 = vld [vmem:[#allocation2 + $0xa8] sm:$0xff]
      %v385 = vld [vmem:[#allocation2 + $0xb0] sm:$0xff]
      %v386 = vld [vmem:[#allocation2 + $0xc0] sm:$0xff]
      %v387 = vld [vmem:[#allocation2 + $0xc8] sm:$0xff]
      %v388 = vld [vmem:[#allocation2 + $0xd8] sm:$0xff]
      %v389 = vld [vmem:[#allocation2 + $0xe0] sm:$0xff]
      %v390 = vld [vmem:[#allocation2 + $0xf0] sm:$0xff]
      %v391 = vld [vmem:[#allocation2 + $0xf8] sm:$0xff]
      %v392 = vld [vmem:[#allocation2 + $0x108] sm:$0xff]
      %v393 = vld [vmem:[#allocation2 + $0x110] sm:$0xff]
      %v394 = vld [vmem:[#allocation2 + $0x120] sm:$0xff]
      %v395 = vld [vmem:[#allocation2 + $0x128] sm:$0xff]
      %v396 = vld [vmem:[#allocation2 + $0x138] sm:$0xff]
      %v397 = vld [vmem:[#allocation2 + $0x140] sm:$0xff]
      %v398 = vld [vmem:[#allocation2 + $0x150] sm:$0xff]
      %v399 = vld [vmem:[#allocation2 + $0x158] sm:$0xff]
      %v400 = vld [vmem:[#allocation2 + $0x168] sm:$0xff]
      %v401 = vld [vmem:[#allocation2 + $0x170] sm:$0xff]
      %v402 = vpack.c.bf16 %v371, %v370
      %v403 = vpack.c.bf16 %v373, %v372
      %v404 = vpack.c.bf16 %v375, %v374
      %v405 = vpack.c.bf16 %v377, %v376
      %v406 = vpack.c.bf16 %v379, %v378
      %v407 = vpack.c.bf16 %v381, %v380
      %v408 = vpack.c.bf16 %v383, %v382
      %v409 = vpack.c.bf16 %v385, %v384
      %v410 = vpack.c.bf16 %v387, %v386
      %v411 = vpack.c.bf16 %v389, %v388
      %v412 = vpack.c.bf16 %v391, %v390
      %v413 = vpack.c.bf16 %v393, %v392
      %v414 = vpack.c.bf16 %v395, %v394
      %v415 = vpack.c.bf16 %v397, %v396
      %v416 = vpack.c.bf16 %v399, %v398
      %v417 = vpack.c.bf16 %v401, %v400
      %418 = vst.msk [vmem:[#allocation4] sm:$0xff] %vm290, %v402
      %419 = vst.msk [vmem:[#allocation4 + $0x8] sm:$0xff] %vm290, %v403
      %420 = vst.msk [vmem:[#allocation4 + $0x10] sm:$0xff] %vm290, %v404
      %421 = vst.msk [vmem:[#allocation4 + $0x18] sm:$0xff] %vm290, %v405
      %422 = vst.msk [vmem:[#allocation4 + $0x20] sm:$0xff] %vm290, %v406
      %423 = vst.msk [vmem:[#allocation4 + $0x28] sm:$0xff] %vm290, %v407
      %424 = vst.msk [vmem:[#allocation4 + $0x30] sm:$0xff] %vm290, %v408
      %425 = vst.msk [vmem:[#allocation4 + $0x38] sm:$0xff] %vm290, %v409
      %426 = vst.msk [vmem:[#allocation4 + $0x40] sm:$0xff] %vm290, %v410
      %427 = vst.msk [vmem:[#allocation4 + $0x48] sm:$0xff] %vm290, %v411
      %428 = vst.msk [vmem:[#allocation4 + $0x50] sm:$0xff] %vm290, %v412
      %429 = vst.msk [vmem:[#allocation4 + $0x58] sm:$0xff] %vm290, %v413
      %430 = vst.msk [vmem:[#allocation4 + $0x60] sm:$0xff] %vm290, %v414
      %431 = vst.msk [vmem:[#allocation4 + $0x68] sm:$0xff] %vm290, %v415
      %432 = vst.msk [vmem:[#allocation4 + $0x70] sm:$0xff] %vm290, %v416
      %433 = vst.msk [vmem:[#allocation4 + $0x78] sm:$0xff] %vm290, %v417
      %v434 = vld [vmem:[#allocation2 + $0x1] sm:$0xff]
      %v435 = vld [vmem:[#allocation2 + $0x9] sm:$0xff]
      %v436 = vld [vmem:[#allocation2 + $0x19] sm:$0xff]
      %v437 = vld [vmem:[#allocation2 + $0x21] sm:$0xff]
      %v438 = vld [vmem:[#allocation2 + $0x31] sm:$0xff]
      %v439 = vld [vmem:[#allocation2 + $0x39] sm:$0xff]
      %v440 = vld [vmem:[#allocation2 + $0x49] sm:$0xff]
      %v441 = vld [vmem:[#allocation2 + $0x51] sm:$0xff]
      %v442 = vld [vmem:[#allocation2 + $0x61] sm:$0xff]
      %v443 = vld [vmem:[#allocation2 + $0x69] sm:$0xff]
      %v444 = vld [vmem:[#allocation2 + $0x79] sm:$0xff]
      %v445 = vld [vmem:[#allocation2 + $0x81] sm:$0xff]
      %v446 = vld [vmem:[#allocation2 + $0x91] sm:$0xff]
      %v447 = vld [vmem:[#allocation2 + $0x99] sm:$0xff]
      %v448 = vld [vmem:[#allocation2 + $0xa9] sm:$0xff]
      %v449 = vld [vmem:[#allocation2 + $0xb1] sm:$0xff]
      %v450 = vld [vmem:[#allocation2 + $0xc1] sm:$0xff]
      %v451 = vld [vmem:[#allocation2 + $0xc9] sm:$0xff]
      %v452 = vld [vmem:[#allocation2 + $0xd9] sm:$0xff]
      %v453 = vld [vmem:[#allocation2 + $0xe1] sm:$0xff]
      %v454 = vld [vmem:[#allocation2 + $0xf1] sm:$0xff]
      %v455 = vld [vmem:[#allocation2 + $0xf9] sm:$0xff]
      %v456 = vld [vmem:[#allocation2 + $0x109] sm:$0xff]
      %v457 = vld [vmem:[#allocation2 + $0x111] sm:$0xff]
      %v458 = vld [vmem:[#allocation2 + $0x121] sm:$0xff]
      %v459 = vld [vmem:[#allocation2 + $0x129] sm:$0xff]
      %v460 = vld [vmem:[#allocation2 + $0x139] sm:$0xff]
      %v461 = vld [vmem:[#allocation2 + $0x141] sm:$0xff]
      %v462 = vld [vmem:[#allocation2 + $0x151] sm:$0xff]
      %v463 = vld [vmem:[#allocation2 + $0x159] sm:$0xff]
      %v464 = vld [vmem:[#allocation2 + $0x169] sm:$0xff]
      %v465 = vld [vmem:[#allocation2 + $0x171] sm:$0xff]
      %v466 = vpack.c.bf16 %v435, %v434
      %v467 = vpack.c.bf16 %v437, %v436
      %v468 = vpack.c.bf16 %v439, %v438
      %v469 = vpack.c.bf16 %v441, %v440
      %v470 = vpack.c.bf16 %v443, %v442
      %v471 = vpack.c.bf16 %v445, %v444
      %v472 = vpack.c.bf16 %v447, %v446
      %v473 = vpack.c.bf16 %v449, %v448
      %v474 = vpack.c.bf16 %v451, %v450
      %v475 = vpack.c.bf16 %v453, %v452
      %v476 = vpack.c.bf16 %v455, %v454
      %v477 = vpack.c.bf16 %v457, %v456
      %v478 = vpack.c.bf16 %v459, %v458
      %v479 = vpack.c.bf16 %v461, %v460
      %v480 = vpack.c.bf16 %v463, %v462
      %v481 = vpack.c.bf16 %v465, %v464
      %498 = vrot.lane.b32.xlu0 %v466, 4
      %v499 = vpop.permute.xlu0 %498
      %500 = vrot.lane.b32.xlu0 %v467, 4
      %v501 = vpop.permute.xlu0 %500
      %502 = vrot.lane.b32.xlu0 %v468, 4
      %v503 = vpop.permute.xlu0 %502
      %504 = vrot.lane.b32.xlu0 %v469, 4
      %v505 = vpop.permute.xlu0 %504
      %506 = vrot.lane.b32.xlu0 %v470, 4
      %v507 = vpop.permute.xlu0 %506
      %508 = vrot.lane.b32.xlu0 %v471, 4
      %v509 = vpop.permute.xlu0 %508
      %510 = vrot.lane.b32.xlu0 %v472, 4
      %v511 = vpop.permute.xlu0 %510
      %512 = vrot.lane.b32.xlu0 %v473, 4
      %v513 = vpop.permute.xlu0 %512
      %514 = vrot.lane.b32.xlu0 %v474, 4
      %v515 = vpop.permute.xlu0 %514
      %516 = vrot.lane.b32.xlu0 %v475, 4
      %v517 = vpop.permute.xlu0 %516
      %518 = vrot.lane.b32.xlu0 %v476, 4
      %v519 = vpop.permute.xlu0 %518
      %520 = vrot.lane.b32.xlu0 %v477, 4
      %v521 = vpop.permute.xlu0 %520
      %522 = vrot.lane.b32.xlu0 %v478, 4
      %v523 = vpop.permute.xlu0 %522
      %524 = vrot.lane.b32.xlu0 %v479, 4
      %v525 = vpop.permute.xlu0 %524
      %526 = vrot.lane.b32.xlu0 %v480, 4
      %v527 = vpop.permute.xlu0 %526
      %528 = vrot.lane.b32.xlu0 %v481, 4
      %v529 = vpop.permute.xlu0 %528
      %vm546 = vcmask 64544
      %547 = vst.msk [vmem:[#allocation4] sm:$0xff] %vm546, %v499
      %548 = vst.msk [vmem:[#allocation4 + $0x8] sm:$0xff] %vm546, %v501
      %549 = vst.msk [vmem:[#allocation4 + $0x10] sm:$0xff] %vm546, %v503
      %550 = vst.msk [vmem:[#allocation4 + $0x18] sm:$0xff] %vm546, %v505
      %551 = vst.msk [vmem:[#allocation4 + $0x20] sm:$0xff] %vm546, %v507
      %552 = vst.msk [vmem:[#allocation4 + $0x28] sm:$0xff] %vm546, %v509
      %553 = vst.msk [vmem:[#allocation4 + $0x30] sm:$0xff] %vm546, %v511
      %554 = vst.msk [vmem:[#allocation4 + $0x38] sm:$0xff] %vm546, %v513
      %555 = vst.msk [vmem:[#allocation4 + $0x40] sm:$0xff] %vm546, %v515
      %556 = vst.msk [vmem:[#allocation4 + $0x48] sm:$0xff] %vm546, %v517
      %557 = vst.msk [vmem:[#allocation4 + $0x50] sm:$0xff] %vm546, %v519
      %558 = vst.msk [vmem:[#allocation4 + $0x58] sm:$0xff] %vm546, %v521
      %559 = vst.msk [vmem:[#allocation4 + $0x60] sm:$0xff] %vm546, %v523
      %560 = vst.msk [vmem:[#allocation4 + $0x68] sm:$0xff] %vm546, %v525
      %561 = vst.msk [vmem:[#allocation4 + $0x70] sm:$0xff] %vm546, %v527
      %562 = vst.msk [vmem:[#allocation4 + $0x78] sm:$0xff] %vm546, %v529
      %v563 = vld [vmem:[#allocation2 + $0x2] sm:$0xff]
      %v564 = vld [vmem:[#allocation2 + $0xa] sm:$0xff]
      %v565 = vld [vmem:[#allocation2 + $0x1a] sm:$0xff]
      %v566 = vld [vmem:[#allocation2 + $0x22] sm:$0xff]
      %v567 = vld [vmem:[#allocation2 + $0x32] sm:$0xff]
      %v568 = vld [vmem:[#allocation2 + $0x3a] sm:$0xff]
      %v569 = vld [vmem:[#allocation2 + $0x4a] sm:$0xff]
      %v570 = vld [vmem:[#allocation2 + $0x52] sm:$0xff]
      %v571 = vld [vmem:[#allocation2 + $0x62] sm:$0xff]
      %v572 = vld [vmem:[#allocation2 + $0x6a] sm:$0xff]
      %v573 = vld [vmem:[#allocation2 + $0x7a] sm:$0xff]
      %v574 = vld [vmem:[#allocation2 + $0x82] sm:$0xff]
      %v575 = vld [vmem:[#allocation2 + $0x92] sm:$0xff]
      %v576 = vld [vmem:[#allocation2 + $0x9a] sm:$0xff]
      %v577 = vld [vmem:[#allocation2 + $0xaa] sm:$0xff]
      %v578 = vld [vmem:[#allocation2 + $0xb2] sm:$0xff]
      %v579 = vld [vmem:[#allocation2 + $0xc2] sm:$0xff]
      %v580 = vld [vmem:[#allocation2 + $0xca] sm:$0xff]
      %v581 = vld [vmem:[#allocation2 + $0xda] sm:$0xff]
      %v582 = vld [vmem:[#allocation2 + $0xe2] sm:$0xff]
      %v583 = vld [vmem:[#allocation2 + $0xf2] sm:$0xff]
      %v584 = vld [vmem:[#allocation2 + $0xfa] sm:$0xff]
      %v585 = vld [vmem:[#allocation2 + $0x10a] sm:$0xff]
      %v586 = vld [vmem:[#allocation2 + $0x112] sm:$0xff]
      %v587 = vld [vmem:[#allocation2 + $0x122] sm:$0xff]
      %v588 = vld [vmem:[#allocation2 + $0x12a] sm:$0xff]
      %v589 = vld [vmem:[#allocation2 + $0x13a] sm:$0xff]
      %v590 = vld [vmem:[#allocation2 + $0x142] sm:$0xff]
      %v591 = vld [vmem:[#allocation2 + $0x152] sm:$0xff]
      %v592 = vld [vmem:[#allocation2 + $0x15a] sm:$0xff]
      %v593 = vld [vmem:[#allocation2 + $0x16a] sm:$0xff]
      %v594 = vld [vmem:[#allocation2 + $0x172] sm:$0xff]
      %v595 = vpack.c.bf16 %v564, %v563
      %v596 = vpack.c.bf16 %v566, %v565
      %v597 = vpack.c.bf16 %v568, %v567
      %v598 = vpack.c.bf16 %v570, %v569
      %v599 = vpack.c.bf16 %v572, %v571
      %v600 = vpack.c.bf16 %v574, %v573
      %v601 = vpack.c.bf16 %v576, %v575
      %v602 = vpack.c.bf16 %v578, %v577
      %v603 = vpack.c.bf16 %v580, %v579
      %v604 = vpack.c.bf16 %v582, %v581
      %v605 = vpack.c.bf16 %v584, %v583
      %v606 = vpack.c.bf16 %v586, %v585
      %v607 = vpack.c.bf16 %v588, %v587
      %v608 = vpack.c.bf16 %v590, %v589
      %v609 = vpack.c.bf16 %v592, %v591
      %v610 = vpack.c.bf16 %v594, %v593
      %627 = vrot.lane.b32.xlu0 %v595, 8
      %v628 = vpop.permute.xlu0 %627
      %629 = vrot.lane.b32.xlu0 %v596, 8
      %v630 = vpop.permute.xlu0 %629
      %631 = vrot.lane.b32.xlu0 %v597, 8
      %v632 = vpop.permute.xlu0 %631
      %633 = vrot.lane.b32.xlu0 %v598, 8
      %v634 = vpop.permute.xlu0 %633
      %635 = vrot.lane.b32.xlu0 %v599, 8
      %v636 = vpop.permute.xlu0 %635
      %637 = vrot.lane.b32.xlu0 %v600, 8
      %v638 = vpop.permute.xlu0 %637
      %639 = vrot.lane.b32.xlu0 %v601, 8
      %v640 = vpop.permute.xlu0 %639
      %641 = vrot.lane.b32.xlu0 %v602, 8
      %v642 = vpop.permute.xlu0 %641
      %643 = vrot.lane.b32.xlu0 %v603, 8
      %v644 = vpop.permute.xlu0 %643
      %645 = vrot.lane.b32.xlu0 %v604, 8
      %v646 = vpop.permute.xlu0 %645
      %647 = vrot.lane.b32.xlu0 %v605, 8
      %v648 = vpop.permute.xlu0 %647
      %649 = vrot.lane.b32.xlu0 %v606, 8
      %v650 = vpop.permute.xlu0 %649
      %651 = vrot.lane.b32.xlu0 %v607, 8
      %v652 = vpop.permute.xlu0 %651
      %653 = vrot.lane.b32.xlu0 %v608, 8
      %v654 = vpop.permute.xlu0 %653
      %655 = vrot.lane.b32.xlu0 %v609, 8
      %v656 = vpop.permute.xlu0 %655
      %657 = vrot.lane.b32.xlu0 %v610, 8
      %v658 = vpop.permute.xlu0 %657
      %vm675 = vcmask 97344
      %676 = vst.msk [vmem:[#allocation4] sm:$0xff] %vm675, %v628
      %677 = vst.msk [vmem:[#allocation4 + $0x8] sm:$0xff] %vm675, %v630
      %678 = vst.msk [vmem:[#allocation4 + $0x10] sm:$0xff] %vm675, %v632
      %679 = vst.msk [vmem:[#allocation4 + $0x18] sm:$0xff] %vm675, %v634
      %680 = vst.msk [vmem:[#allocation4 + $0x20] sm:$0xff] %vm675, %v636
      %681 = vst.msk [vmem:[#allocation4 + $0x28] sm:$0xff] %vm675, %v638
      %682 = vst.msk [vmem:[#allocation4 + $0x30] sm:$0xff] %vm675, %v640
      %683 = vst.msk [vmem:[#allocation4 + $0x38] sm:$0xff] %vm675, %v642
      %684 = vst.msk [vmem:[#allocation4 + $0x40] sm:$0xff] %vm675, %v644
      %685 = vst.msk [vmem:[#allocation4 + $0x48] sm:$0xff] %vm675, %v646
      %686 = vst.msk [vmem:[#allocation4 + $0x50] sm:$0xff] %vm675, %v648
      %687 = vst.msk [vmem:[#allocation4 + $0x58] sm:$0xff] %vm675, %v650
      %688 = vst.msk [vmem:[#allocation4 + $0x60] sm:$0xff] %vm675, %v652
      %689 = vst.msk [vmem:[#allocation4 + $0x68] sm:$0xff] %vm675, %v654
      %690 = vst.msk [vmem:[#allocation4 + $0x70] sm:$0xff] %vm675, %v656
      %691 = vst.msk [vmem:[#allocation4 + $0x78] sm:$0xff] %vm675, %v658
      %v692 = vld [vmem:[%s336] sm:$0xff]
      %v693 = vld [vmem:[%s336 + $0x8] sm:$0xff]
      %v694 = vld [vmem:[%s336 + $0x18] sm:$0xff]
      %v695 = vld [vmem:[%s336 + $0x20] sm:$0xff]
      %v696 = vld [vmem:[%s336 + $0x30] sm:$0xff]
      %v697 = vld [vmem:[%s336 + $0x38] sm:$0xff]
      %v698 = vld [vmem:[%s336 + $0x48] sm:$0xff]
      %v699 = vld [vmem:[%s336 + $0x50] sm:$0xff]
      %v700 = vld [vmem:[%s336 + $0x60] sm:$0xff]
      %v701 = vld [vmem:[%s336 + $0x68] sm:$0xff]
      %v702 = vld [vmem:[%s336 + $0x78] sm:$0xff]
      %v703 = vld [vmem:[%s336 + $0x80] sm:$0xff]
      %v704 = vld [vmem:[%s336 + $0x90] sm:$0xff]
      %v705 = vld [vmem:[%s336 + $0x98] sm:$0xff]
      %v706 = vld [vmem:[%s336 + $0xa8] sm:$0xff]
      %v707 = vld [vmem:[%s336 + $0xb0] sm:$0xff]
      %v708 = vld [vmem:[%s336 + $0xc0] sm:$0xff]
      %v709 = vld [vmem:[%s336 + $0xc8] sm:$0xff]
      %v710 = vld [vmem:[%s336 + $0xd8] sm:$0xff]
      %v711 = vld [vmem:[%s336 + $0xe0] sm:$0xff]
      %v712 = vld [vmem:[%s336 + $0xf0] sm:$0xff]
      %v713 = vld [vmem:[%s336 + $0xf8] sm:$0xff]
      %v714 = vld [vmem:[%s336 + $0x108] sm:$0xff]
      %v715 = vld [vmem:[%s336 + $0x110] sm:$0xff]
      %v716 = vld [vmem:[%s336 + $0x120] sm:$0xff]
      %v717 = vld [vmem:[%s336 + $0x128] sm:$0xff]
      %v718 = vld [vmem:[%s336 + $0x138] sm:$0xff]
      %v719 = vld [vmem:[%s336 + $0x140] sm:$0xff]
      %v720 = vld [vmem:[%s336 + $0x150] sm:$0xff]
      %v721 = vld [vmem:[%s336 + $0x158] sm:$0xff]
      %v722 = vld [vmem:[%s336 + $0x168] sm:$0xff]
      %v723 = vld [vmem:[%s336 + $0x170] sm:$0xff]
      %v724 = vpack.c.bf16 %v693, %v692
      %v725 = vpack.c.bf16 %v695, %v694
      %v726 = vpack.c.bf16 %v697, %v696
      %v727 = vpack.c.bf16 %v699, %v698
      %v728 = vpack.c.bf16 %v701, %v700
      %v729 = vpack.c.bf16 %v703, %v702
      %v730 = vpack.c.bf16 %v705, %v704
      %v731 = vpack.c.bf16 %v707, %v706
      %v732 = vpack.c.bf16 %v709, %v708
      %v733 = vpack.c.bf16 %v711, %v710
      %v734 = vpack.c.bf16 %v713, %v712
      %v735 = vpack.c.bf16 %v715, %v714
      %v736 = vpack.c.bf16 %v717, %v716
      %v737 = vpack.c.bf16 %v719, %v718
      %v738 = vpack.c.bf16 %v721, %v720
      %v739 = vpack.c.bf16 %v723, %v722
      %756 = vrot.lane.b32.xlu0 %v724, 12
      %v757 = vpop.permute.xlu0 %756
      %758 = vrot.lane.b32.xlu0 %v725, 12
      %v759 = vpop.permute.xlu0 %758
      %760 = vrot.lane.b32.xlu0 %v726, 12
      %v761 = vpop.permute.xlu0 %760
      %762 = vrot.lane.b32.xlu0 %v727, 12
      %v763 = vpop.permute.xlu0 %762
      %764 = vrot.lane.b32.xlu0 %v728, 12
      %v765 = vpop.permute.xlu0 %764
      %766 = vrot.lane.b32.xlu0 %v729, 12
      %v767 = vpop.permute.xlu0 %766
      %768 = vrot.lane.b32.xlu0 %v730, 12
      %v769 = vpop.permute.xlu0 %768
      %770 = vrot.lane.b32.xlu0 %v731, 12
      %v771 = vpop.permute.xlu0 %770
      %772 = vrot.lane.b32.xlu0 %v732, 12
      %v773 = vpop.permute.xlu0 %772
      %774 = vrot.lane.b32.xlu0 %v733, 12
      %v775 = vpop.permute.xlu0 %774
      %776 = vrot.lane.b32.xlu0 %v734, 12
      %v777 = vpop.permute.xlu0 %776
      %778 = vrot.lane.b32.xlu0 %v735, 12
      %v779 = vpop.permute.xlu0 %778
      %780 = vrot.lane.b32.xlu0 %v736, 12
      %v781 = vpop.permute.xlu0 %780
      %782 = vrot.lane.b32.xlu0 %v737, 12
      %v783 = vpop.permute.xlu0 %782
      %784 = vrot.lane.b32.xlu0 %v738, 12
      %v785 = vpop.permute.xlu0 %784
      %786 = vrot.lane.b32.xlu0 %v739, 12
      %v787 = vpop.permute.xlu0 %786
      %vm804 = vcmask 130144
      %805 = vst.msk [vmem:[#allocation4] sm:$0xff] %vm804, %v757
      %806 = vst.msk [vmem:[#allocation4 + $0x8] sm:$0xff] %vm804, %v759
      %807 = vst.msk [vmem:[#allocation4 + $0x10] sm:$0xff] %vm804, %v761
      %808 = vst.msk [vmem:[#allocation4 + $0x18] sm:$0xff] %vm804, %v763
      %809 = vst.msk [vmem:[#allocation4 + $0x20] sm:$0xff] %vm804, %v765
      %810 = vst.msk [vmem:[#allocation4 + $0x28] sm:$0xff] %vm804, %v767
      %811 = vst.msk [vmem:[#allocation4 + $0x30] sm:$0xff] %vm804, %v769
      %812 = vst.msk [vmem:[#allocation4 + $0x38] sm:$0xff] %vm804, %v771
      %813 = vst.msk [vmem:[#allocation4 + $0x40] sm:$0xff] %vm804, %v773
      %814 = vst.msk [vmem:[#allocation4 + $0x48] sm:$0xff] %vm804, %v775
      %815 = vst.msk [vmem:[#allocation4 + $0x50] sm:$0xff] %vm804, %v777
      %816 = vst.msk [vmem:[#allocation4 + $0x58] sm:$0xff] %vm804, %v779
      %817 = vst.msk [vmem:[#allocation4 + $0x60] sm:$0xff] %vm804, %v781
      %818 = vst.msk [vmem:[#allocation4 + $0x68] sm:$0xff] %vm804, %v783
      %819 = vst.msk [vmem:[#allocation4 + $0x70] sm:$0xff] %vm804, %v785
      %820 = vst.msk [vmem:[#allocation4 + $0x78] sm:$0xff] %vm804, %v787
      %v821 = vld [vmem:[%s336 + $0x1] sm:$0xff]
      %v822 = vld [vmem:[%s336 + $0x9] sm:$0xff]
      %v823 = vld [vmem:[%s336 + $0x19] sm:$0xff]
      %v824 = vld [vmem:[%s336 + $0x21] sm:$0xff]
      %v825 = vld [vmem:[%s336 + $0x31] sm:$0xff]
      %v826 = vld [vmem:[%s336 + $0x39] sm:$0xff]
      %v827 = vld [vmem:[%s336 + $0x49] sm:$0xff]
      %v828 = vld [vmem:[%s336 + $0x51] sm:$0xff]
      %v829 = vld [vmem:[%s336 + $0x61] sm:$0xff]
      %v830 = vld [vmem:[%s336 + $0x69] sm:$0xff]
      %v831 = vld [vmem:[%s336 + $0x79] sm:$0xff]
      %v832 = vld [vmem:[%s336 + $0x81] sm:$0xff]
      %v833 = vld [vmem:[%s336 + $0x91] sm:$0xff]
      %v834 = vld [vmem:[%s336 + $0x99] sm:$0xff]
      %v835 = vld [vmem:[%s336 + $0xa9] sm:$0xff]
      %v836 = vld [vmem:[%s336 + $0xb1] sm:$0xff]
      %v837 = vld [vmem:[%s336 + $0xc1] sm:$0xff]
      %v838 = vld [vmem:[%s336 + $0xc9] sm:$0xff]
      %v839 = vld [vmem:[%s336 + $0xd9] sm:$0xff]
      %v840 = vld [vmem:[%s336 + $0xe1] sm:$0xff]
      %v841 = vld [vmem:[%s336 + $0xf1] sm:$0xff]
      %v842 = vld [vmem:[%s336 + $0xf9] sm:$0xff]
      %v843 = vld [vmem:[%s336 + $0x109] sm:$0xff]
      %v844 = vld [vmem:[%s336 + $0x111] sm:$0xff]
      %v845 = vld [vmem:[%s336 + $0x121] sm:$0xff]
      %v846 = vld [vmem:[%s336 + $0x129] sm:$0xff]
      %v847 = vld [vmem:[%s336 + $0x139] sm:$0xff]
      %v848 = vld [vmem:[%s336 + $0x141] sm:$0xff]
      %v849 = vld [vmem:[%s336 + $0x151] sm:$0xff]
      %v850 = vld [vmem:[%s336 + $0x159] sm:$0xff]
      %v851 = vld [vmem:[%s336 + $0x169] sm:$0xff]
      %v852 = vld [vmem:[%s336 + $0x171] sm:$0xff]
      %v853 = vpack.c.bf16 %v822, %v821
      %v854 = vpack.c.bf16 %v824, %v823
      %v855 = vpack.c.bf16 %v826, %v825
      %v856 = vpack.c.bf16 %v828, %v827
      %v857 = vpack.c.bf16 %v830, %v829
      %v858 = vpack.c.bf16 %v832, %v831
      %v859 = vpack.c.bf16 %v834, %v833
      %v860 = vpack.c.bf16 %v836, %v835
      %v861 = vpack.c.bf16 %v838, %v837
      %v862 = vpack.c.bf16 %v840, %v839
      %v863 = vpack.c.bf16 %v842, %v841
      %v864 = vpack.c.bf16 %v844, %v843
      %v865 = vpack.c.bf16 %v846, %v845
      %v866 = vpack.c.bf16 %v848, %v847
      %v867 = vpack.c.bf16 %v850, %v849
      %v868 = vpack.c.bf16 %v852, %v851
      %885 = vrot.lane.b32.xlu0 %v853, 16
      %v886 = vpop.permute.xlu0 %885
      %887 = vrot.lane.b32.xlu0 %v854, 16
      %v888 = vpop.permute.xlu0 %887
      %889 = vrot.lane.b32.xlu0 %v855, 16
      %v890 = vpop.permute.xlu0 %889
      %891 = vrot.lane.b32.xlu0 %v856, 16
      %v892 = vpop.permute.xlu0 %891
      %893 = vrot.lane.b32.xlu0 %v857, 16
      %v894 = vpop.permute.xlu0 %893
      %895 = vrot.lane.b32.xlu0 %v858, 16
      %v896 = vpop.permute.xlu0 %895
      %897 = vrot.lane.b32.xlu0 %v859, 16
      %v898 = vpop.permute.xlu0 %897
      %899 = vrot.lane.b32.xlu0 %v860, 16
      %v900 = vpop.permute.xlu0 %899
      %901 = vrot.lane.b32.xlu0 %v861, 16
      %v902 = vpop.permute.xlu0 %901
      %903 = vrot.lane.b32.xlu0 %v862, 16
      %v904 = vpop.permute.xlu0 %903
      %905 = vrot.lane.b32.xlu0 %v863, 16
      %v906 = vpop.permute.xlu0 %905
      %907 = vrot.lane.b32.xlu0 %v864, 16
      %v908 = vpop.permute.xlu0 %907
      %909 = vrot.lane.b32.xlu0 %v865, 16
      %v910 = vpop.permute.xlu0 %909
      %911 = vrot.lane.b32.xlu0 %v866, 16
      %v912 = vpop.permute.xlu0 %911
      %913 = vrot.lane.b32.xlu0 %v867, 16
      %v914 = vpop.permute.xlu0 %913
      %915 = vrot.lane.b32.xlu0 %v868, 16
      %v916 = vpop.permute.xlu0 %915
      %vm933 = vcmask 162944
      %934 = vst.msk [vmem:[#allocation4] sm:$0xff] %vm933, %v886
      %935 = vst.msk [vmem:[#allocation4 + $0x8] sm:$0xff] %vm933, %v888
      %936 = vst.msk [vmem:[#allocation4 + $0x10] sm:$0xff] %vm933, %v890
      %937 = vst.msk [vmem:[#allocation4 + $0x18] sm:$0xff] %vm933, %v892
      %938 = vst.msk [vmem:[#allocation4 + $0x20] sm:$0xff] %vm933, %v894
      %939 = vst.msk [vmem:[#allocation4 + $0x28] sm:$0xff] %vm933, %v896
      %940 = vst.msk [vmem:[#allocation4 + $0x30] sm:$0xff] %vm933, %v898
      %941 = vst.msk [vmem:[#allocation4 + $0x38] sm:$0xff] %vm933, %v900
      %942 = vst.msk [vmem:[#allocation4 + $0x40] sm:$0xff] %vm933, %v902
      %943 = vst.msk [vmem:[#allocation4 + $0x48] sm:$0xff] %vm933, %v904
      %944 = vst.msk [vmem:[#allocation4 + $0x50] sm:$0xff] %vm933, %v906
      %945 = vst.msk [vmem:[#allocation4 + $0x58] sm:$0xff] %vm933, %v908
      %946 = vst.msk [vmem:[#allocation4 + $0x60] sm:$0xff] %vm933, %v910
      %947 = vst.msk [vmem:[#allocation4 + $0x68] sm:$0xff] %vm933, %v912
      %948 = vst.msk [vmem:[#allocation4 + $0x70] sm:$0xff] %vm933, %v914
      %949 = vst.msk [vmem:[#allocation4 + $0x78] sm:$0xff] %vm933, %v916
      %v950 = vld [vmem:[%s336 + $0x2] sm:$0xff]
      %v951 = vld [vmem:[%s336 + $0xa] sm:$0xff]
      %v952 = vld [vmem:[%s336 + $0x1a] sm:$0xff]
      %v953 = vld [vmem:[%s336 + $0x22] sm:$0xff]
      %v954 = vld [vmem:[%s336 + $0x32] sm:$0xff]
      %v955 = vld [vmem:[%s336 + $0x3a] sm:$0xff]
      %v956 = vld [vmem:[%s336 + $0x4a] sm:$0xff]
      %v957 = vld [vmem:[%s336 + $0x52] sm:$0xff]
      %v958 = vld [vmem:[%s336 + $0x62] sm:$0xff]
      %v959 = vld [vmem:[%s336 + $0x6a] sm:$0xff]
      %v960 = vld [vmem:[%s336 + $0x7a] sm:$0xff]
      %v961 = vld [vmem:[%s336 + $0x82] sm:$0xff]
      %v962 = vld [vmem:[%s336 + $0x92] sm:$0xff]
      %v963 = vld [vmem:[%s336 + $0x9a] sm:$0xff]
      %v964 = vld [vmem:[%s336 + $0xaa] sm:$0xff]
      %v965 = vld [vmem:[%s336 + $0xb2] sm:$0xff]
      %v966 = vld [vmem:[%s336 + $0xc2] sm:$0xff]
      %v967 = vld [vmem:[%s336 + $0xca] sm:$0xff]
      %v968 = vld [vmem:[%s336 + $0xda] sm:$0xff]
      %v969 = vld [vmem:[%s336 + $0xe2] sm:$0xff]
      %v970 = vld [vmem:[%s336 + $0xf2] sm:$0xff]
      %v971 = vld [vmem:[%s336 + $0xfa] sm:$0xff]
      %v972 = vld [vmem:[%s336 + $0x10a] sm:$0xff]
      %v973 = vld [vmem:[%s336 + $0x112] sm:$0xff]
      %v974 = vld [vmem:[%s336 + $0x122] sm:$0xff]
      %v975 = vld [vmem:[%s336 + $0x12a] sm:$0xff]
      %v976 = vld [vmem:[%s336 + $0x13a] sm:$0xff]
      %v977 = vld [vmem:[%s336 + $0x142] sm:$0xff]
      %v978 = vld [vmem:[%s336 + $0x152] sm:$0xff]
      %v979 = vld [vmem:[%s336 + $0x15a] sm:$0xff]
      %v980 = vld [vmem:[%s336 + $0x16a] sm:$0xff]
      %v981 = vld [vmem:[%s336 + $0x172] sm:$0xff]
      %v982 = vpack.c.bf16 %v951, %v950
      %v983 = vpack.c.bf16 %v953, %v952
      %v984 = vpack.c.bf16 %v955, %v954
      %v985 = vpack.c.bf16 %v957, %v956
      %v986 = vpack.c.bf16 %v959, %v958
      %v987 = vpack.c.bf16 %v961, %v960
      %v988 = vpack.c.bf16 %v963, %v962
      %v989 = vpack.c.bf16 %v965, %v964
      %v990 = vpack.c.bf16 %v967, %v966
      %v991 = vpack.c.bf16 %v969, %v968
      %v992 = vpack.c.bf16 %v971, %v970
      %v993 = vpack.c.bf16 %v973, %v972
      %v994 = vpack.c.bf16 %v975, %v974
      %v995 = vpack.c.bf16 %v977, %v976
      %v996 = vpack.c.bf16 %v979, %v978
      %v997 = vpack.c.bf16 %v981, %v980
      %1014 = vrot.lane.b32.xlu0 %v982, 20
      %v1015 = vpop.permute.xlu0 %1014
      %1016 = vrot.lane.b32.xlu0 %v983, 20
      %v1017 = vpop.permute.xlu0 %1016
      %1018 = vrot.lane.b32.xlu0 %v984, 20
      %v1019 = vpop.permute.xlu0 %1018
      %1020 = vrot.lane.b32.xlu0 %v985, 20
      %v1021 = vpop.permute.xlu0 %1020
      %1022 = vrot.lane.b32.xlu0 %v986, 20
      %v1023 = vpop.permute.xlu0 %1022
      %1024 = vrot.lane.b32.xlu0 %v987, 20
      %v1025 = vpop.permute.xlu0 %1024
      %1026 = vrot.lane.b32.xlu0 %v988, 20
      %v1027 = vpop.permute.xlu0 %1026
      %1028 = vrot.lane.b32.xlu0 %v989, 20
      %v1029 = vpop.permute.xlu0 %1028
      %1030 = vrot.lane.b32.xlu0 %v990, 20
      %v1031 = vpop.permute.xlu0 %1030
      %1032 = vrot.lane.b32.xlu0 %v991, 20
      %v1033 = vpop.permute.xlu0 %1032
      %1034 = vrot.lane.b32.xlu0 %v992, 20
      %v1035 = vpop.permute.xlu0 %1034
      %1036 = vrot.lane.b32.xlu0 %v993, 20
      %v1037 = vpop.permute.xlu0 %1036
      %1038 = vrot.lane.b32.xlu0 %v994, 20
      %v1039 = vpop.permute.xlu0 %1038
      %1040 = vrot.lane.b32.xlu0 %v995, 20
      %v1041 = vpop.permute.xlu0 %1040
      %1042 = vrot.lane.b32.xlu0 %v996, 20
      %v1043 = vpop.permute.xlu0 %1042
      %1044 = vrot.lane.b32.xlu0 %v997, 20
      %v1045 = vpop.permute.xlu0 %1044
      %vm1062 = vcmask 195744
      %1063 = vst.msk [vmem:[#allocation4] sm:$0xff] %vm1062, %v1015
      %1064 = vst.msk [vmem:[#allocation4 + $0x8] sm:$0xff] %vm1062, %v1017
      %1065 = vst.msk [vmem:[#allocation4 + $0x10] sm:$0xff] %vm1062, %v1019
      %1066 = vst.msk [vmem:[#allocation4 + $0x18] sm:$0xff] %vm1062, %v1021
      %1067 = vst.msk [vmem:[#allocation4 + $0x20] sm:$0xff] %vm1062, %v1023
      %1068 = vst.msk [vmem:[#allocation4 + $0x28] sm:$0xff] %vm1062, %v1025
      %1069 = vst.msk [vmem:[#allocation4 + $0x30] sm:$0xff] %vm1062, %v1027
      %1070 = vst.msk [vmem:[#allocation4 + $0x38] sm:$0xff] %vm1062, %v1029
      %1071 = vst.msk [vmem:[#allocation4 + $0x40] sm:$0xff] %vm1062, %v1031
      %1072 = vst.msk [vmem:[#allocation4 + $0x48] sm:$0xff] %vm1062, %v1033
      %1073 = vst.msk [vmem:[#allocation4 + $0x50] sm:$0xff] %vm1062, %v1035
      %1074 = vst.msk [vmem:[#allocation4 + $0x58] sm:$0xff] %vm1062, %v1037
      %1075 = vst.msk [vmem:[#allocation4 + $0x60] sm:$0xff] %vm1062, %v1039
      %1076 = vst.msk [vmem:[#allocation4 + $0x68] sm:$0xff] %vm1062, %v1041
      %1077 = vst.msk [vmem:[#allocation4 + $0x70] sm:$0xff] %vm1062, %v1043
      %1078 = vst.msk [vmem:[#allocation4 + $0x78] sm:$0xff] %vm1062, %v1045
      %s1079 = scalar_lea.vmem [#allocation2], 48
      %v1080 = vld [vmem:[%s1079] sm:$0xff]
      %v1081 = vld [vmem:[%s1079 + $0x8] sm:$0xff]
      %v1082 = vld [vmem:[%s1079 + $0x18] sm:$0xff]
      %v1083 = vld [vmem:[%s1079 + $0x20] sm:$0xff]
      %v1084 = vld [vmem:[%s1079 + $0x30] sm:$0xff]
      %v1085 = vld [vmem:[%s1079 + $0x38] sm:$0xff]
      %v1086 = vld [vmem:[%s1079 + $0x48] sm:$0xff]
      %v1087 = vld [vmem:[%s1079 + $0x50] sm:$0xff]
      %v1088 = vld [vmem:[%s1079 + $0x60] sm:$0xff]
      %v1089 = vld [vmem:[%s1079 + $0x68] sm:$0xff]
      %v1090 = vld [vmem:[%s1079 + $0x78] sm:$0xff]
      %v1091 = vld [vmem:[%s1079 + $0x80] sm:$0xff]
      %v1092 = vld [vmem:[%s1079 + $0x90] sm:$0xff]
      %v1093 = vld [vmem:[%s1079 + $0x98] sm:$0xff]
      %v1094 = vld [vmem:[%s1079 + $0xa8] sm:$0xff]
      %v1095 = vld [vmem:[%s1079 + $0xb0] sm:$0xff]
      %v1096 = vld [vmem:[%s1079 + $0xc0] sm:$0xff]
      %v1097 = vld [vmem:[%s1079 + $0xc8] sm:$0xff]
      %v1098 = vld [vmem:[%s1079 + $0xd8] sm:$0xff]
      %v1099 = vld [vmem:[%s1079 + $0xe0] sm:$0xff]
      %v1100 = vld [vmem:[%s1079 + $0xf0] sm:$0xff]
      %v1101 = vld [vmem:[%s1079 + $0xf8] sm:$0xff]
      %v1102 = vld [vmem:[%s1079 + $0x108] sm:$0xff]
      %v1103 = vld [vmem:[%s1079 + $0x110] sm:$0xff]
      %v1104 = vld [vmem:[%s1079 + $0x120] sm:$0xff]
      %v1105 = vld [vmem:[%s1079 + $0x128] sm:$0xff]
      %v1106 = vld [vmem:[%s1079 + $0x138] sm:$0xff]
      %v1107 = vld [vmem:[%s1079 + $0x140] sm:$0xff]
      %v1108 = vld [vmem:[%s1079 + $0x150] sm:$0xff]
      %v1109 = vld [vmem:[%s1079 + $0x158] sm:$0xff]
      %v1110 = vld [vmem:[%s1079 + $0x168] sm:$0xff]
      %v1111 = vld [vmem:[%s1079 + $0x170] sm:$0xff]
      %v1112 = vpack.c.bf16 %v1081, %v1080
      %v1113 = vpack.c.bf16 %v1083, %v1082
      %v1114 = vpack.c.bf16 %v1085, %v1084
      %v1115 = vpack.c.bf16 %v1087, %v1086
      %v1116 = vpack.c.bf16 %v1089, %v1088
      %v1117 = vpack.c.bf16 %v1091, %v1090
      %v1118 = vpack.c.bf16 %v1093, %v1092
      %v1119 = vpack.c.bf16 %v1095, %v1094
      %v1120 = vpack.c.bf16 %v1097, %v1096
      %v1121 = vpack.c.bf16 %v1099, %v1098
      %v1122 = vpack.c.bf16 %v1101, %v1100
      %v1123 = vpack.c.bf16 %v1103, %v1102
      %v1124 = vpack.c.bf16 %v1105, %v1104
      %v1125 = vpack.c.bf16 %v1107, %v1106
      %v1126 = vpack.c.bf16 %v1109, %v1108
      %v1127 = vpack.c.bf16 %v1111, %v1110
      %1144 = vrot.lane.b32.xlu0 %v1112, 24
      %v1145 = vpop.permute.xlu0 %1144
      %1146 = vrot.lane.b32.xlu0 %v1113, 24
      %v1147 = vpop.permute.xlu0 %1146
      %1148 = vrot.lane.b32.xlu0 %v1114, 24
      %v1149 = vpop.permute.xlu0 %1148
      %1150 = vrot.lane.b32.xlu0 %v1115, 24
      %v1151 = vpop.permute.xlu0 %1150
      %1152 = vrot.lane.b32.xlu0 %v1116, 24
      %v1153 = vpop.permute.xlu0 %1152
      %1154 = vrot.lane.b32.xlu0 %v1117, 24
      %v1155 = vpop.permute.xlu0 %1154
      %1156 = vrot.lane.b32.xlu0 %v1118, 24
      %v1157 = vpop.permute.xlu0 %1156
      %1158 = vrot.lane.b32.xlu0 %v1119, 24
      %v1159 = vpop.permute.xlu0 %1158
      %1160 = vrot.lane.b32.xlu0 %v1120, 24
      %v1161 = vpop.permute.xlu0 %1160
      %1162 = vrot.lane.b32.xlu0 %v1121, 24
      %v1163 = vpop.permute.xlu0 %1162
      %1164 = vrot.lane.b32.xlu0 %v1122, 24
      %v1165 = vpop.permute.xlu0 %1164
      %1166 = vrot.lane.b32.xlu0 %v1123, 24
      %v1167 = vpop.permute.xlu0 %1166
      %1168 = vrot.lane.b32.xlu0 %v1124, 24
      %v1169 = vpop.permute.xlu0 %1168
      %1170 = vrot.lane.b32.xlu0 %v1125, 24
      %v1171 = vpop.permute.xlu0 %1170
      %1172 = vrot.lane.b32.xlu0 %v1126, 24
      %v1173 = vpop.permute.xlu0 %1172
      %1174 = vrot.lane.b32.xlu0 %v1127, 24
      %v1175 = vpop.permute.xlu0 %1174
      %vm1192 = vcmask 228544
      %1193 = vst.msk [vmem:[#allocation4] sm:$0xff] %vm1192, %v1145
      %1194 = vst.msk [vmem:[#allocation4 + $0x8] sm:$0xff] %vm1192, %v1147
      %1195 = vst.msk [vmem:[#allocation4 + $0x10] sm:$0xff] %vm1192, %v1149
      %1196 = vst.msk [vmem:[#allocation4 + $0x18] sm:$0xff] %vm1192, %v1151
      %1197 = vst.msk [vmem:[#allocation4 + $0x20] sm:$0xff] %vm1192, %v1153
      %1198 = vst.msk [vmem:[#allocation4 + $0x28] sm:$0xff] %vm1192, %v1155
      %1199 = vst.msk [vmem:[#allocation4 + $0x30] sm:$0xff] %vm1192, %v1157
      %1200 = vst.msk [vmem:[#allocation4 + $0x38] sm:$0xff] %vm1192, %v1159
      %1201 = vst.msk [vmem:[#allocation4 + $0x40] sm:$0xff] %vm1192, %v1161
      %1202 = vst.msk [vmem:[#allocation4 + $0x48] sm:$0xff] %vm1192, %v1163
      %1203 = vst.msk [vmem:[#allocation4 + $0x50] sm:$0xff] %vm1192, %v1165
      %1204 = vst.msk [vmem:[#allocation4 + $0x58] sm:$0xff] %vm1192, %v1167
      %1205 = vst.msk [vmem:[#allocation4 + $0x60] sm:$0xff] %vm1192, %v1169
      %1206 = vst.msk [vmem:[#allocation4 + $0x68] sm:$0xff] %vm1192, %v1171
      %1207 = vst.msk [vmem:[#allocation4 + $0x70] sm:$0xff] %vm1192, %v1173
      %1208 = vst.msk [vmem:[#allocation4 + $0x78] sm:$0xff] %vm1192, %v1175
      %v1209 = vld [vmem:[%s1079 + $0x1] sm:$0xff]
      %v1210 = vld [vmem:[%s1079 + $0x9] sm:$0xff]
      %v1211 = vld [vmem:[%s1079 + $0x19] sm:$0xff]
      %v1212 = vld [vmem:[%s1079 + $0x21] sm:$0xff]
      %v1213 = vld [vmem:[%s1079 + $0x31] sm:$0xff]
      %v1214 = vld [vmem:[%s1079 + $0x39] sm:$0xff]
      %v1215 = vld [vmem:[%s1079 + $0x49] sm:$0xff]
      %v1216 = vld [vmem:[%s1079 + $0x51] sm:$0xff]
      %v1217 = vld [vmem:[%s1079 + $0x61] sm:$0xff]
      %v1218 = vld [vmem:[%s1079 + $0x69] sm:$0xff]
      %v1219 = vld [vmem:[%s1079 + $0x79] sm:$0xff]
      %v1220 = vld [vmem:[%s1079 + $0x81] sm:$0xff]
      %v1221 = vld [vmem:[%s1079 + $0x91] sm:$0xff]
      %v1222 = vld [vmem:[%s1079 + $0x99] sm:$0xff]
      %v1223 = vld [vmem:[%s1079 + $0xa9] sm:$0xff]
      %v1224 = vld [vmem:[%s1079 + $0xb1] sm:$0xff]
      %v1225 = vld [vmem:[%s1079 + $0xc1] sm:$0xff]
      %v1226 = vld [vmem:[%s1079 + $0xc9] sm:$0xff]
      %v1227 = vld [vmem:[%s1079 + $0xd9] sm:$0xff]
      %v1228 = vld [vmem:[%s1079 + $0xe1] sm:$0xff]
      %v1229 = vld [vmem:[%s1079 + $0xf1] sm:$0xff]
      %v1230 = vld [vmem:[%s1079 + $0xf9] sm:$0xff]
      %v1231 = vld [vmem:[%s1079 + $0x109] sm:$0xff]
      %v1232 = vld [vmem:[%s1079 + $0x111] sm:$0xff]
      %v1233 = vld [vmem:[%s1079 + $0x121] sm:$0xff]
      %v1234 = vld [vmem:[%s1079 + $0x129] sm:$0xff]
      %v1235 = vld [vmem:[%s1079 + $0x139] sm:$0xff]
      %v1236 = vld [vmem:[%s1079 + $0x141] sm:$0xff]
      %v1237 = vld [vmem:[%s1079 + $0x151] sm:$0xff]
      %v1238 = vld [vmem:[%s1079 + $0x159] sm:$0xff]
      %v1239 = vld [vmem:[%s1079 + $0x169] sm:$0xff]
      %v1240 = vld [vmem:[%s1079 + $0x171] sm:$0xff]
      %v1241 = vpack.c.bf16 %v1210, %v1209
      %v1242 = vpack.c.bf16 %v1212, %v1211
      %v1243 = vpack.c.bf16 %v1214, %v1213
      %v1244 = vpack.c.bf16 %v1216, %v1215
      %v1245 = vpack.c.bf16 %v1218, %v1217
      %v1246 = vpack.c.bf16 %v1220, %v1219
      %v1247 = vpack.c.bf16 %v1222, %v1221
      %v1248 = vpack.c.bf16 %v1224, %v1223
      %v1249 = vpack.c.bf16 %v1226, %v1225
      %v1250 = vpack.c.bf16 %v1228, %v1227
      %v1251 = vpack.c.bf16 %v1230, %v1229
      %v1252 = vpack.c.bf16 %v1232, %v1231
      %v1253 = vpack.c.bf16 %v1234, %v1233
      %v1254 = vpack.c.bf16 %v1236, %v1235
      %v1255 = vpack.c.bf16 %v1238, %v1237
      %v1256 = vpack.c.bf16 %v1240, %v1239
      %1273 = vrot.lane.b32.xlu0 %v1241, 28
      %v1274 = vpop.permute.xlu0 %1273
      %1275 = vrot.lane.b32.xlu0 %v1242, 28
      %v1276 = vpop.permute.xlu0 %1275
      %1277 = vrot.lane.b32.xlu0 %v1243, 28
      %v1278 = vpop.permute.xlu0 %1277
      %1279 = vrot.lane.b32.xlu0 %v1244, 28
      %v1280 = vpop.permute.xlu0 %1279
      %1281 = vrot.lane.b32.xlu0 %v1245, 28
      %v1282 = vpop.permute.xlu0 %1281
      %1283 = vrot.lane.b32.xlu0 %v1246, 28
      %v1284 = vpop.permute.xlu0 %1283
      %1285 = vrot.lane.b32.xlu0 %v1247, 28
      %v1286 = vpop.permute.xlu0 %1285
      %1287 = vrot.lane.b32.xlu0 %v1248, 28
      %v1288 = vpop.permute.xlu0 %1287
      %1289 = vrot.lane.b32.xlu0 %v1249, 28
      %v1290 = vpop.permute.xlu0 %1289
      %1291 = vrot.lane.b32.xlu0 %v1250, 28
      %v1292 = vpop.permute.xlu0 %1291
      %1293 = vrot.lane.b32.xlu0 %v1251, 28
      %v1294 = vpop.permute.xlu0 %1293
      %1295 = vrot.lane.b32.xlu0 %v1252, 28
      %v1296 = vpop.permute.xlu0 %1295
      %1297 = vrot.lane.b32.xlu0 %v1253, 28
      %v1298 = vpop.permute.xlu0 %1297
      %1299 = vrot.lane.b32.xlu0 %v1254, 28
      %v1300 = vpop.permute.xlu0 %1299
      %1301 = vrot.lane.b32.xlu0 %v1255, 28
      %v1302 = vpop.permute.xlu0 %1301
      %1303 = vrot.lane.b32.xlu0 %v1256, 28
      %v1304 = vpop.permute.xlu0 %1303
      %vm1321 = vcmask 261344
      %1322 = vst.msk [vmem:[#allocation4] sm:$0xff] %vm1321, %v1274
      %1323 = vst.msk [vmem:[#allocation4 + $0x8] sm:$0xff] %vm1321, %v1276
      %1324 = vst.msk [vmem:[#allocation4 + $0x10] sm:$0xff] %vm1321, %v1278
      %1325 = vst.msk [vmem:[#allocation4 + $0x18] sm:$0xff] %vm1321, %v1280
      %1326 = vst.msk [vmem:[#allocation4 + $0x20] sm:$0xff] %vm1321, %v1282
      %1327 = vst.msk [vmem:[#allocation4 + $0x28] sm:$0xff] %vm1321, %v1284
      %1328 = vst.msk [vmem:[#allocation4 + $0x30] sm:$0xff] %vm1321, %v1286
      %1329 = vst.msk [vmem:[#allocation4 + $0x38] sm:$0xff] %vm1321, %v1288
      %1330 = vst.msk [vmem:[#allocation4 + $0x40] sm:$0xff] %vm1321, %v1290
      %1331 = vst.msk [vmem:[#allocation4 + $0x48] sm:$0xff] %vm1321, %v1292
      %1332 = vst.msk [vmem:[#allocation4 + $0x50] sm:$0xff] %vm1321, %v1294
      %1333 = vst.msk [vmem:[#allocation4 + $0x58] sm:$0xff] %vm1321, %v1296
      %1334 = vst.msk [vmem:[#allocation4 + $0x60] sm:$0xff] %vm1321, %v1298
      %1335 = vst.msk [vmem:[#allocation4 + $0x68] sm:$0xff] %vm1321, %v1300
      %1336 = vst.msk [vmem:[#allocation4 + $0x70] sm:$0xff] %vm1321, %v1302
      %1337 = vst.msk [vmem:[#allocation4 + $0x78] sm:$0xff] %vm1321, %v1304
      %v1338 = vld [vmem:[%s1079 + $0x2] sm:$0xff]
      %v1339 = vld [vmem:[%s1079 + $0xa] sm:$0xff]
      %v1340 = vld [vmem:[%s1079 + $0x1a] sm:$0xff]
      %v1341 = vld [vmem:[%s1079 + $0x22] sm:$0xff]
      %v1342 = vld [vmem:[%s1079 + $0x32] sm:$0xff]
      %v1343 = vld [vmem:[%s1079 + $0x3a] sm:$0xff]
      %v1344 = vld [vmem:[%s1079 + $0x4a] sm:$0xff]
      %v1345 = vld [vmem:[%s1079 + $0x52] sm:$0xff]
      %v1346 = vld [vmem:[%s1079 + $0x62] sm:$0xff]
      %v1347 = vld [vmem:[%s1079 + $0x6a] sm:$0xff]
      %v1348 = vld [vmem:[%s1079 + $0x7a] sm:$0xff]
      %v1349 = vld [vmem:[%s1079 + $0x82] sm:$0xff]
      %v1350 = vld [vmem:[%s1079 + $0x92] sm:$0xff]
      %v1351 = vld [vmem:[%s1079 + $0x9a] sm:$0xff]
      %v1352 = vld [vmem:[%s1079 + $0xaa] sm:$0xff]
      %v1353 = vld [vmem:[%s1079 + $0xb2] sm:$0xff]
      %v1354 = vld [vmem:[%s1079 + $0xc2] sm:$0xff]
      %v1355 = vld [vmem:[%s1079 + $0xca] sm:$0xff]
      %v1356 = vld [vmem:[%s1079 + $0xda] sm:$0xff]
      %v1357 = vld [vmem:[%s1079 + $0xe2] sm:$0xff]
      %v1358 = vld [vmem:[%s1079 + $0xf2] sm:$0xff]
      %v1359 = vld [vmem:[%s1079 + $0xfa] sm:$0xff]
      %v1360 = vld [vmem:[%s1079 + $0x10a] sm:$0xff]
      %v1361 = vld [vmem:[%s1079 + $0x112] sm:$0xff]
      %v1362 = vld [vmem:[%s1079 + $0x122] sm:$0xff]
      %v1363 = vld [vmem:[%s1079 + $0x12a] sm:$0xff]
      %v1364 = vld [vmem:[%s1079 + $0x13a] sm:$0xff]
      %v1365 = vld [vmem:[%s1079 + $0x142] sm:$0xff]
      %v1366 = vld [vmem:[%s1079 + $0x152] sm:$0xff]
      %v1367 = vld [vmem:[%s1079 + $0x15a] sm:$0xff]
      %v1368 = vld [vmem:[%s1079 + $0x16a] sm:$0xff]
      %v1369 = vld [vmem:[%s1079 + $0x172] sm:$0xff]
      %v1370 = vpack.c.bf16 %v1339, %v1338
      %v1371 = vpack.c.bf16 %v1341, %v1340
      %v1372 = vpack.c.bf16 %v1343, %v1342
      %v1373 = vpack.c.bf16 %v1345, %v1344
      %v1374 = vpack.c.bf16 %v1347, %v1346
      %v1375 = vpack.c.bf16 %v1349, %v1348
      %v1376 = vpack.c.bf16 %v1351, %v1350
      %v1377 = vpack.c.bf16 %v1353, %v1352
      %v1378 = vpack.c.bf16 %v1355, %v1354
      %v1379 = vpack.c.bf16 %v1357, %v1356
      %v1380 = vpack.c.bf16 %v1359, %v1358
      %v1381 = vpack.c.bf16 %v1361, %v1360
      %v1382 = vpack.c.bf16 %v1363, %v1362
      %v1383 = vpack.c.bf16 %v1365, %v1364
      %v1384 = vpack.c.bf16 %v1367, %v1366
      %v1385 = vpack.c.bf16 %v1369, %v1368
      %1402 = vrot.lane.b32.xlu0 %v1370, 32
      %v1403 = vpop.permute.xlu0 %1402
      %1404 = vrot.lane.b32.xlu0 %v1371, 32
      %v1405 = vpop.permute.xlu0 %1404
      %1406 = vrot.lane.b32.xlu0 %v1372, 32
      %v1407 = vpop.permute.xlu0 %1406
      %1408 = vrot.lane.b32.xlu0 %v1373, 32
      %v1409 = vpop.permute.xlu0 %1408
      %1410 = vrot.lane.b32.xlu0 %v1374, 32
      %v1411 = vpop.permute.xlu0 %1410
      %1412 = vrot.lane.b32.xlu0 %v1375, 32
      %v1413 = vpop.permute.xlu0 %1412
      %1414 = vrot.lane.b32.xlu0 %v1376, 32
      %v1415 = vpop.permute.xlu0 %1414
      %1416 = vrot.lane.b32.xlu0 %v1377, 32
      %v1417 = vpop.permute.xlu0 %1416
      %1418 = vrot.lane.b32.xlu0 %v1378, 32
      %v1419 = vpop.permute.xlu0 %1418
      %1420 = vrot.lane.b32.xlu0 %v1379, 32
      %v1421 = vpop.permute.xlu0 %1420
      %1422 = vrot.lane.b32.xlu0 %v1380, 32
      %v1423 = vpop.permute.xlu0 %1422
      %1424 = vrot.lane.b32.xlu0 %v1381, 32
      %v1425 = vpop.permute.xlu0 %1424
      %1426 = vrot.lane.b32.xlu0 %v1382, 32
      %v1427 = vpop.permute.xlu0 %1426
      %1428 = vrot.lane.b32.xlu0 %v1383, 32
      %v1429 = vpop.permute.xlu0 %1428
      %1430 = vrot.lane.b32.xlu0 %v1384, 32
      %v1431 = vpop.permute.xlu0 %1430
      %1432 = vrot.lane.b32.xlu0 %v1385, 32
      %v1433 = vpop.permute.xlu0 %1432
      %vm1450 = vcmask 294144
      %1451 = vst.msk [vmem:[#allocation4] sm:$0xff] %vm1450, %v1403
      %1452 = vst.msk [vmem:[#allocation4 + $0x8] sm:$0xff] %vm1450, %v1405
      %1453 = vst.msk [vmem:[#allocation4 + $0x10] sm:$0xff] %vm1450, %v1407
      %1454 = vst.msk [vmem:[#allocation4 + $0x18] sm:$0xff] %vm1450, %v1409
      %1455 = vst.msk [vmem:[#allocation4 + $0x20] sm:$0xff] %vm1450, %v1411
      %1456 = vst.msk [vmem:[#allocation4 + $0x28] sm:$0xff] %vm1450, %v1413
      %1457 = vst.msk [vmem:[#allocation4 + $0x30] sm:$0xff] %vm1450, %v1415
      %1458 = vst.msk [vmem:[#allocation4 + $0x38] sm:$0xff] %vm1450, %v1417
      %1459 = vst.msk [vmem:[#allocation4 + $0x40] sm:$0xff] %vm1450, %v1419
      %1460 = vst.msk [vmem:[#allocation4 + $0x48] sm:$0xff] %vm1450, %v1421
      %1461 = vst.msk [vmem:[#allocation4 + $0x50] sm:$0xff] %vm1450, %v1423
      %1462 = vst.msk [vmem:[#allocation4 + $0x58] sm:$0xff] %vm1450, %v1425
      %1463 = vst.msk [vmem:[#allocation4 + $0x60] sm:$0xff] %vm1450, %v1427
      %1464 = vst.msk [vmem:[#allocation4 + $0x68] sm:$0xff] %vm1450, %v1429
      %1465 = vst.msk [vmem:[#allocation4 + $0x70] sm:$0xff] %vm1450, %v1431
      %1466 = vst.msk [vmem:[#allocation4 + $0x78] sm:$0xff] %vm1450, %v1433
      %v1467 = vld [vmem:[#allocation4] sm:$0xff]
      %v1468 = vld [vmem:[#allocation4 + $0x8] sm:$0xff]
      %v1469 = vld [vmem:[#allocation4 + $0x10] sm:$0xff]
      %v1470 = vld [vmem:[#allocation4 + $0x18] sm:$0xff]
      %v1471 = vld [vmem:[#allocation4 + $0x20] sm:$0xff]
      %v1472 = vld [vmem:[#allocation4 + $0x28] sm:$0xff]
      %v1473 = vld [vmem:[#allocation4 + $0x30] sm:$0xff]
      %v1474 = vld [vmem:[#allocation4 + $0x38] sm:$0xff]
      %v1475 = vld [vmem:[#allocation4 + $0x40] sm:$0xff]
      %v1476 = vld [vmem:[#allocation4 + $0x48] sm:$0xff]
      %v1477 = vld [vmem:[#allocation4 + $0x50] sm:$0xff]
      %v1478 = vld [vmem:[#allocation4 + $0x58] sm:$0xff]
      %v1479 = vld [vmem:[#allocation4 + $0x60] sm:$0xff]
      %v1480 = vld [vmem:[#allocation4 + $0x68] sm:$0xff]
      %v1481 = vld [vmem:[#allocation4 + $0x70] sm:$0xff]
      %v1482 = vld [vmem:[#allocation4 + $0x78] sm:$0xff]
      %v1483 = vld [vmem:[%s1] sm:$0xf]
      %v1484 = vld [vmem:[%s1 + $0x4] sm:$0xf]
      %v1485 = vld [vmem:[%s1 + $0x8] sm:$0xf]
      %v1486 = vld [vmem:[%s1 + $0xc] sm:$0xf]
      %v1487 = vld [vmem:[%s1 + $0x10] sm:$0x3]
      %v1489 = vlaneseq
      %v1490 = vshrl.u32 %v1489, 7
      %v1491 = vsub.s32 0, %v1490
      %v1492 = vrot.slane %v369, %v1491
      %v1499 = vunpack.c.l.b16 %v1483
      %v1500 = vunpack.c.l.b16 %v1484
      %v1501 = vunpack.c.l.b16 %v1485
      %v1502 = vunpack.c.l.b16 %v1486
      %v1503 = vunpack.c.l.b16 %v1487
      %v1504 = vpack.c.b16 %v1500, %v1499
      %v1505 = vpack.c.b16 %v1502, %v1501
      %v1506 = vpack.c.b16 %v1503, %v1503
      %vm1509 = vcmask 293888
      %v1511 = vsel %vm1509, %v1467, 0
      %v1514 = vsel %vm1509, %v1468, 0
      %v1517 = vsel %vm1509, %v1469, 0
      %v1520 = vsel %vm1509, %v1470, 0
      %v1523 = vsel %vm1509, %v1471, 0
      %v1526 = vsel %vm1509, %v1472, 0
      %v1529 = vsel %vm1509, %v1473, 0
      %v1532 = vsel %vm1509, %v1474, 0
      %v1535 = vsel %vm1509, %v1475, 0
      %v1538 = vsel %vm1509, %v1476, 0
      %v1541 = vsel %vm1509, %v1477, 0
      %v1544 = vsel %vm1509, %v1478, 0
      %v1547 = vsel %vm1509, %v1479, 0
      %v1550 = vsel %vm1509, %v1480, 0
      %v1553 = vsel %vm1509, %v1481, 0
      %v1556 = vsel %vm1509, %v1482, 0
      %vm1558 = vcmask 1041408
      %v1560 = vsel %vm1558, %v1506, 0
      %1562 = vmatprep.subr.bf16.mxu0 0
      %1563 = vmatpush1.bf16.msra.mxu0 %v1504
      %1564 = vmatprep.subr.bf16.mxu0 0
      %1565 = vmatpush1.bf16.msra.mxu0 %v1505
      %1566 = vmatprep.subr.bf16.mxu0 0
      %1567 = vmatpush1.bf16.msra.mxu0 %v1560
      %1568 = vmatprep.subr.bf16.mxu0 0
      %1569 = vmatpush1.bf16.msra.mxu0 0
      %1570 = vmatprep.subr.bf16.mxu0 0
      %1571 = vmatpush1.bf16.msra.mxu0 0
      %1572 = vmatprep.subr.bf16.mxu0 0
      %1573 = vmatpush1.bf16.msra.mxu0 0
      %1574 = vmatprep.subr.bf16.mxu0 0
      %1575 = vmatpush1.bf16.msra.mxu0 0
      %1576 = vmatprep.subr.bf16.mxu0 0
      %1577 = vmatpush1.bf16.msra.mxu0 0
      %1578 = vmatprep.subr.bf16.mxu0 0
      %1579 = vmatpush1.bf16.msra.mxu0 0
      %1580 = vmatprep.subr.bf16.mxu0 0
      %1581 = vmatpush1.bf16.msra.mxu0 0
      %1582 = vmatprep.subr.bf16.mxu0 0
      %1583 = vmatpush1.bf16.msra.mxu0 0
      %1584 = vmatprep.subr.bf16.mxu0 0
      %1585 = vmatpush1.bf16.msra.mxu0 0
      %1586 = vmatprep.subr.bf16.mxu0 0
      %1587 = vmatpush1.bf16.msra.mxu0 0
      %1588 = vmatprep.subr.bf16.mxu0 0
      %1589 = vmatpush1.bf16.msra.mxu0 0
      %1590 = vmatprep.subr.bf16.mxu0 0
      %1591 = vmatpush1.bf16.msra.mxu0 0
      %1592 = vmatprep.subr.bf16.mxu0 0
      %1593 = vmatpush1.bf16.msra.mxu0 0
      %1594 = vmatprep.mubr.bf16.mxu0 0
      %1595 = vmatmul.mubr.bf16.gmra.mrb[0].mxu0 %v1511
      %v1596 = vpop.f32.mrb[0].mxu0
      %v1597 = vadd.f32 %v1492, %v1596
      %v1598 = vpop.f32.mrb[0].mxu0
      %v1599 = vpop.f32.mrb[0].mxu0
      %v1600 = vadd.f32 %v1492, %v1599
      %v1601 = vpop.f32.mrb[0].mxu0
      %1602 = vmatprep.mubr.bf16.mxu0 0
      %1603 = vmatmul.mubr.bf16.gmra.mrb[0].mxu0 %v1514
      %v1604 = vpop.f32.mrb[0].mxu0
      %v1605 = vadd.f32 %v1492, %v1604
      %v1606 = vpop.f32.mrb[0].mxu0
      %v1607 = vpop.f32.mrb[0].mxu0
      %v1608 = vadd.f32 %v1492, %v1607
      %v1609 = vpop.f32.mrb[0].mxu0
      %1610 = vmatprep.mubr.bf16.mxu0 0
      %1611 = vmatmul.mubr.bf16.gmra.mrb[0].mxu0 %v1517
      %v1612 = vpop.f32.mrb[0].mxu0
      %v1613 = vadd.f32 %v1492, %v1612
      %v1614 = vpop.f32.mrb[0].mxu0
      %v1615 = vpop.f32.mrb[0].mxu0
      %v1616 = vadd.f32 %v1492, %v1615
      %v1617 = vpop.f32.mrb[0].mxu0
      %1618 = vmatprep.mubr.bf16.mxu0 0
      %1619 = vmatmul.mubr.bf16.gmra.mrb[0].mxu0 %v1520
      %v1620 = vpop.f32.mrb[0].mxu0
      %v1621 = vadd.f32 %v1492, %v1620
      %v1622 = vpop.f32.mrb[0].mxu0
      %v1623 = vpop.f32.mrb[0].mxu0
      %v1624 = vadd.f32 %v1492, %v1623
      %v1625 = vpop.f32.mrb[0].mxu0
      %1626 = vmatprep.mubr.bf16.mxu0 0
      %1627 = vmatmul.mubr.bf16.gmra.mrb[0].mxu0 %v1523
      %v1628 = vpop.f32.mrb[0].mxu0
      %v1629 = vadd.f32 %v1492, %v1628
      %v1630 = vpop.f32.mrb[0].mxu0
      %v1631 = vpop.f32.mrb[0].mxu0
      %v1632 = vadd.f32 %v1492, %v1631
      %v1633 = vpop.f32.mrb[0].mxu0
      %1634 = vmatprep.mubr.bf16.mxu0 0
      %1635 = vmatmul.mubr.bf16.gmra.mrb[0].mxu0 %v1526
      %v1636 = vpop.f32.mrb[0].mxu0
      %v1637 = vadd.f32 %v1492, %v1636
      %v1638 = vpop.f32.mrb[0].mxu0
      %v1639 = vpop.f32.mrb[0].mxu0
      %v1640 = vadd.f32 %v1492, %v1639
      %v1641 = vpop.f32.mrb[0].mxu0
      %1642 = vmatprep.mubr.bf16.mxu0 0
      %1643 = vmatmul.mubr.bf16.gmra.mrb[0].mxu0 %v1529
      %v1644 = vpop.f32.mrb[0].mxu0
      %v1645 = vadd.f32 %v1492, %v1644
      %v1646 = vpop.f32.mrb[0].mxu0
      %v1647 = vpop.f32.mrb[0].mxu0
      %v1648 = vadd.f32 %v1492, %v1647
      %v1649 = vpop.f32.mrb[0].mxu0
      %1650 = vmatprep.mubr.bf16.mxu0 0
      %1651 = vmatmul.mubr.bf16.gmra.mrb[0].mxu0 %v1532
      %v1652 = vpop.f32.mrb[0].mxu0
      %v1653 = vadd.f32 %v1492, %v1652
      %v1654 = vpop.f32.mrb[0].mxu0
      %v1655 = vpop.f32.mrb[0].mxu0
      %v1656 = vadd.f32 %v1492, %v1655
      %v1657 = vpop.f32.mrb[0].mxu0
      %1658 = vmatprep.mubr.bf16.mxu0 0
      %1659 = vmatmul.mubr.bf16.gmra.mrb[0].mxu0 %v1535
      %v1660 = vpop.f32.mrb[0].mxu0
      %v1661 = vadd.f32 %v1492, %v1660
      %v1662 = vpop.f32.mrb[0].mxu0
      %v1663 = vpop.f32.mrb[0].mxu0
      %v1664 = vadd.f32 %v1492, %v1663
      %v1665 = vpop.f32.mrb[0].mxu0
      %1666 = vmatprep.mubr.bf16.mxu0 0
      %1667 = vmatmul.mubr.bf16.gmra.mrb[0].mxu0 %v1538
      %v1668 = vpop.f32.mrb[0].mxu0
      %v1669 = vadd.f32 %v1492, %v1668
      %v1670 = vpop.f32.mrb[0].mxu0
      %v1671 = vpop.f32.mrb[0].mxu0
      %v1672 = vadd.f32 %v1492, %v1671
      %v1673 = vpop.f32.mrb[0].mxu0
      %1674 = vmatprep.mubr.bf16.mxu0 0
      %1675 = vmatmul.mubr.bf16.gmra.mrb[0].mxu0 %v1541
      %v1676 = vpop.f32.mrb[0].mxu0
      %v1677 = vadd.f32 %v1492, %v1676
      %v1678 = vpop.f32.mrb[0].mxu0
      %v1679 = vpop.f32.mrb[0].mxu0
      %v1680 = vadd.f32 %v1492, %v1679
      %v1681 = vpop.f32.mrb[0].mxu0
      %1682 = vmatprep.mubr.bf16.mxu0 0
      %1683 = vmatmul.mubr.bf16.gmra.mrb[0].mxu0 %v1544
      %v1684 = vpop.f32.mrb[0].mxu0
      %v1685 = vadd.f32 %v1492, %v1684
      %v1686 = vpop.f32.mrb[0].mxu0
      %v1687 = vpop.f32.mrb[0].mxu0
      %v1688 = vadd.f32 %v1492, %v1687
      %v1689 = vpop.f32.mrb[0].mxu0
      %1690 = vmatprep.mubr.bf16.mxu0 0
      %1691 = vmatmul.mubr.bf16.gmra.mrb[0].mxu0 %v1547
      %v1692 = vpop.f32.mrb[0].mxu0
      %v1693 = vadd.f32 %v1492, %v1692
      %v1694 = vpop.f32.mrb[0].mxu0
      %v1695 = vpop.f32.mrb[0].mxu0
      %v1696 = vadd.f32 %v1492, %v1695
      %v1697 = vpop.f32.mrb[0].mxu0
      %1698 = vmatprep.mubr.bf16.mxu0 0
      %1699 = vmatmul.mubr.bf16.gmra.mrb[0].mxu0 %v1550
      %v1700 = vpop.f32.mrb[0].mxu0
      %v1701 = vadd.f32 %v1492, %v1700
      %v1702 = vpop.f32.mrb[0].mxu0
      %v1703 = vpop.f32.mrb[0].mxu0
      %v1704 = vadd.f32 %v1492, %v1703
      %v1705 = vpop.f32.mrb[0].mxu0
      %1706 = vmatprep.mubr.bf16.mxu0 0
      %1707 = vmatmul.mubr.bf16.gmra.mrb[0].mxu0 %v1553
      %v1708 = vpop.f32.mrb[0].mxu0
      %v1709 = vadd.f32 %v1492, %v1708
      %v1710 = vpop.f32.mrb[0].mxu0
      %v1711 = vpop.f32.mrb[0].mxu0
      %v1712 = vadd.f32 %v1492, %v1711
      %v1713 = vpop.f32.mrb[0].mxu0
      %1714 = vmatprep.mubr.bf16.mxu0 0
      %1715 = vmatmul.mubr.bf16.gmra.mrb[0].mxu0 %v1556
      %v1716 = vpop.f32.mrb[0].mxu0
      %v1717 = vadd.f32 %v1492, %v1716
      %v1718 = vpop.f32.mrb[0].mxu0
      %v1719 = vpop.f32.mrb[0].mxu0
      %v1720 = vadd.f32 %v1492, %v1719
      %v1721 = vpop.f32.mrb[0].mxu0
      %1722 = vdwg.mxu0
      %v1723 = vmax.f32 %v1597, 0.0
      %v1724 = vmax.f32 %v1600, 0.0
      %v1725 = vmax.f32 %v1605, 0.0
      %v1726 = vmax.f32 %v1608, 0.0
      %v1727 = vmax.f32 %v1613, 0.0
      %v1728 = vmax.f32 %v1616, 0.0
      %v1729 = vmax.f32 %v1621, 0.0
      %v1730 = vmax.f32 %v1624, 0.0
      %v1731 = vmax.f32 %v1629, 0.0
      %v1732 = vmax.f32 %v1632, 0.0
      %v1733 = vmax.f32 %v1637, 0.0
      %v1734 = vmax.f32 %v1640, 0.0
      %v1735 = vmax.f32 %v1645, 0.0
      %v1736 = vmax.f32 %v1648, 0.0
      %v1737 = vmax.f32 %v1653, 0.0
      %v1738 = vmax.f32 %v1656, 0.0
      %v1739 = vmax.f32 %v1661, 0.0
      %v1740 = vmax.f32 %v1664, 0.0
      %v1741 = vmax.f32 %v1669, 0.0
      %v1742 = vmax.f32 %v1672, 0.0
      %v1743 = vmax.f32 %v1677, 0.0
      %v1744 = vmax.f32 %v1680, 0.0
      %v1745 = vmax.f32 %v1685, 0.0
      %v1746 = vmax.f32 %v1688, 0.0
      %v1747 = vmax.f32 %v1693, 0.0
      %v1748 = vmax.f32 %v1696, 0.0
      %v1749 = vmax.f32 %v1701, 0.0
      %v1750 = vmax.f32 %v1704, 0.0
      %v1751 = vmax.f32 %v1709, 0.0
      %v1752 = vmax.f32 %v1712, 0.0
      %v1753 = vmax.f32 %v1717, 0.0
      %v1754 = vmax.f32 %v1720, 0.0
      %1755 = vst.msk [vmem:[#allocation3] sm:$0xff] %vm290, 0.0
      %1756 = vst.msk [vmem:[#allocation3 + $0x8] sm:$0xff] %vm290, 0.0
      %1757 = vst.msk [vmem:[#allocation3 + $0x10] sm:$0x3] %vm293, 0.0
      %s1758 = scalar_lea.vmem [#allocation3], 408
      %1759 = vst.msk [vmem:[%s1758] sm:$0xff] %vm290, 0.0
      %1760 = vst.msk [vmem:[%s1758 + $0x8] sm:$0xff] %vm290, 0.0
      %1761 = vst.msk [vmem:[%s1758 + $0x10] sm:$0x3] %vm293, 0.0
      %1762 = vst.msk [vmem:[#allocation3] sm:$0x1] %vm299, 0.0
      %1763 = vst.msk [vmem:[#allocation3 + $0x18] sm:$0x1] %vm299, 0.0
      %1764 = vst.msk [vmem:[#allocation3 + $0x30] sm:$0x1] %vm299, 0.0
      %1765 = vst.msk [vmem:[#allocation3 + $0x48] sm:$0x1] %vm299, 0.0
      %1766 = vst.msk [vmem:[#allocation3 + $0x60] sm:$0x1] %vm299, 0.0
      %1767 = vst.msk [vmem:[#allocation3 + $0x78] sm:$0x1] %vm299, 0.0
      %1768 = vst.msk [vmem:[#allocation3 + $0x90] sm:$0x1] %vm299, 0.0
      %1769 = vst.msk [vmem:[#allocation3 + $0xa8] sm:$0x1] %vm299, 0.0
      %1770 = vst.msk [vmem:[#allocation3 + $0xc0] sm:$0x1] %vm299, 0.0
      %1771 = vst.msk [vmem:[#allocation3 + $0xd8] sm:$0x1] %vm299, 0.0
      %1772 = vst.msk [vmem:[#allocation3 + $0xf0] sm:$0x1] %vm299, 0.0
      %1773 = vst.msk [vmem:[#allocation3 + $0x108] sm:$0x1] %vm299, 0.0
      %1774 = vst.msk [vmem:[#allocation3 + $0x120] sm:$0x1] %vm299, 0.0
      %1775 = vst.msk [vmem:[#allocation3 + $0x138] sm:$0x1] %vm299, 0.0
      %1776 = vst.msk [vmem:[#allocation3 + $0x150] sm:$0x1] %vm299, 0.0
      %1777 = vst.msk [vmem:[#allocation3 + $0x168] sm:$0x1] %vm299, 0.0
      %1778 = vst.msk [vmem:[#allocation3 + $0x180] sm:$0x1] %vm299, 0.0
      %1779 = vst.msk [vmem:[#allocation3 + $0x198] sm:$0x1] %vm299, 0.0
      %1780 = vst.msk [vmem:[#allocation3 + $0x11] sm:$0x1] %vm299, 0.0
      %1781 = vst.msk [vmem:[#allocation3 + $0x29] sm:$0x1] %vm299, 0.0
      %1782 = vst.msk [vmem:[#allocation3 + $0x41] sm:$0x1] %vm299, 0.0
      %1783 = vst.msk [vmem:[#allocation3 + $0x59] sm:$0x1] %vm299, 0.0
      %1784 = vst.msk [vmem:[#allocation3 + $0x71] sm:$0x1] %vm299, 0.0
      %1785 = vst.msk [vmem:[#allocation3 + $0x89] sm:$0x1] %vm299, 0.0
      %1786 = vst.msk [vmem:[#allocation3 + $0xa1] sm:$0x1] %vm299, 0.0
      %1787 = vst.msk [vmem:[#allocation3 + $0xb9] sm:$0x1] %vm299, 0.0
      %1788 = vst.msk [vmem:[#allocation3 + $0xd1] sm:$0x1] %vm299, 0.0
      %1789 = vst.msk [vmem:[#allocation3 + $0xe9] sm:$0x1] %vm299, 0.0
      %1790 = vst.msk [vmem:[#allocation3 + $0x101] sm:$0x1] %vm299, 0.0
      %1791 = vst.msk [vmem:[#allocation3 + $0x119] sm:$0x1] %vm299, 0.0
      %1792 = vst.msk [vmem:[#allocation3 + $0x131] sm:$0x1] %vm299, 0.0
      %1793 = vst.msk [vmem:[#allocation3 + $0x149] sm:$0x1] %vm299, 0.0
      %1794 = vst.msk [vmem:[#allocation3 + $0x161] sm:$0x1] %vm299, 0.0
      %1795 = vst.msk [vmem:[#allocation3 + $0x179] sm:$0x1] %vm299, 0.0
      %1796 = vst.msk [vmem:[#allocation3 + $0x191] sm:$0x1] %vm299, 0.0
      %1797 = vst.msk [vmem:[#allocation3 + $0x1a9] sm:$0x1] %vm299, 0.0
      %s1798 = scalar_lea.vmem [#allocation3], 24
      %1799 = vst.msk [vmem:[%s1798 + $0x1] sm:$0xff] %vm290, %v1723
      %1800 = vst.msk [vmem:[%s1798 + $0x9] sm:$0xff] %vm290, %v1724
      %1801 = vst.msk [vmem:[%s1798 + $0x19] sm:$0xff] %vm290, %v1725
      %1802 = vst.msk [vmem:[%s1798 + $0x21] sm:$0xff] %vm290, %v1726
      %1803 = vst.msk [vmem:[%s1798 + $0x31] sm:$0xff] %vm290, %v1727
      %1804 = vst.msk [vmem:[%s1798 + $0x39] sm:$0xff] %vm290, %v1728
      %1805 = vst.msk [vmem:[%s1798 + $0x49] sm:$0xff] %vm290, %v1729
      %1806 = vst.msk [vmem:[%s1798 + $0x51] sm:$0xff] %vm290, %v1730
      %1807 = vst.msk [vmem:[%s1798 + $0x61] sm:$0xff] %vm290, %v1731
      %1808 = vst.msk [vmem:[%s1798 + $0x69] sm:$0xff] %vm290, %v1732
      %1809 = vst.msk [vmem:[%s1798 + $0x79] sm:$0xff] %vm290, %v1733
      %1810 = vst.msk [vmem:[%s1798 + $0x81] sm:$0xff] %vm290, %v1734
      %1811 = vst.msk [vmem:[%s1798 + $0x91] sm:$0xff] %vm290, %v1735
      %1812 = vst.msk [vmem:[%s1798 + $0x99] sm:$0xff] %vm290, %v1736
      %1813 = vst.msk [vmem:[%s1798 + $0xa9] sm:$0xff] %vm290, %v1737
      %1814 = vst.msk [vmem:[%s1798 + $0xb1] sm:$0xff] %vm290, %v1738
      %1815 = vst.msk [vmem:[%s1798 + $0xc1] sm:$0xff] %vm290, %v1739
      %1816 = vst.msk [vmem:[%s1798 + $0xc9] sm:$0xff] %vm290, %v1740
      %1817 = vst.msk [vmem:[%s1798 + $0xd9] sm:$0xff] %vm290, %v1741
      %1818 = vst.msk [vmem:[%s1798 + $0xe1] sm:$0xff] %vm290, %v1742
      %1819 = vst.msk [vmem:[%s1798 + $0xf1] sm:$0xff] %vm290, %v1743
      %1820 = vst.msk [vmem:[%s1798 + $0xf9] sm:$0xff] %vm290, %v1744
      %1821 = vst.msk [vmem:[%s1798 + $0x109] sm:$0xff] %vm290, %v1745
      %1822 = vst.msk [vmem:[%s1798 + $0x111] sm:$0xff] %vm290, %v1746
      %1823 = vst.msk [vmem:[%s1798 + $0x121] sm:$0xff] %vm290, %v1747
      %1824 = vst.msk [vmem:[%s1798 + $0x129] sm:$0xff] %vm290, %v1748
      %1825 = vst.msk [vmem:[%s1798 + $0x139] sm:$0xff] %vm290, %v1749
      %1826 = vst.msk [vmem:[%s1798 + $0x141] sm:$0xff] %vm290, %v1750
      %1827 = vst.msk [vmem:[%s1798 + $0x151] sm:$0xff] %vm290, %v1751
      %1828 = vst.msk [vmem:[%s1798 + $0x159] sm:$0xff] %vm290, %v1752
      %1829 = vst.msk [vmem:[%s1798 + $0x169] sm:$0xff] %vm290, %v1753
      %1830 = vst.msk [vmem:[%s1798 + $0x171] sm:$0xff] %vm290, %v1754
      %v1831 = vld [vmem:[%s4] sm:$0x1]
      %v1832 = vld [vmem:[#allocation3] sm:$0xff]
      %v1833 = vld [vmem:[#allocation3 + $0x8] sm:$0xff]
      %v1834 = vld [vmem:[#allocation3 + $0x18] sm:$0xff]
      %v1835 = vld [vmem:[#allocation3 + $0x20] sm:$0xff]
      %v1836 = vld [vmem:[#allocation3 + $0x30] sm:$0xff]
      %v1837 = vld [vmem:[#allocation3 + $0x38] sm:$0xff]
      %v1838 = vld [vmem:[#allocation3 + $0x48] sm:$0xff]
      %v1839 = vld [vmem:[#allocation3 + $0x50] sm:$0xff]
      %v1840 = vld [vmem:[#allocation3 + $0x60] sm:$0xff]
      %v1841 = vld [vmem:[#allocation3 + $0x68] sm:$0xff]
      %v1842 = vld [vmem:[#allocation3 + $0x78] sm:$0xff]
      %v1843 = vld [vmem:[#allocation3 + $0x80] sm:$0xff]
      %v1844 = vld [vmem:[#allocation3 + $0x90] sm:$0xff]
      %v1845 = vld [vmem:[#allocation3 + $0x98] sm:$0xff]
      %v1846 = vld [vmem:[#allocation3 + $0xa8] sm:$0xff]
      %v1847 = vld [vmem:[#allocation3 + $0xb0] sm:$0xff]
      %v1848 = vld [vmem:[#allocation3 + $0xc0] sm:$0xff]
      %v1849 = vld [vmem:[#allocation3 + $0xc8] sm:$0xff]
      %v1850 = vld [vmem:[#allocation3 + $0xd8] sm:$0xff]
      %v1851 = vld [vmem:[#allocation3 + $0xe0] sm:$0xff]
      %v1852 = vld [vmem:[#allocation3 + $0xf0] sm:$0xff]
      %v1853 = vld [vmem:[#allocation3 + $0xf8] sm:$0xff]
      %v1854 = vld [vmem:[#allocation3 + $0x108] sm:$0xff]
      %v1855 = vld [vmem:[#allocation3 + $0x110] sm:$0xff]
      %v1856 = vld [vmem:[#allocation3 + $0x120] sm:$0xff]
      %v1857 = vld [vmem:[#allocation3 + $0x128] sm:$0xff]
      %v1858 = vld [vmem:[#allocation3 + $0x138] sm:$0xff]
      %v1859 = vld [vmem:[#allocation3 + $0x140] sm:$0xff]
      %v1860 = vld [vmem:[#allocation3 + $0x150] sm:$0xff]
      %v1861 = vld [vmem:[#allocation3 + $0x158] sm:$0xff]
      %v1862 = vld [vmem:[#allocation3 + $0x168] sm:$0xff]
      %v1863 = vld [vmem:[#allocation3 + $0x170] sm:$0xff]
      %v1864 = vpack.c.bf16 %v1833, %v1832
      %v1865 = vpack.c.bf16 %v1835, %v1834
      %v1866 = vpack.c.bf16 %v1837, %v1836
      %v1867 = vpack.c.bf16 %v1839, %v1838
      %v1868 = vpack.c.bf16 %v1841, %v1840
      %v1869 = vpack.c.bf16 %v1843, %v1842
      %v1870 = vpack.c.bf16 %v1845, %v1844
      %v1871 = vpack.c.bf16 %v1847, %v1846
      %v1872 = vpack.c.bf16 %v1849, %v1848
      %v1873 = vpack.c.bf16 %v1851, %v1850
      %v1874 = vpack.c.bf16 %v1853, %v1852
      %v1875 = vpack.c.bf16 %v1855, %v1854
      %v1876 = vpack.c.bf16 %v1857, %v1856
      %v1877 = vpack.c.bf16 %v1859, %v1858
      %v1878 = vpack.c.bf16 %v1861, %v1860
      %v1879 = vpack.c.bf16 %v1863, %v1862
      %1880 = vst.msk [vmem:[#allocation5] sm:$0xff] %vm290, %v1864
      %1881 = vst.msk [vmem:[#allocation5 + $0x8] sm:$0xff] %vm290, %v1865
      %1882 = vst.msk [vmem:[#allocation5 + $0x10] sm:$0xff] %vm290, %v1866
      %1883 = vst.msk [vmem:[#allocation5 + $0x18] sm:$0xff] %vm290, %v1867
      %1884 = vst.msk [vmem:[#allocation5 + $0x20] sm:$0xff] %vm290, %v1868
      %1885 = vst.msk [vmem:[#allocation5 + $0x28] sm:$0xff] %vm290, %v1869
      %1886 = vst.msk [vmem:[#allocation5 + $0x30] sm:$0xff] %vm290, %v1870
      %1887 = vst.msk [vmem:[#allocation5 + $0x38] sm:$0xff] %vm290, %v1871
      %1888 = vst.msk [vmem:[#allocation5 + $0x40] sm:$0xff] %vm290, %v1872
      %1889 = vst.msk [vmem:[#allocation5 + $0x48] sm:$0xff] %vm290, %v1873
      %1890 = vst.msk [vmem:[#allocation5 + $0x50] sm:$0xff] %vm290, %v1874
      %1891 = vst.msk [vmem:[#allocation5 + $0x58] sm:$0xff] %vm290, %v1875
      %1892 = vst.msk [vmem:[#allocation5 + $0x60] sm:$0xff] %vm290, %v1876
      %1893 = vst.msk [vmem:[#allocation5 + $0x68] sm:$0xff] %vm290, %v1877
      %1894 = vst.msk [vmem:[#allocation5 + $0x70] sm:$0xff] %vm290, %v1878
      %1895 = vst.msk [vmem:[#allocation5 + $0x78] sm:$0xff] %vm290, %v1879
      %v1896 = vld [vmem:[#allocation3 + $0x1] sm:$0xff]
      %v1897 = vld [vmem:[#allocation3 + $0x9] sm:$0xff]
      %v1898 = vld [vmem:[#allocation3 + $0x19] sm:$0xff]
      %v1899 = vld [vmem:[#allocation3 + $0x21] sm:$0xff]
      %v1900 = vld [vmem:[#allocation3 + $0x31] sm:$0xff]
      %v1901 = vld [vmem:[#allocation3 + $0x39] sm:$0xff]
      %v1902 = vld [vmem:[#allocation3 + $0x49] sm:$0xff]
      %v1903 = vld [vmem:[#allocation3 + $0x51] sm:$0xff]
      %v1904 = vld [vmem:[#allocation3 + $0x61] sm:$0xff]
      %v1905 = vld [vmem:[#allocation3 + $0x69] sm:$0xff]
      %v1906 = vld [vmem:[#allocation3 + $0x79] sm:$0xff]
      %v1907 = vld [vmem:[#allocation3 + $0x81] sm:$0xff]
      %v1908 = vld [vmem:[#allocation3 + $0x91] sm:$0xff]
      %v1909 = vld [vmem:[#allocation3 + $0x99] sm:$0xff]
      %v1910 = vld [vmem:[#allocation3 + $0xa9] sm:$0xff]
      %v1911 = vld [vmem:[#allocation3 + $0xb1] sm:$0xff]
      %v1912 = vld [vmem:[#allocation3 + $0xc1] sm:$0xff]
      %v1913 = vld [vmem:[#allocation3 + $0xc9] sm:$0xff]
      %v1914 = vld [vmem:[#allocation3 + $0xd9] sm:$0xff]
      %v1915 = vld [vmem:[#allocation3 + $0xe1] sm:$0xff]
      %v1916 = vld [vmem:[#allocation3 + $0xf1] sm:$0xff]
      %v1917 = vld [vmem:[#allocation3 + $0xf9] sm:$0xff]
      %v1918 = vld [vmem:[#allocation3 + $0x109] sm:$0xff]
      %v1919 = vld [vmem:[#allocation3 + $0x111] sm:$0xff]
      %v1920 = vld [vmem:[#allocation3 + $0x121] sm:$0xff]
      %v1921 = vld [vmem:[#allocation3 + $0x129] sm:$0xff]
      %v1922 = vld [vmem:[#allocation3 + $0x139] sm:$0xff]
      %v1923 = vld [vmem:[#allocation3 + $0x141] sm:$0xff]
      %v1924 = vld [vmem:[#allocation3 + $0x151] sm:$0xff]
      %v1925 = vld [vmem:[#allocation3 + $0x159] sm:$0xff]
      %v1926 = vld [vmem:[#allocation3 + $0x169] sm:$0xff]
      %v1927 = vld [vmem:[#allocation3 + $0x171] sm:$0xff]
      %v1928 = vpack.c.bf16 %v1897, %v1896
      %v1929 = vpack.c.bf16 %v1899, %v1898
      %v1930 = vpack.c.bf16 %v1901, %v1900
      %v1931 = vpack.c.bf16 %v1903, %v1902
      %v1932 = vpack.c.bf16 %v1905, %v1904
      %v1933 = vpack.c.bf16 %v1907, %v1906
      %v1934 = vpack.c.bf16 %v1909, %v1908
      %v1935 = vpack.c.bf16 %v1911, %v1910
      %v1936 = vpack.c.bf16 %v1913, %v1912
      %v1937 = vpack.c.bf16 %v1915, %v1914
      %v1938 = vpack.c.bf16 %v1917, %v1916
      %v1939 = vpack.c.bf16 %v1919, %v1918
      %v1940 = vpack.c.bf16 %v1921, %v1920
      %v1941 = vpack.c.bf16 %v1923, %v1922
      %v1942 = vpack.c.bf16 %v1925, %v1924
      %v1943 = vpack.c.bf16 %v1927, %v1926
      %1960 = vrot.lane.b32.xlu0 %v1928, 4
      %v1961 = vpop.permute.xlu0 %1960
      %1962 = vrot.lane.b32.xlu0 %v1929, 4
      %v1963 = vpop.permute.xlu0 %1962
      %1964 = vrot.lane.b32.xlu0 %v1930, 4
      %v1965 = vpop.permute.xlu0 %1964
      %1966 = vrot.lane.b32.xlu0 %v1931, 4
      %v1967 = vpop.permute.xlu0 %1966
      %1968 = vrot.lane.b32.xlu0 %v1932, 4
      %v1969 = vpop.permute.xlu0 %1968
      %1970 = vrot.lane.b32.xlu0 %v1933, 4
      %v1971 = vpop.permute.xlu0 %1970
      %1972 = vrot.lane.b32.xlu0 %v1934, 4
      %v1973 = vpop.permute.xlu0 %1972
      %1974 = vrot.lane.b32.xlu0 %v1935, 4
      %v1975 = vpop.permute.xlu0 %1974
      %1976 = vrot.lane.b32.xlu0 %v1936, 4
      %v1977 = vpop.permute.xlu0 %1976
      %1978 = vrot.lane.b32.xlu0 %v1937, 4
      %v1979 = vpop.permute.xlu0 %1978
      %1980 = vrot.lane.b32.xlu0 %v1938, 4
      %v1981 = vpop.permute.xlu0 %1980
      %1982 = vrot.lane.b32.xlu0 %v1939, 4
      %v1983 = vpop.permute.xlu0 %1982
      %1984 = vrot.lane.b32.xlu0 %v1940, 4
      %v1985 = vpop.permute.xlu0 %1984
      %1986 = vrot.lane.b32.xlu0 %v1941, 4
      %v1987 = vpop.permute.xlu0 %1986
      %1988 = vrot.lane.b32.xlu0 %v1942, 4
      %v1989 = vpop.permute.xlu0 %1988
      %1990 = vrot.lane.b32.xlu0 %v1943, 4
      %v1991 = vpop.permute.xlu0 %1990
      %2008 = vst.msk [vmem:[#allocation5] sm:$0xff] %vm546, %v1961
      %2009 = vst.msk [vmem:[#allocation5 + $0x8] sm:$0xff] %vm546, %v1963
      %2010 = vst.msk [vmem:[#allocation5 + $0x10] sm:$0xff] %vm546, %v1965
      %2011 = vst.msk [vmem:[#allocation5 + $0x18] sm:$0xff] %vm546, %v1967
      %2012 = vst.msk [vmem:[#allocation5 + $0x20] sm:$0xff] %vm546, %v1969
      %2013 = vst.msk [vmem:[#allocation5 + $0x28] sm:$0xff] %vm546, %v1971
      %2014 = vst.msk [vmem:[#allocation5 + $0x30] sm:$0xff] %vm546, %v1973
      %2015 = vst.msk [vmem:[#allocation5 + $0x38] sm:$0xff] %vm546, %v1975
      %2016 = vst.msk [vmem:[#allocation5 + $0x40] sm:$0xff] %vm546, %v1977
      %2017 = vst.msk [vmem:[#allocation5 + $0x48] sm:$0xff] %vm546, %v1979
      %2018 = vst.msk [vmem:[#allocation5 + $0x50] sm:$0xff] %vm546, %v1981
      %2019 = vst.msk [vmem:[#allocation5 + $0x58] sm:$0xff] %vm546, %v1983
      %2020 = vst.msk [vmem:[#allocation5 + $0x60] sm:$0xff] %vm546, %v1985
      %2021 = vst.msk [vmem:[#allocation5 + $0x68] sm:$0xff] %vm546, %v1987
      %2022 = vst.msk [vmem:[#allocation5 + $0x70] sm:$0xff] %vm546, %v1989
      %2023 = vst.msk [vmem:[#allocation5 + $0x78] sm:$0xff] %vm546, %v1991
      %v2024 = vld [vmem:[#allocation3 + $0x2] sm:$0xff]
      %v2025 = vld [vmem:[#allocation3 + $0xa] sm:$0xff]
      %v2026 = vld [vmem:[#allocation3 + $0x1a] sm:$0xff]
      %v2027 = vld [vmem:[#allocation3 + $0x22] sm:$0xff]
      %v2028 = vld [vmem:[#allocation3 + $0x32] sm:$0xff]
      %v2029 = vld [vmem:[#allocation3 + $0x3a] sm:$0xff]
      %v2030 = vld [vmem:[#allocation3 + $0x4a] sm:$0xff]
      %v2031 = vld [vmem:[#allocation3 + $0x52] sm:$0xff]
      %v2032 = vld [vmem:[#allocation3 + $0x62] sm:$0xff]
      %v2033 = vld [vmem:[#allocation3 + $0x6a] sm:$0xff]
      %v2034 = vld [vmem:[#allocation3 + $0x7a] sm:$0xff]
      %v2035 = vld [vmem:[#allocation3 + $0x82] sm:$0xff]
      %v2036 = vld [vmem:[#allocation3 + $0x92] sm:$0xff]
      %v2037 = vld [vmem:[#allocation3 + $0x9a] sm:$0xff]
      %v2038 = vld [vmem:[#allocation3 + $0xaa] sm:$0xff]
      %v2039 = vld [vmem:[#allocation3 + $0xb2] sm:$0xff]
      %v2040 = vld [vmem:[#allocation3 + $0xc2] sm:$0xff]
      %v2041 = vld [vmem:[#allocation3 + $0xca] sm:$0xff]
      %v2042 = vld [vmem:[#allocation3 + $0xda] sm:$0xff]
      %v2043 = vld [vmem:[#allocation3 + $0xe2] sm:$0xff]
      %v2044 = vld [vmem:[#allocation3 + $0xf2] sm:$0xff]
      %v2045 = vld [vmem:[#allocation3 + $0xfa] sm:$0xff]
      %v2046 = vld [vmem:[#allocation3 + $0x10a] sm:$0xff]
      %v2047 = vld [vmem:[#allocation3 + $0x112] sm:$0xff]
      %v2048 = vld [vmem:[#allocation3 + $0x122] sm:$0xff]
      %v2049 = vld [vmem:[#allocation3 + $0x12a] sm:$0xff]
      %v2050 = vld [vmem:[#allocation3 + $0x13a] sm:$0xff]
      %v2051 = vld [vmem:[#allocation3 + $0x142] sm:$0xff]
      %v2052 = vld [vmem:[#allocation3 + $0x152] sm:$0xff]
      %v2053 = vld [vmem:[#allocation3 + $0x15a] sm:$0xff]
      %v2054 = vld [vmem:[#allocation3 + $0x16a] sm:$0xff]
      %v2055 = vld [vmem:[#allocation3 + $0x172] sm:$0xff]
      %v2056 = vpack.c.bf16 %v2025, %v2024
      %v2057 = vpack.c.bf16 %v2027, %v2026
      %v2058 = vpack.c.bf16 %v2029, %v2028
      %v2059 = vpack.c.bf16 %v2031, %v2030
      %v2060 = vpack.c.bf16 %v2033, %v2032
      %v2061 = vpack.c.bf16 %v2035, %v2034
      %v2062 = vpack.c.bf16 %v2037, %v2036
      %v2063 = vpack.c.bf16 %v2039, %v2038
      %v2064 = vpack.c.bf16 %v2041, %v2040
      %v2065 = vpack.c.bf16 %v2043, %v2042
      %v2066 = vpack.c.bf16 %v2045, %v2044
      %v2067 = vpack.c.bf16 %v2047, %v2046
      %v2068 = vpack.c.bf16 %v2049, %v2048
      %v2069 = vpack.c.bf16 %v2051, %v2050
      %v2070 = vpack.c.bf16 %v2053, %v2052
      %v2071 = vpack.c.bf16 %v2055, %v2054
      %2088 = vrot.lane.b32.xlu0 %v2056, 8
      %v2089 = vpop.permute.xlu0 %2088
      %2090 = vrot.lane.b32.xlu0 %v2057, 8
      %v2091 = vpop.permute.xlu0 %2090
      %2092 = vrot.lane.b32.xlu0 %v2058, 8
      %v2093 = vpop.permute.xlu0 %2092
      %2094 = vrot.lane.b32.xlu0 %v2059, 8
      %v2095 = vpop.permute.xlu0 %2094
      %2096 = vrot.lane.b32.xlu0 %v2060, 8
      %v2097 = vpop.permute.xlu0 %2096
      %2098 = vrot.lane.b32.xlu0 %v2061, 8
      %v2099 = vpop.permute.xlu0 %2098
      %2100 = vrot.lane.b32.xlu0 %v2062, 8
      %v2101 = vpop.permute.xlu0 %2100
      %2102 = vrot.lane.b32.xlu0 %v2063, 8
      %v2103 = vpop.permute.xlu0 %2102
      %2104 = vrot.lane.b32.xlu0 %v2064, 8
      %v2105 = vpop.permute.xlu0 %2104
      %2106 = vrot.lane.b32.xlu0 %v2065, 8
      %v2107 = vpop.permute.xlu0 %2106
      %2108 = vrot.lane.b32.xlu0 %v2066, 8
      %v2109 = vpop.permute.xlu0 %2108
      %2110 = vrot.lane.b32.xlu0 %v2067, 8
      %v2111 = vpop.permute.xlu0 %2110
      %2112 = vrot.lane.b32.xlu0 %v2068, 8
      %v2113 = vpop.permute.xlu0 %2112
      %2114 = vrot.lane.b32.xlu0 %v2069, 8
      %v2115 = vpop.permute.xlu0 %2114
      %2116 = vrot.lane.b32.xlu0 %v2070, 8
      %v2117 = vpop.permute.xlu0 %2116
      %2118 = vrot.lane.b32.xlu0 %v2071, 8
      %v2119 = vpop.permute.xlu0 %2118
      %2136 = vst.msk [vmem:[#allocation5] sm:$0xff] %vm675, %v2089
      %2137 = vst.msk [vmem:[#allocation5 + $0x8] sm:$0xff] %vm675, %v2091
      %2138 = vst.msk [vmem:[#allocation5 + $0x10] sm:$0xff] %vm675, %v2093
      %2139 = vst.msk [vmem:[#allocation5 + $0x18] sm:$0xff] %vm675, %v2095
      %2140 = vst.msk [vmem:[#allocation5 + $0x20] sm:$0xff] %vm675, %v2097
      %2141 = vst.msk [vmem:[#allocation5 + $0x28] sm:$0xff] %vm675, %v2099
      %2142 = vst.msk [vmem:[#allocation5 + $0x30] sm:$0xff] %vm675, %v2101
      %2143 = vst.msk [vmem:[#allocation5 + $0x38] sm:$0xff] %vm675, %v2103
      %2144 = vst.msk [vmem:[#allocation5 + $0x40] sm:$0xff] %vm675, %v2105
      %2145 = vst.msk [vmem:[#allocation5 + $0x48] sm:$0xff] %vm675, %v2107
      %2146 = vst.msk [vmem:[#allocation5 + $0x50] sm:$0xff] %vm675, %v2109
      %2147 = vst.msk [vmem:[#allocation5 + $0x58] sm:$0xff] %vm675, %v2111
      %2148 = vst.msk [vmem:[#allocation5 + $0x60] sm:$0xff] %vm675, %v2113
      %2149 = vst.msk [vmem:[#allocation5 + $0x68] sm:$0xff] %vm675, %v2115
      %2150 = vst.msk [vmem:[#allocation5 + $0x70] sm:$0xff] %vm675, %v2117
      %2151 = vst.msk [vmem:[#allocation5 + $0x78] sm:$0xff] %vm675, %v2119
      %v2152 = vld [vmem:[%s1798] sm:$0xff]
      %v2153 = vld [vmem:[%s1798 + $0x8] sm:$0xff]
      %v2154 = vld [vmem:[%s1798 + $0x18] sm:$0xff]
      %v2155 = vld [vmem:[%s1798 + $0x20] sm:$0xff]
      %v2156 = vld [vmem:[%s1798 + $0x30] sm:$0xff]
      %v2157 = vld [vmem:[%s1798 + $0x38] sm:$0xff]
      %v2158 = vld [vmem:[%s1798 + $0x48] sm:$0xff]
      %v2159 = vld [vmem:[%s1798 + $0x50] sm:$0xff]
      %v2160 = vld [vmem:[%s1798 + $0x60] sm:$0xff]
      %v2161 = vld [vmem:[%s1798 + $0x68] sm:$0xff]
      %v2162 = vld [vmem:[%s1798 + $0x78] sm:$0xff]
      %v2163 = vld [vmem:[%s1798 + $0x80] sm:$0xff]
      %v2164 = vld [vmem:[%s1798 + $0x90] sm:$0xff]
      %v2165 = vld [vmem:[%s1798 + $0x98] sm:$0xff]
      %v2166 = vld [vmem:[%s1798 + $0xa8] sm:$0xff]
      %v2167 = vld [vmem:[%s1798 + $0xb0] sm:$0xff]
      %v2168 = vld [vmem:[%s1798 + $0xc0] sm:$0xff]
      %v2169 = vld [vmem:[%s1798 + $0xc8] sm:$0xff]
      %v2170 = vld [vmem:[%s1798 + $0xd8] sm:$0xff]
      %v2171 = vld [vmem:[%s1798 + $0xe0] sm:$0xff]
      %v2172 = vld [vmem:[%s1798 + $0xf0] sm:$0xff]
      %v2173 = vld [vmem:[%s1798 + $0xf8] sm:$0xff]
      %v2174 = vld [vmem:[%s1798 + $0x108] sm:$0xff]
      %v2175 = vld [vmem:[%s1798 + $0x110] sm:$0xff]
      %v2176 = vld [vmem:[%s1798 + $0x120] sm:$0xff]
      %v2177 = vld [vmem:[%s1798 + $0x128] sm:$0xff]
      %v2178 = vld [vmem:[%s1798 + $0x138] sm:$0xff]
      %v2179 = vld [vmem:[%s1798 + $0x140] sm:$0xff]
      %v2180 = vld [vmem:[%s1798 + $0x150] sm:$0xff]
      %v2181 = vld [vmem:[%s1798 + $0x158] sm:$0xff]
      %v2182 = vld [vmem:[%s1798 + $0x168] sm:$0xff]
      %v2183 = vld [vmem:[%s1798 + $0x170] sm:$0xff]
      %v2184 = vpack.c.bf16 %v2153, %v2152
      %v2185 = vpack.c.bf16 %v2155, %v2154
      %v2186 = vpack.c.bf16 %v2157, %v2156
      %v2187 = vpack.c.bf16 %v2159, %v2158
      %v2188 = vpack.c.bf16 %v2161, %v2160
      %v2189 = vpack.c.bf16 %v2163, %v2162
      %v2190 = vpack.c.bf16 %v2165, %v2164
      %v2191 = vpack.c.bf16 %v2167, %v2166
      %v2192 = vpack.c.bf16 %v2169, %v2168
      %v2193 = vpack.c.bf16 %v2171, %v2170
      %v2194 = vpack.c.bf16 %v2173, %v2172
      %v2195 = vpack.c.bf16 %v2175, %v2174
      %v2196 = vpack.c.bf16 %v2177, %v2176
      %v2197 = vpack.c.bf16 %v2179, %v2178
      %v2198 = vpack.c.bf16 %v2181, %v2180
      %v2199 = vpack.c.bf16 %v2183, %v2182
      %2216 = vrot.lane.b32.xlu0 %v2184, 12
      %v2217 = vpop.permute.xlu0 %2216
      %2218 = vrot.lane.b32.xlu0 %v2185, 12
      %v2219 = vpop.permute.xlu0 %2218
      %2220 = vrot.lane.b32.xlu0 %v2186, 12
      %v2221 = vpop.permute.xlu0 %2220
      %2222 = vrot.lane.b32.xlu0 %v2187, 12
      %v2223 = vpop.permute.xlu0 %2222
      %2224 = vrot.lane.b32.xlu0 %v2188, 12
      %v2225 = vpop.permute.xlu0 %2224
      %2226 = vrot.lane.b32.xlu0 %v2189, 12
      %v2227 = vpop.permute.xlu0 %2226
      %2228 = vrot.lane.b32.xlu0 %v2190, 12
      %v2229 = vpop.permute.xlu0 %2228
      %2230 = vrot.lane.b32.xlu0 %v2191, 12
      %v2231 = vpop.permute.xlu0 %2230
      %2232 = vrot.lane.b32.xlu0 %v2192, 12
      %v2233 = vpop.permute.xlu0 %2232
      %2234 = vrot.lane.b32.xlu0 %v2193, 12
      %v2235 = vpop.permute.xlu0 %2234
      %2236 = vrot.lane.b32.xlu0 %v2194, 12
      %v2237 = vpop.permute.xlu0 %2236
      %2238 = vrot.lane.b32.xlu0 %v2195, 12
      %v2239 = vpop.permute.xlu0 %2238
      %2240 = vrot.lane.b32.xlu0 %v2196, 12
      %v2241 = vpop.permute.xlu0 %2240
      %2242 = vrot.lane.b32.xlu0 %v2197, 12
      %v2243 = vpop.permute.xlu0 %2242
      %2244 = vrot.lane.b32.xlu0 %v2198, 12
      %v2245 = vpop.permute.xlu0 %2244
      %2246 = vrot.lane.b32.xlu0 %v2199, 12
      %v2247 = vpop.permute.xlu0 %2246
      %2264 = vst.msk [vmem:[#allocation5] sm:$0xff] %vm804, %v2217
      %2265 = vst.msk [vmem:[#allocation5 + $0x8] sm:$0xff] %vm804, %v2219
      %2266 = vst.msk [vmem:[#allocation5 + $0x10] sm:$0xff] %vm804, %v2221
      %2267 = vst.msk [vmem:[#allocation5 + $0x18] sm:$0xff] %vm804, %v2223
      %2268 = vst.msk [vmem:[#allocation5 + $0x20] sm:$0xff] %vm804, %v2225
      %2269 = vst.msk [vmem:[#allocation5 + $0x28] sm:$0xff] %vm804, %v2227
      %2270 = vst.msk [vmem:[#allocation5 + $0x30] sm:$0xff] %vm804, %v2229
      %2271 = vst.msk [vmem:[#allocation5 + $0x38] sm:$0xff] %vm804, %v2231
      %2272 = vst.msk [vmem:[#allocation5 + $0x40] sm:$0xff] %vm804, %v2233
      %2273 = vst.msk [vmem:[#allocation5 + $0x48] sm:$0xff] %vm804, %v2235
      %2274 = vst.msk [vmem:[#allocation5 + $0x50] sm:$0xff] %vm804, %v2237
      %2275 = vst.msk [vmem:[#allocation5 + $0x58] sm:$0xff] %vm804, %v2239
      %2276 = vst.msk [vmem:[#allocation5 + $0x60] sm:$0xff] %vm804, %v2241
      %2277 = vst.msk [vmem:[#allocation5 + $0x68] sm:$0xff] %vm804, %v2243
      %2278 = vst.msk [vmem:[#allocation5 + $0x70] sm:$0xff] %vm804, %v2245
      %2279 = vst.msk [vmem:[#allocation5 + $0x78] sm:$0xff] %vm804, %v2247
      %v2280 = vld [vmem:[%s1798 + $0x1] sm:$0xff]
      %v2281 = vld [vmem:[%s1798 + $0x9] sm:$0xff]
      %v2282 = vld [vmem:[%s1798 + $0x19] sm:$0xff]
      %v2283 = vld [vmem:[%s1798 + $0x21] sm:$0xff]
      %v2284 = vld [vmem:[%s1798 + $0x31] sm:$0xff]
      %v2285 = vld [vmem:[%s1798 + $0x39] sm:$0xff]
      %v2286 = vld [vmem:[%s1798 + $0x49] sm:$0xff]
      %v2287 = vld [vmem:[%s1798 + $0x51] sm:$0xff]
      %v2288 = vld [vmem:[%s1798 + $0x61] sm:$0xff]
      %v2289 = vld [vmem:[%s1798 + $0x69] sm:$0xff]
      %v2290 = vld [vmem:[%s1798 + $0x79] sm:$0xff]
      %v2291 = vld [vmem:[%s1798 + $0x81] sm:$0xff]
      %v2292 = vld [vmem:[%s1798 + $0x91] sm:$0xff]
      %v2293 = vld [vmem:[%s1798 + $0x99] sm:$0xff]
      %v2294 = vld [vmem:[%s1798 + $0xa9] sm:$0xff]
      %v2295 = vld [vmem:[%s1798 + $0xb1] sm:$0xff]
      %v2296 = vld [vmem:[%s1798 + $0xc1] sm:$0xff]
      %v2297 = vld [vmem:[%s1798 + $0xc9] sm:$0xff]
      %v2298 = vld [vmem:[%s1798 + $0xd9] sm:$0xff]
      %v2299 = vld [vmem:[%s1798 + $0xe1] sm:$0xff]
      %v2300 = vld [vmem:[%s1798 + $0xf1] sm:$0xff]
      %v2301 = vld [vmem:[%s1798 + $0xf9] sm:$0xff]
      %v2302 = vld [vmem:[%s1798 + $0x109] sm:$0xff]
      %v2303 = vld [vmem:[%s1798 + $0x111] sm:$0xff]
      %v2304 = vld [vmem:[%s1798 + $0x121] sm:$0xff]
      %v2305 = vld [vmem:[%s1798 + $0x129] sm:$0xff]
      %v2306 = vld [vmem:[%s1798 + $0x139] sm:$0xff]
      %v2307 = vld [vmem:[%s1798 + $0x141] sm:$0xff]
      %v2308 = vld [vmem:[%s1798 + $0x151] sm:$0xff]
      %v2309 = vld [vmem:[%s1798 + $0x159] sm:$0xff]
      %v2310 = vld [vmem:[%s1798 + $0x169] sm:$0xff]
      %v2311 = vld [vmem:[%s1798 + $0x171] sm:$0xff]
      %v2312 = vpack.c.bf16 %v2281, %v2280
      %v2313 = vpack.c.bf16 %v2283, %v2282
      %v2314 = vpack.c.bf16 %v2285, %v2284
      %v2315 = vpack.c.bf16 %v2287, %v2286
      %v2316 = vpack.c.bf16 %v2289, %v2288
      %v2317 = vpack.c.bf16 %v2291, %v2290
      %v2318 = vpack.c.bf16 %v2293, %v2292
      %v2319 = vpack.c.bf16 %v2295, %v2294
      %v2320 = vpack.c.bf16 %v2297, %v2296
      %v2321 = vpack.c.bf16 %v2299, %v2298
      %v2322 = vpack.c.bf16 %v2301, %v2300
      %v2323 = vpack.c.bf16 %v2303, %v2302
      %v2324 = vpack.c.bf16 %v2305, %v2304
      %v2325 = vpack.c.bf16 %v2307, %v2306
      %v2326 = vpack.c.bf16 %v2309, %v2308
      %v2327 = vpack.c.bf16 %v2311, %v2310
      %2344 = vrot.lane.b32.xlu0 %v2312, 16
      %v2345 = vpop.permute.xlu0 %2344
      %2346 = vrot.lane.b32.xlu0 %v2313, 16
      %v2347 = vpop.permute.xlu0 %2346
      %2348 = vrot.lane.b32.xlu0 %v2314, 16
      %v2349 = vpop.permute.xlu0 %2348
      %2350 = vrot.lane.b32.xlu0 %v2315, 16
      %v2351 = vpop.permute.xlu0 %2350
      %2352 = vrot.lane.b32.xlu0 %v2316, 16
      %v2353 = vpop.permute.xlu0 %2352
      %2354 = vrot.lane.b32.xlu0 %v2317, 16
      %v2355 = vpop.permute.xlu0 %2354
      %2356 = vrot.lane.b32.xlu0 %v2318, 16
      %v2357 = vpop.permute.xlu0 %2356
      %2358 = vrot.lane.b32.xlu0 %v2319, 16
      %v2359 = vpop.permute.xlu0 %2358
      %2360 = vrot.lane.b32.xlu0 %v2320, 16
      %v2361 = vpop.permute.xlu0 %2360
      %2362 = vrot.lane.b32.xlu0 %v2321, 16
      %v2363 = vpop.permute.xlu0 %2362
      %2364 = vrot.lane.b32.xlu0 %v2322, 16
      %v2365 = vpop.permute.xlu0 %2364
      %2366 = vrot.lane.b32.xlu0 %v2323, 16
      %v2367 = vpop.permute.xlu0 %2366
      %2368 = vrot.lane.b32.xlu0 %v2324, 16
      %v2369 = vpop.permute.xlu0 %2368
      %2370 = vrot.lane.b32.xlu0 %v2325, 16
      %v2371 = vpop.permute.xlu0 %2370
      %2372 = vrot.lane.b32.xlu0 %v2326, 16
      %v2373 = vpop.permute.xlu0 %2372
      %2374 = vrot.lane.b32.xlu0 %v2327, 16
      %v2375 = vpop.permute.xlu0 %2374
      %2392 = vst.msk [vmem:[#allocation5] sm:$0xff] %vm933, %v2345
      %2393 = vst.msk [vmem:[#allocation5 + $0x8] sm:$0xff] %vm933, %v2347
      %2394 = vst.msk [vmem:[#allocation5 + $0x10] sm:$0xff] %vm933, %v2349
      %2395 = vst.msk [vmem:[#allocation5 + $0x18] sm:$0xff] %vm933, %v2351
      %2396 = vst.msk [vmem:[#allocation5 + $0x20] sm:$0xff] %vm933, %v2353
      %2397 = vst.msk [vmem:[#allocation5 + $0x28] sm:$0xff] %vm933, %v2355
      %2398 = vst.msk [vmem:[#allocation5 + $0x30] sm:$0xff] %vm933, %v2357
      %2399 = vst.msk [vmem:[#allocation5 + $0x38] sm:$0xff] %vm933, %v2359
      %2400 = vst.msk [vmem:[#allocation5 + $0x40] sm:$0xff] %vm933, %v2361
      %2401 = vst.msk [vmem:[#allocation5 + $0x48] sm:$0xff] %vm933, %v2363
      %2402 = vst.msk [vmem:[#allocation5 + $0x50] sm:$0xff] %vm933, %v2365
      %2403 = vst.msk [vmem:[#allocation5 + $0x58] sm:$0xff] %vm933, %v2367
      %2404 = vst.msk [vmem:[#allocation5 + $0x60] sm:$0xff] %vm933, %v2369
      %2405 = vst.msk [vmem:[#allocation5 + $0x68] sm:$0xff] %vm933, %v2371
      %2406 = vst.msk [vmem:[#allocation5 + $0x70] sm:$0xff] %vm933, %v2373
      %2407 = vst.msk [vmem:[#allocation5 + $0x78] sm:$0xff] %vm933, %v2375
      %v2408 = vld [vmem:[%s1798 + $0x2] sm:$0xff]
      %v2409 = vld [vmem:[%s1798 + $0xa] sm:$0xff]
      %v2410 = vld [vmem:[%s1798 + $0x1a] sm:$0xff]
      %v2411 = vld [vmem:[%s1798 + $0x22] sm:$0xff]
      %v2412 = vld [vmem:[%s1798 + $0x32] sm:$0xff]
      %v2413 = vld [vmem:[%s1798 + $0x3a] sm:$0xff]
      %v2414 = vld [vmem:[%s1798 + $0x4a] sm:$0xff]
      %v2415 = vld [vmem:[%s1798 + $0x52] sm:$0xff]
      %v2416 = vld [vmem:[%s1798 + $0x62] sm:$0xff]
      %v2417 = vld [vmem:[%s1798 + $0x6a] sm:$0xff]
      %v2418 = vld [vmem:[%s1798 + $0x7a] sm:$0xff]
      %v2419 = vld [vmem:[%s1798 + $0x82] sm:$0xff]
      %v2420 = vld [vmem:[%s1798 + $0x92] sm:$0xff]
      %v2421 = vld [vmem:[%s1798 + $0x9a] sm:$0xff]
      %v2422 = vld [vmem:[%s1798 + $0xaa] sm:$0xff]
      %v2423 = vld [vmem:[%s1798 + $0xb2] sm:$0xff]
      %v2424 = vld [vmem:[%s1798 + $0xc2] sm:$0xff]
      %v2425 = vld [vmem:[%s1798 + $0xca] sm:$0xff]
      %v2426 = vld [vmem:[%s1798 + $0xda] sm:$0xff]
      %v2427 = vld [vmem:[%s1798 + $0xe2] sm:$0xff]
      %v2428 = vld [vmem:[%s1798 + $0xf2] sm:$0xff]
      %v2429 = vld [vmem:[%s1798 + $0xfa] sm:$0xff]
      %v2430 = vld [vmem:[%s1798 + $0x10a] sm:$0xff]
      %v2431 = vld [vmem:[%s1798 + $0x112] sm:$0xff]
      %v2432 = vld [vmem:[%s1798 + $0x122] sm:$0xff]
      %v2433 = vld [vmem:[%s1798 + $0x12a] sm:$0xff]
      %v2434 = vld [vmem:[%s1798 + $0x13a] sm:$0xff]
      %v2435 = vld [vmem:[%s1798 + $0x142] sm:$0xff]
      %v2436 = vld [vmem:[%s1798 + $0x152] sm:$0xff]
      %v2437 = vld [vmem:[%s1798 + $0x15a] sm:$0xff]
      %v2438 = vld [vmem:[%s1798 + $0x16a] sm:$0xff]
      %v2439 = vld [vmem:[%s1798 + $0x172] sm:$0xff]
      %v2440 = vpack.c.bf16 %v2409, %v2408
      %v2441 = vpack.c.bf16 %v2411, %v2410
      %v2442 = vpack.c.bf16 %v2413, %v2412
      %v2443 = vpack.c.bf16 %v2415, %v2414
      %v2444 = vpack.c.bf16 %v2417, %v2416
      %v2445 = vpack.c.bf16 %v2419, %v2418
      %v2446 = vpack.c.bf16 %v2421, %v2420
      %v2447 = vpack.c.bf16 %v2423, %v2422
      %v2448 = vpack.c.bf16 %v2425, %v2424
      %v2449 = vpack.c.bf16 %v2427, %v2426
      %v2450 = vpack.c.bf16 %v2429, %v2428
      %v2451 = vpack.c.bf16 %v2431, %v2430
      %v2452 = vpack.c.bf16 %v2433, %v2432
      %v2453 = vpack.c.bf16 %v2435, %v2434
      %v2454 = vpack.c.bf16 %v2437, %v2436
      %v2455 = vpack.c.bf16 %v2439, %v2438
      %2472 = vrot.lane.b32.xlu0 %v2440, 20
      %v2473 = vpop.permute.xlu0 %2472
      %2474 = vrot.lane.b32.xlu0 %v2441, 20
      %v2475 = vpop.permute.xlu0 %2474
      %2476 = vrot.lane.b32.xlu0 %v2442, 20
      %v2477 = vpop.permute.xlu0 %2476
      %2478 = vrot.lane.b32.xlu0 %v2443, 20
      %v2479 = vpop.permute.xlu0 %2478
      %2480 = vrot.lane.b32.xlu0 %v2444, 20
      %v2481 = vpop.permute.xlu0 %2480
      %2482 = vrot.lane.b32.xlu0 %v2445, 20
      %v2483 = vpop.permute.xlu0 %2482
      %2484 = vrot.lane.b32.xlu0 %v2446, 20
      %v2485 = vpop.permute.xlu0 %2484
      %2486 = vrot.lane.b32.xlu0 %v2447, 20
      %v2487 = vpop.permute.xlu0 %2486
      %2488 = vrot.lane.b32.xlu0 %v2448, 20
      %v2489 = vpop.permute.xlu0 %2488
      %2490 = vrot.lane.b32.xlu0 %v2449, 20
      %v2491 = vpop.permute.xlu0 %2490
      %2492 = vrot.lane.b32.xlu0 %v2450, 20
      %v2493 = vpop.permute.xlu0 %2492
      %2494 = vrot.lane.b32.xlu0 %v2451, 20
      %v2495 = vpop.permute.xlu0 %2494
      %2496 = vrot.lane.b32.xlu0 %v2452, 20
      %v2497 = vpop.permute.xlu0 %2496
      %2498 = vrot.lane.b32.xlu0 %v2453, 20
      %v2499 = vpop.permute.xlu0 %2498
      %2500 = vrot.lane.b32.xlu0 %v2454, 20
      %v2501 = vpop.permute.xlu0 %2500
      %2502 = vrot.lane.b32.xlu0 %v2455, 20
      %v2503 = vpop.permute.xlu0 %2502
      %2520 = vst.msk [vmem:[#allocation5] sm:$0xff] %vm1062, %v2473
      %2521 = vst.msk [vmem:[#allocation5 + $0x8] sm:$0xff] %vm1062, %v2475
      %2522 = vst.msk [vmem:[#allocation5 + $0x10] sm:$0xff] %vm1062, %v2477
      %2523 = vst.msk [vmem:[#allocation5 + $0x18] sm:$0xff] %vm1062, %v2479
      %2524 = vst.msk [vmem:[#allocation5 + $0x20] sm:$0xff] %vm1062, %v2481
      %2525 = vst.msk [vmem:[#allocation5 + $0x28] sm:$0xff] %vm1062, %v2483
      %2526 = vst.msk [vmem:[#allocation5 + $0x30] sm:$0xff] %vm1062, %v2485
      %2527 = vst.msk [vmem:[#allocation5 + $0x38] sm:$0xff] %vm1062, %v2487
      %2528 = vst.msk [vmem:[#allocation5 + $0x40] sm:$0xff] %vm1062, %v2489
      %2529 = vst.msk [vmem:[#allocation5 + $0x48] sm:$0xff] %vm1062, %v2491
      %2530 = vst.msk [vmem:[#allocation5 + $0x50] sm:$0xff] %vm1062, %v2493
      %2531 = vst.msk [vmem:[#allocation5 + $0x58] sm:$0xff] %vm1062, %v2495
      %2532 = vst.msk [vmem:[#allocation5 + $0x60] sm:$0xff] %vm1062, %v2497
      %2533 = vst.msk [vmem:[#allocation5 + $0x68] sm:$0xff] %vm1062, %v2499
      %2534 = vst.msk [vmem:[#allocation5 + $0x70] sm:$0xff] %vm1062, %v2501
      %2535 = vst.msk [vmem:[#allocation5 + $0x78] sm:$0xff] %vm1062, %v2503
      %s2536 = scalar_lea.vmem [#allocation3], 48
      %v2537 = vld [vmem:[%s2536] sm:$0xff]
      %v2538 = vld [vmem:[%s2536 + $0x8] sm:$0xff]
      %v2539 = vld [vmem:[%s2536 + $0x18] sm:$0xff]
      %v2540 = vld [vmem:[%s2536 + $0x20] sm:$0xff]
      %v2541 = vld [vmem:[%s2536 + $0x30] sm:$0xff]
      %v2542 = vld [vmem:[%s2536 + $0x38] sm:$0xff]
      %v2543 = vld [vmem:[%s2536 + $0x48] sm:$0xff]
      %v2544 = vld [vmem:[%s2536 + $0x50] sm:$0xff]
      %v2545 = vld [vmem:[%s2536 + $0x60] sm:$0xff]
      %v2546 = vld [vmem:[%s2536 + $0x68] sm:$0xff]
      %v2547 = vld [vmem:[%s2536 + $0x78] sm:$0xff]
      %v2548 = vld [vmem:[%s2536 + $0x80] sm:$0xff]
      %v2549 = vld [vmem:[%s2536 + $0x90] sm:$0xff]
      %v2550 = vld [vmem:[%s2536 + $0x98] sm:$0xff]
      %v2551 = vld [vmem:[%s2536 + $0xa8] sm:$0xff]
      %v2552 = vld [vmem:[%s2536 + $0xb0] sm:$0xff]
      %v2553 = vld [vmem:[%s2536 + $0xc0] sm:$0xff]
      %v2554 = vld [vmem:[%s2536 + $0xc8] sm:$0xff]
      %v2555 = vld [vmem:[%s2536 + $0xd8] sm:$0xff]
      %v2556 = vld [vmem:[%s2536 + $0xe0] sm:$0xff]
      %v2557 = vld [vmem:[%s2536 + $0xf0] sm:$0xff]
      %v2558 = vld [vmem:[%s2536 + $0xf8] sm:$0xff]
      %v2559 = vld [vmem:[%s2536 + $0x108] sm:$0xff]
      %v2560 = vld [vmem:[%s2536 + $0x110] sm:$0xff]
      %v2561 = vld [vmem:[%s2536 + $0x120] sm:$0xff]
      %v2562 = vld [vmem:[%s2536 + $0x128] sm:$0xff]
      %v2563 = vld [vmem:[%s2536 + $0x138] sm:$0xff]
      %v2564 = vld [vmem:[%s2536 + $0x140] sm:$0xff]
      %v2565 = vld [vmem:[%s2536 + $0x150] sm:$0xff]
      %v2566 = vld [vmem:[%s2536 + $0x158] sm:$0xff]
      %v2567 = vld [vmem:[%s2536 + $0x168] sm:$0xff]
      %v2568 = vld [vmem:[%s2536 + $0x170] sm:$0xff]
      %v2569 = vpack.c.bf16 %v2538, %v2537
      %v2570 = vpack.c.bf16 %v2540, %v2539
      %v2571 = vpack.c.bf16 %v2542, %v2541
      %v2572 = vpack.c.bf16 %v2544, %v2543
      %v2573 = vpack.c.bf16 %v2546, %v2545
      %v2574 = vpack.c.bf16 %v2548, %v2547
      %v2575 = vpack.c.bf16 %v2550, %v2549
      %v2576 = vpack.c.bf16 %v2552, %v2551
      %v2577 = vpack.c.bf16 %v2554, %v2553
      %v2578 = vpack.c.bf16 %v2556, %v2555
      %v2579 = vpack.c.bf16 %v2558, %v2557
      %v2580 = vpack.c.bf16 %v2560, %v2559
      %v2581 = vpack.c.bf16 %v2562, %v2561
      %v2582 = vpack.c.bf16 %v2564, %v2563
      %v2583 = vpack.c.bf16 %v2566, %v2565
      %v2584 = vpack.c.bf16 %v2568, %v2567
      %2601 = vrot.lane.b32.xlu0 %v2569, 24
      %v2602 = vpop.permute.xlu0 %2601
      %2603 = vrot.lane.b32.xlu0 %v2570, 24
      %v2604 = vpop.permute.xlu0 %2603
      %2605 = vrot.lane.b32.xlu0 %v2571, 24
      %v2606 = vpop.permute.xlu0 %2605
      %2607 = vrot.lane.b32.xlu0 %v2572, 24
      %v2608 = vpop.permute.xlu0 %2607
      %2609 = vrot.lane.b32.xlu0 %v2573, 24
      %v2610 = vpop.permute.xlu0 %2609
      %2611 = vrot.lane.b32.xlu0 %v2574, 24
      %v2612 = vpop.permute.xlu0 %2611
      %2613 = vrot.lane.b32.xlu0 %v2575, 24
      %v2614 = vpop.permute.xlu0 %2613
      %2615 = vrot.lane.b32.xlu0 %v2576, 24
      %v2616 = vpop.permute.xlu0 %2615
      %2617 = vrot.lane.b32.xlu0 %v2577, 24
      %v2618 = vpop.permute.xlu0 %2617
      %2619 = vrot.lane.b32.xlu0 %v2578, 24
      %v2620 = vpop.permute.xlu0 %2619
      %2621 = vrot.lane.b32.xlu0 %v2579, 24
      %v2622 = vpop.permute.xlu0 %2621
      %2623 = vrot.lane.b32.xlu0 %v2580, 24
      %v2624 = vpop.permute.xlu0 %2623
      %2625 = vrot.lane.b32.xlu0 %v2581, 24
      %v2626 = vpop.permute.xlu0 %2625
      %2627 = vrot.lane.b32.xlu0 %v2582, 24
      %v2628 = vpop.permute.xlu0 %2627
      %2629 = vrot.lane.b32.xlu0 %v2583, 24
      %v2630 = vpop.permute.xlu0 %2629
      %2631 = vrot.lane.b32.xlu0 %v2584, 24
      %v2632 = vpop.permute.xlu0 %2631
      %2649 = vst.msk [vmem:[#allocation5] sm:$0xff] %vm1192, %v2602
      %2650 = vst.msk [vmem:[#allocation5 + $0x8] sm:$0xff] %vm1192, %v2604
      %2651 = vst.msk [vmem:[#allocation5 + $0x10] sm:$0xff] %vm1192, %v2606
      %2652 = vst.msk [vmem:[#allocation5 + $0x18] sm:$0xff] %vm1192, %v2608
      %2653 = vst.msk [vmem:[#allocation5 + $0x20] sm:$0xff] %vm1192, %v2610
      %2654 = vst.msk [vmem:[#allocation5 + $0x28] sm:$0xff] %vm1192, %v2612
      %2655 = vst.msk [vmem:[#allocation5 + $0x30] sm:$0xff] %vm1192, %v2614
      %2656 = vst.msk [vmem:[#allocation5 + $0x38] sm:$0xff] %vm1192, %v2616
      %2657 = vst.msk [vmem:[#allocation5 + $0x40] sm:$0xff] %vm1192, %v2618
      %2658 = vst.msk [vmem:[#allocation5 + $0x48] sm:$0xff] %vm1192, %v2620
      %2659 = vst.msk [vmem:[#allocation5 + $0x50] sm:$0xff] %vm1192, %v2622
      %2660 = vst.msk [vmem:[#allocation5 + $0x58] sm:$0xff] %vm1192, %v2624
      %2661 = vst.msk [vmem:[#allocation5 + $0x60] sm:$0xff] %vm1192, %v2626
      %2662 = vst.msk [vmem:[#allocation5 + $0x68] sm:$0xff] %vm1192, %v2628
      %2663 = vst.msk [vmem:[#allocation5 + $0x70] sm:$0xff] %vm1192, %v2630
      %2664 = vst.msk [vmem:[#allocation5 + $0x78] sm:$0xff] %vm1192, %v2632
      %v2665 = vld [vmem:[%s2536 + $0x1] sm:$0xff]
      %v2666 = vld [vmem:[%s2536 + $0x9] sm:$0xff]
      %v2667 = vld [vmem:[%s2536 + $0x19] sm:$0xff]
      %v2668 = vld [vmem:[%s2536 + $0x21] sm:$0xff]
      %v2669 = vld [vmem:[%s2536 + $0x31] sm:$0xff]
      %v2670 = vld [vmem:[%s2536 + $0x39] sm:$0xff]
      %v2671 = vld [vmem:[%s2536 + $0x49] sm:$0xff]
      %v2672 = vld [vmem:[%s2536 + $0x51] sm:$0xff]
      %v2673 = vld [vmem:[%s2536 + $0x61] sm:$0xff]
      %v2674 = vld [vmem:[%s2536 + $0x69] sm:$0xff]
      %v2675 = vld [vmem:[%s2536 + $0x79] sm:$0xff]
      %v2676 = vld [vmem:[%s2536 + $0x81] sm:$0xff]
      %v2677 = vld [vmem:[%s2536 + $0x91] sm:$0xff]
      %v2678 = vld [vmem:[%s2536 + $0x99] sm:$0xff]
      %v2679 = vld [vmem:[%s2536 + $0xa9] sm:$0xff]
      %v2680 = vld [vmem:[%s2536 + $0xb1] sm:$0xff]
      %v2681 = vld [vmem:[%s2536 + $0xc1] sm:$0xff]
      %v2682 = vld [vmem:[%s2536 + $0xc9] sm:$0xff]
      %v2683 = vld [vmem:[%s2536 + $0xd9] sm:$0xff]
      %v2684 = vld [vmem:[%s2536 + $0xe1] sm:$0xff]
      %v2685 = vld [vmem:[%s2536 + $0xf1] sm:$0xff]
      %v2686 = vld [vmem:[%s2536 + $0xf9] sm:$0xff]
      %v2687 = vld [vmem:[%s2536 + $0x109] sm:$0xff]
      %v2688 = vld [vmem:[%s2536 + $0x111] sm:$0xff]
      %v2689 = vld [vmem:[%s2536 + $0x121] sm:$0xff]
      %v2690 = vld [vmem:[%s2536 + $0x129] sm:$0xff]
      %v2691 = vld [vmem:[%s2536 + $0x139] sm:$0xff]
      %v2692 = vld [vmem:[%s2536 + $0x141] sm:$0xff]
      %v2693 = vld [vmem:[%s2536 + $0x151] sm:$0xff]
      %v2694 = vld [vmem:[%s2536 + $0x159] sm:$0xff]
      %v2695 = vld [vmem:[%s2536 + $0x169] sm:$0xff]
      %v2696 = vld [vmem:[%s2536 + $0x171] sm:$0xff]
      %v2697 = vpack.c.bf16 %v2666, %v2665
      %v2698 = vpack.c.bf16 %v2668, %v2667
      %v2699 = vpack.c.bf16 %v2670, %v2669
      %v2700 = vpack.c.bf16 %v2672, %v2671
      %v2701 = vpack.c.bf16 %v2674, %v2673
      %v2702 = vpack.c.bf16 %v2676, %v2675
      %v2703 = vpack.c.bf16 %v2678, %v2677
      %v2704 = vpack.c.bf16 %v2680, %v2679
      %v2705 = vpack.c.bf16 %v2682, %v2681
      %v2706 = vpack.c.bf16 %v2684, %v2683
      %v2707 = vpack.c.bf16 %v2686, %v2685
      %v2708 = vpack.c.bf16 %v2688, %v2687
      %v2709 = vpack.c.bf16 %v2690, %v2689
      %v2710 = vpack.c.bf16 %v2692, %v2691
      %v2711 = vpack.c.bf16 %v2694, %v2693
      %v2712 = vpack.c.bf16 %v2696, %v2695
      %2729 = vrot.lane.b32.xlu0 %v2697, 28
      %v2730 = vpop.permute.xlu0 %2729
      %2731 = vrot.lane.b32.xlu0 %v2698, 28
      %v2732 = vpop.permute.xlu0 %2731
      %2733 = vrot.lane.b32.xlu0 %v2699, 28
      %v2734 = vpop.permute.xlu0 %2733
      %2735 = vrot.lane.b32.xlu0 %v2700, 28
      %v2736 = vpop.permute.xlu0 %2735
      %2737 = vrot.lane.b32.xlu0 %v2701, 28
      %v2738 = vpop.permute.xlu0 %2737
      %2739 = vrot.lane.b32.xlu0 %v2702, 28
      %v2740 = vpop.permute.xlu0 %2739
      %2741 = vrot.lane.b32.xlu0 %v2703, 28
      %v2742 = vpop.permute.xlu0 %2741
      %2743 = vrot.lane.b32.xlu0 %v2704, 28
      %v2744 = vpop.permute.xlu0 %2743
      %2745 = vrot.lane.b32.xlu0 %v2705, 28
      %v2746 = vpop.permute.xlu0 %2745
      %2747 = vrot.lane.b32.xlu0 %v2706, 28
      %v2748 = vpop.permute.xlu0 %2747
      %2749 = vrot.lane.b32.xlu0 %v2707, 28
      %v2750 = vpop.permute.xlu0 %2749
      %2751 = vrot.lane.b32.xlu0 %v2708, 28
      %v2752 = vpop.permute.xlu0 %2751
      %2753 = vrot.lane.b32.xlu0 %v2709, 28
      %v2754 = vpop.permute.xlu0 %2753
      %2755 = vrot.lane.b32.xlu0 %v2710, 28
      %v2756 = vpop.permute.xlu0 %2755
      %2757 = vrot.lane.b32.xlu0 %v2711, 28
      %v2758 = vpop.permute.xlu0 %2757
      %2759 = vrot.lane.b32.xlu0 %v2712, 28
      %v2760 = vpop.permute.xlu0 %2759
      %2777 = vst.msk [vmem:[#allocation5] sm:$0xff] %vm1321, %v2730
      %2778 = vst.msk [vmem:[#allocation5 + $0x8] sm:$0xff] %vm1321, %v2732
      %2779 = vst.msk [vmem:[#allocation5 + $0x10] sm:$0xff] %vm1321, %v2734
      %2780 = vst.msk [vmem:[#allocation5 + $0x18] sm:$0xff] %vm1321, %v2736
      %2781 = vst.msk [vmem:[#allocation5 + $0x20] sm:$0xff] %vm1321, %v2738
      %2782 = vst.msk [vmem:[#allocation5 + $0x28] sm:$0xff] %vm1321, %v2740
      %2783 = vst.msk [vmem:[#allocation5 + $0x30] sm:$0xff] %vm1321, %v2742
      %2784 = vst.msk [vmem:[#allocation5 + $0x38] sm:$0xff] %vm1321, %v2744
      %2785 = vst.msk [vmem:[#allocation5 + $0x40] sm:$0xff] %vm1321, %v2746
      %2786 = vst.msk [vmem:[#allocation5 + $0x48] sm:$0xff] %vm1321, %v2748
      %2787 = vst.msk [vmem:[#allocation5 + $0x50] sm:$0xff] %vm1321, %v2750
      %2788 = vst.msk [vmem:[#allocation5 + $0x58] sm:$0xff] %vm1321, %v2752
      %2789 = vst.msk [vmem:[#allocation5 + $0x60] sm:$0xff] %vm1321, %v2754
      %2790 = vst.msk [vmem:[#allocation5 + $0x68] sm:$0xff] %vm1321, %v2756
      %2791 = vst.msk [vmem:[#allocation5 + $0x70] sm:$0xff] %vm1321, %v2758
      %2792 = vst.msk [vmem:[#allocation5 + $0x78] sm:$0xff] %vm1321, %v2760
      %v2793 = vld [vmem:[%s2536 + $0x2] sm:$0xff]
      %v2794 = vld [vmem:[%s2536 + $0xa] sm:$0xff]
      %v2795 = vld [vmem:[%s2536 + $0x1a] sm:$0xff]
      %v2796 = vld [vmem:[%s2536 + $0x22] sm:$0xff]
      %v2797 = vld [vmem:[%s2536 + $0x32] sm:$0xff]
      %v2798 = vld [vmem:[%s2536 + $0x3a] sm:$0xff]
      %v2799 = vld [vmem:[%s2536 + $0x4a] sm:$0xff]
      %v2800 = vld [vmem:[%s2536 + $0x52] sm:$0xff]
      %v2801 = vld [vmem:[%s2536 + $0x62] sm:$0xff]
      %v2802 = vld [vmem:[%s2536 + $0x6a] sm:$0xff]
      %v2803 = vld [vmem:[%s2536 + $0x7a] sm:$0xff]
      %v2804 = vld [vmem:[%s2536 + $0x82] sm:$0xff]
      %v2805 = vld [vmem:[%s2536 + $0x92] sm:$0xff]
      %v2806 = vld [vmem:[%s2536 + $0x9a] sm:$0xff]
      %v2807 = vld [vmem:[%s2536 + $0xaa] sm:$0xff]
      %v2808 = vld [vmem:[%s2536 + $0xb2] sm:$0xff]
      %v2809 = vld [vmem:[%s2536 + $0xc2] sm:$0xff]
      %v2810 = vld [vmem:[%s2536 + $0xca] sm:$0xff]
      %v2811 = vld [vmem:[%s2536 + $0xda] sm:$0xff]
      %v2812 = vld [vmem:[%s2536 + $0xe2] sm:$0xff]
      %v2813 = vld [vmem:[%s2536 + $0xf2] sm:$0xff]
      %v2814 = vld [vmem:[%s2536 + $0xfa] sm:$0xff]
      %v2815 = vld [vmem:[%s2536 + $0x10a] sm:$0xff]
      %v2816 = vld [vmem:[%s2536 + $0x112] sm:$0xff]
      %v2817 = vld [vmem:[%s2536 + $0x122] sm:$0xff]
      %v2818 = vld [vmem:[%s2536 + $0x12a] sm:$0xff]
      %v2819 = vld [vmem:[%s2536 + $0x13a] sm:$0xff]
      %v2820 = vld [vmem:[%s2536 + $0x142] sm:$0xff]
      %v2821 = vld [vmem:[%s2536 + $0x152] sm:$0xff]
      %v2822 = vld [vmem:[%s2536 + $0x15a] sm:$0xff]
      %v2823 = vld [vmem:[%s2536 + $0x16a] sm:$0xff]
      %v2824 = vld [vmem:[%s2536 + $0x172] sm:$0xff]
      %v2825 = vpack.c.bf16 %v2794, %v2793
      %v2826 = vpack.c.bf16 %v2796, %v2795
      %v2827 = vpack.c.bf16 %v2798, %v2797
      %v2828 = vpack.c.bf16 %v2800, %v2799
      %v2829 = vpack.c.bf16 %v2802, %v2801
      %v2830 = vpack.c.bf16 %v2804, %v2803
      %v2831 = vpack.c.bf16 %v2806, %v2805
      %v2832 = vpack.c.bf16 %v2808, %v2807
      %v2833 = vpack.c.bf16 %v2810, %v2809
      %v2834 = vpack.c.bf16 %v2812, %v2811
      %v2835 = vpack.c.bf16 %v2814, %v2813
      %v2836 = vpack.c.bf16 %v2816, %v2815
      %v2837 = vpack.c.bf16 %v2818, %v2817
      %v2838 = vpack.c.bf16 %v2820, %v2819
      %v2839 = vpack.c.bf16 %v2822, %v2821
      %v2840 = vpack.c.bf16 %v2824, %v2823
      %2857 = vrot.lane.b32.xlu0 %v2825, 32
      %v2858 = vpop.permute.xlu0 %2857
      %2859 = vrot.lane.b32.xlu0 %v2826, 32
      %v2860 = vpop.permute.xlu0 %2859
      %2861 = vrot.lane.b32.xlu0 %v2827, 32
      %v2862 = vpop.permute.xlu0 %2861
      %2863 = vrot.lane.b32.xlu0 %v2828, 32
      %v2864 = vpop.permute.xlu0 %2863
      %2865 = vrot.lane.b32.xlu0 %v2829, 32
      %v2866 = vpop.permute.xlu0 %2865
      %2867 = vrot.lane.b32.xlu0 %v2830, 32
      %v2868 = vpop.permute.xlu0 %2867
      %2869 = vrot.lane.b32.xlu0 %v2831, 32
      %v2870 = vpop.permute.xlu0 %2869
      %2871 = vrot.lane.b32.xlu0 %v2832, 32
      %v2872 = vpop.permute.xlu0 %2871
      %2873 = vrot.lane.b32.xlu0 %v2833, 32
      %v2874 = vpop.permute.xlu0 %2873
      %2875 = vrot.lane.b32.xlu0 %v2834, 32
      %v2876 = vpop.permute.xlu0 %2875
      %2877 = vrot.lane.b32.xlu0 %v2835, 32
      %v2878 = vpop.permute.xlu0 %2877
      %2879 = vrot.lane.b32.xlu0 %v2836, 32
      %v2880 = vpop.permute.xlu0 %2879
      %2881 = vrot.lane.b32.xlu0 %v2837, 32
      %v2882 = vpop.permute.xlu0 %2881
      %2883 = vrot.lane.b32.xlu0 %v2838, 32
      %v2884 = vpop.permute.xlu0 %2883
      %2885 = vrot.lane.b32.xlu0 %v2839, 32
      %v2886 = vpop.permute.xlu0 %2885
      %2887 = vrot.lane.b32.xlu0 %v2840, 32
      %v2888 = vpop.permute.xlu0 %2887
      %2905 = vst.msk [vmem:[#allocation5] sm:$0xff] %vm1450, %v2858
      %2906 = vst.msk [vmem:[#allocation5 + $0x8] sm:$0xff] %vm1450, %v2860
      %2907 = vst.msk [vmem:[#allocation5 + $0x10] sm:$0xff] %vm1450, %v2862
      %2908 = vst.msk [vmem:[#allocation5 + $0x18] sm:$0xff] %vm1450, %v2864
      %2909 = vst.msk [vmem:[#allocation5 + $0x20] sm:$0xff] %vm1450, %v2866
      %2910 = vst.msk [vmem:[#allocation5 + $0x28] sm:$0xff] %vm1450, %v2868
      %2911 = vst.msk [vmem:[#allocation5 + $0x30] sm:$0xff] %vm1450, %v2870
      %2912 = vst.msk [vmem:[#allocation5 + $0x38] sm:$0xff] %vm1450, %v2872
      %2913 = vst.msk [vmem:[#allocation5 + $0x40] sm:$0xff] %vm1450, %v2874
      %2914 = vst.msk [vmem:[#allocation5 + $0x48] sm:$0xff] %vm1450, %v2876
      %2915 = vst.msk [vmem:[#allocation5 + $0x50] sm:$0xff] %vm1450, %v2878
      %2916 = vst.msk [vmem:[#allocation5 + $0x58] sm:$0xff] %vm1450, %v2880
      %2917 = vst.msk [vmem:[#allocation5 + $0x60] sm:$0xff] %vm1450, %v2882
      %2918 = vst.msk [vmem:[#allocation5 + $0x68] sm:$0xff] %vm1450, %v2884
      %2919 = vst.msk [vmem:[#allocation5 + $0x70] sm:$0xff] %vm1450, %v2886
      %2920 = vst.msk [vmem:[#allocation5 + $0x78] sm:$0xff] %vm1450, %v2888
      %v2921 = vld [vmem:[#allocation5] sm:$0xff]
      %v2922 = vld [vmem:[#allocation5 + $0x8] sm:$0xff]
      %v2923 = vld [vmem:[#allocation5 + $0x10] sm:$0xff]
      %v2924 = vld [vmem:[#allocation5 + $0x18] sm:$0xff]
      %v2925 = vld [vmem:[#allocation5 + $0x20] sm:$0xff]
      %v2926 = vld [vmem:[#allocation5 + $0x28] sm:$0xff]
      %v2927 = vld [vmem:[#allocation5 + $0x30] sm:$0xff]
      %v2928 = vld [vmem:[#allocation5 + $0x38] sm:$0xff]
      %v2929 = vld [vmem:[#allocation5 + $0x40] sm:$0xff]
      %v2930 = vld [vmem:[#allocation5 + $0x48] sm:$0xff]
      %v2931 = vld [vmem:[#allocation5 + $0x50] sm:$0xff]
      %v2932 = vld [vmem:[#allocation5 + $0x58] sm:$0xff]
      %v2933 = vld [vmem:[#allocation5 + $0x60] sm:$0xff]
      %v2934 = vld [vmem:[#allocation5 + $0x68] sm:$0xff]
      %v2935 = vld [vmem:[#allocation5 + $0x70] sm:$0xff]
      %v2936 = vld [vmem:[#allocation5 + $0x78] sm:$0xff]
      %v2937 = vld [vmem:[%s3] sm:$0xf]
      %v2938 = vld [vmem:[%s3 + $0x4] sm:$0xf]
      %v2939 = vld [vmem:[%s3 + $0x8] sm:$0xf]
      %v2940 = vld [vmem:[%s3 + $0xc] sm:$0xf]
      %v2941 = vld [vmem:[%s3 + $0x10] sm:$0x3]
      %v2943 = vlaneseq
      %v2944 = vshrl.u32 %v2943, 7
      %v2945 = vsub.s32 0, %v2944
      %v2946 = vrot.slane %v1831, %v2945
      %v2953 = vunpack.c.l.b16 %v2937
      %v2954 = vunpack.c.l.b16 %v2938
      %v2955 = vunpack.c.l.b16 %v2939
      %v2956 = vunpack.c.l.b16 %v2940
      %v2957 = vunpack.c.l.b16 %v2941
      %v2958 = vpack.c.b16 %v2954, %v2953
      %v2959 = vpack.c.b16 %v2956, %v2955
      %v2960 = vpack.c.b16 %v2957, %v2957
      %v2964 = vsel %vm1509, %v2921, 0
      %v2967 = vsel %vm1509, %v2922, 0
      %v2970 = vsel %vm1509, %v2923, 0
      %v2973 = vsel %vm1509, %v2924, 0
      %v2976 = vsel %vm1509, %v2925, 0
      %v2979 = vsel %vm1509, %v2926, 0
      %v2982 = vsel %vm1509, %v2927, 0
      %v2985 = vsel %vm1509, %v2928, 0
      %v2988 = vsel %vm1509, %v2929, 0
      %v2991 = vsel %vm1509, %v2930, 0
      %v2994 = vsel %vm1509, %v2931, 0
      %v2997 = vsel %vm1509, %v2932, 0
      %v3000 = vsel %vm1509, %v2933, 0
      %v3003 = vsel %vm1509, %v2934, 0
      %v3006 = vsel %vm1509, %v2935, 0
      %v3009 = vsel %vm1509, %v2936, 0
      %v3012 = vsel %vm1558, %v2960, 0
      %3014 = vmatprep.subr.bf16.mxu0 0
      %3015 = vmatpush1.bf16.msra.mxu0 %v2958
      %3016 = vmatprep.subr.bf16.mxu0 0
      %3017 = vmatpush1.bf16.msra.mxu0 %v2959
      %3018 = vmatprep.subr.bf16.mxu0 0
      %3019 = vmatpush1.bf16.msra.mxu0 %v3012
      %3020 = vmatprep.subr.bf16.mxu0 0
      %3021 = vmatpush1.bf16.msra.mxu0 0
      %3022 = vmatprep.subr.bf16.mxu0 0
      %3023 = vmatpush1.bf16.msra.mxu0 0
      %3024 = vmatprep.subr.bf16.mxu0 0
      %3025 = vmatpush1.bf16.msra.mxu0 0
      %3026 = vmatprep.subr.bf16.mxu0 0
      %3027 = vmatpush1.bf16.msra.mxu0 0
      %3028 = vmatprep.subr.bf16.mxu0 0
      %3029 = vmatpush1.bf16.msra.mxu0 0
      %3030 = vmatprep.subr.bf16.mxu0 0
      %3031 = vmatpush1.bf16.msra.mxu0 0
      %3032 = vmatprep.subr.bf16.mxu0 0
      %3033 = vmatpush1.bf16.msra.mxu0 0
      %3034 = vmatprep.subr.bf16.mxu0 0
      %3035 = vmatpush1.bf16.msra.mxu0 0
      %3036 = vmatprep.subr.bf16.mxu0 0
      %3037 = vmatpush1.bf16.msra.mxu0 0
      %3038 = vmatprep.subr.bf16.mxu0 0
      %3039 = vmatpush1.bf16.msra.mxu0 0
      %3040 = vmatprep.subr.bf16.mxu0 0
      %3041 = vmatpush1.bf16.msra.mxu0 0
      %3042 = vmatprep.subr.bf16.mxu0 0
      %3043 = vmatpush1.bf16.msra.mxu0 0
      %3044 = vmatprep.subr.bf16.mxu0 0
      %3045 = vmatpush1.bf16.msra.mxu0 0
      %3046 = vmatprep.mubr.bf16.mxu0 0
      %3047 = vmatmul.mubr.bf16.gmra.mrb[0].mxu0 %v2964
      %v3048 = vpop.f32.mrb[0].mxu0
      %v3049 = vadd.f32 %v2946, %v3048
      %v3050 = vpop.f32.mrb[0].mxu0
      %v3051 = vpop.f32.mrb[0].mxu0
      %v3052 = vadd.f32 %v2946, %v3051
      %v3053 = vpop.f32.mrb[0].mxu0
      %3054 = vmatprep.mubr.bf16.mxu0 0
      %3055 = vmatmul.mubr.bf16.gmra.mrb[0].mxu0 %v2967
      %v3056 = vpop.f32.mrb[0].mxu0
      %v3057 = vadd.f32 %v2946, %v3056
      %v3058 = vpop.f32.mrb[0].mxu0
      %v3059 = vpop.f32.mrb[0].mxu0
      %v3060 = vadd.f32 %v2946, %v3059
      %v3061 = vpop.f32.mrb[0].mxu0
      %3062 = vmatprep.mubr.bf16.mxu0 0
      %3063 = vmatmul.mubr.bf16.gmra.mrb[0].mxu0 %v2970
      %v3064 = vpop.f32.mrb[0].mxu0
      %v3065 = vadd.f32 %v2946, %v3064
      %v3066 = vpop.f32.mrb[0].mxu0
      %v3067 = vpop.f32.mrb[0].mxu0
      %v3068 = vadd.f32 %v2946, %v3067
      %v3069 = vpop.f32.mrb[0].mxu0
      %3070 = vmatprep.mubr.bf16.mxu0 0
      %3071 = vmatmul.mubr.bf16.gmra.mrb[0].mxu0 %v2973
      %v3072 = vpop.f32.mrb[0].mxu0
      %v3073 = vadd.f32 %v2946, %v3072
      %v3074 = vpop.f32.mrb[0].mxu0
      %v3075 = vpop.f32.mrb[0].mxu0
      %v3076 = vadd.f32 %v2946, %v3075
      %v3077 = vpop.f32.mrb[0].mxu0
      %3078 = vmatprep.mubr.bf16.mxu0 0
      %3079 = vmatmul.mubr.bf16.gmra.mrb[0].mxu0 %v2976
      %v3080 = vpop.f32.mrb[0].mxu0
      %v3081 = vadd.f32 %v2946, %v3080
      %v3082 = vpop.f32.mrb[0].mxu0
      %v3083 = vpop.f32.mrb[0].mxu0
      %v3084 = vadd.f32 %v2946, %v3083
      %v3085 = vpop.f32.mrb[0].mxu0
      %3086 = vmatprep.mubr.bf16.mxu0 0
      %3087 = vmatmul.mubr.bf16.gmra.mrb[0].mxu0 %v2979
      %v3088 = vpop.f32.mrb[0].mxu0
      %v3089 = vadd.f32 %v2946, %v3088
      %v3090 = vpop.f32.mrb[0].mxu0
      %v3091 = vpop.f32.mrb[0].mxu0
      %v3092 = vadd.f32 %v2946, %v3091
      %v3093 = vpop.f32.mrb[0].mxu0
      %3094 = vmatprep.mubr.bf16.mxu0 0
      %3095 = vmatmul.mubr.bf16.gmra.mrb[0].mxu0 %v2982
      %v3096 = vpop.f32.mrb[0].mxu0
      %v3097 = vadd.f32 %v2946, %v3096
      %v3098 = vpop.f32.mrb[0].mxu0
      %v3099 = vpop.f32.mrb[0].mxu0
      %v3100 = vadd.f32 %v2946, %v3099
      %v3101 = vpop.f32.mrb[0].mxu0
      %3102 = vmatprep.mubr.bf16.mxu0 0
      %3103 = vmatmul.mubr.bf16.gmra.mrb[0].mxu0 %v2985
      %v3104 = vpop.f32.mrb[0].mxu0
      %v3105 = vadd.f32 %v2946, %v3104
      %v3106 = vpop.f32.mrb[0].mxu0
      %v3107 = vpop.f32.mrb[0].mxu0
      %v3108 = vadd.f32 %v2946, %v3107
      %v3109 = vpop.f32.mrb[0].mxu0
      %3110 = vmatprep.mubr.bf16.mxu0 0
      %3111 = vmatmul.mubr.bf16.gmra.mrb[0].mxu0 %v2988
      %v3112 = vpop.f32.mrb[0].mxu0
      %v3113 = vadd.f32 %v2946, %v3112
      %v3114 = vpop.f32.mrb[0].mxu0
      %v3115 = vpop.f32.mrb[0].mxu0
      %v3116 = vadd.f32 %v2946, %v3115
      %v3117 = vpop.f32.mrb[0].mxu0
      %3118 = vmatprep.mubr.bf16.mxu0 0
      %3119 = vmatmul.mubr.bf16.gmra.mrb[0].mxu0 %v2991
      %v3120 = vpop.f32.mrb[0].mxu0
      %v3121 = vadd.f32 %v2946, %v3120
      %v3122 = vpop.f32.mrb[0].mxu0
      %v3123 = vpop.f32.mrb[0].mxu0
      %v3124 = vadd.f32 %v2946, %v3123
      %v3125 = vpop.f32.mrb[0].mxu0
      %3126 = vmatprep.mubr.bf16.mxu0 0
      %3127 = vmatmul.mubr.bf16.gmra.mrb[0].mxu0 %v2994
      %v3128 = vpop.f32.mrb[0].mxu0
      %v3129 = vadd.f32 %v2946, %v3128
      %v3130 = vpop.f32.mrb[0].mxu0
      %v3131 = vpop.f32.mrb[0].mxu0
      %v3132 = vadd.f32 %v2946, %v3131
      %v3133 = vpop.f32.mrb[0].mxu0
      %3134 = vmatprep.mubr.bf16.mxu0 0
      %3135 = vmatmul.mubr.bf16.gmra.mrb[0].mxu0 %v2997
      %v3136 = vpop.f32.mrb[0].mxu0
      %v3137 = vadd.f32 %v2946, %v3136
      %v3138 = vpop.f32.mrb[0].mxu0
      %v3139 = vpop.f32.mrb[0].mxu0
      %v3140 = vadd.f32 %v2946, %v3139
      %v3141 = vpop.f32.mrb[0].mxu0
      %3142 = vmatprep.mubr.bf16.mxu0 0
      %3143 = vmatmul.mubr.bf16.gmra.mrb[0].mxu0 %v3000
      %v3144 = vpop.f32.mrb[0].mxu0
      %v3145 = vadd.f32 %v2946, %v3144
      %v3146 = vpop.f32.mrb[0].mxu0
      %v3147 = vpop.f32.mrb[0].mxu0
      %v3148 = vadd.f32 %v2946, %v3147
      %v3149 = vpop.f32.mrb[0].mxu0
      %3150 = vmatprep.mubr.bf16.mxu0 0
      %3151 = vmatmul.mubr.bf16.gmra.mrb[0].mxu0 %v3003
      %v3152 = vpop.f32.mrb[0].mxu0
      %v3153 = vadd.f32 %v2946, %v3152
      %v3154 = vpop.f32.mrb[0].mxu0
      %v3155 = vpop.f32.mrb[0].mxu0
      %v3156 = vadd.f32 %v2946, %v3155
      %v3157 = vpop.f32.mrb[0].mxu0
      %3158 = vmatprep.mubr.bf16.mxu0 0
      %3159 = vmatmul.mubr.bf16.gmra.mrb[0].mxu0 %v3006
      %v3160 = vpop.f32.mrb[0].mxu0
      %v3161 = vadd.f32 %v2946, %v3160
      %v3162 = vpop.f32.mrb[0].mxu0
      %v3163 = vpop.f32.mrb[0].mxu0
      %v3164 = vadd.f32 %v2946, %v3163
      %v3165 = vpop.f32.mrb[0].mxu0
      %3166 = vmatprep.mubr.bf16.mxu0 0
      %3167 = vmatmul.mubr.bf16.gmra.mrb[0].mxu0 %v3009
      %v3168 = vpop.f32.mrb[0].mxu0
      %v3169 = vadd.f32 %v2946, %v3168
      %v3170 = vpop.f32.mrb[0].mxu0
      %v3171 = vpop.f32.mrb[0].mxu0
      %v3172 = vadd.f32 %v2946, %v3171
      %v3173 = vpop.f32.mrb[0].mxu0
      %3174 = vdwg.mxu0
      %v3175 = vadd.f32 %v3049, %v258
      %v3176 = vadd.f32 %v3052, %v259
      %v3177 = vadd.f32 %v3057, %v260
      %v3178 = vadd.f32 %v3060, %v261
      %v3179 = vadd.f32 %v3065, %v262
      %v3180 = vadd.f32 %v3068, %v263
      %v3181 = vadd.f32 %v3073, %v264
      %v3182 = vadd.f32 %v3076, %v265
      %v3183 = vadd.f32 %v3081, %v266
      %v3184 = vadd.f32 %v3084, %v267
      %v3185 = vadd.f32 %v3089, %v268
      %v3186 = vadd.f32 %v3092, %v269
      %v3187 = vadd.f32 %v3097, %v270
      %v3188 = vadd.f32 %v3100, %v271
      %v3189 = vadd.f32 %v3105, %v272
      %v3190 = vadd.f32 %v3108, %v273
      %v3191 = vadd.f32 %v3113, %v274
      %v3192 = vadd.f32 %v3116, %v275
      %v3193 = vadd.f32 %v3121, %v276
      %v3194 = vadd.f32 %v3124, %v277
      %v3195 = vadd.f32 %v3129, %v278
      %v3196 = vadd.f32 %v3132, %v279
      %v3197 = vadd.f32 %v3137, %v280
      %v3198 = vadd.f32 %v3140, %v281
      %v3199 = vadd.f32 %v3145, %v282
      %v3200 = vadd.f32 %v3148, %v283
      %v3201 = vadd.f32 %v3153, %v284
      %v3202 = vadd.f32 %v3156, %v285
      %v3203 = vadd.f32 %v3161, %v286
      %v3204 = vadd.f32 %v3164, %v287
      %v3205 = vadd.f32 %v3169, %v288
      %v3206 = vadd.f32 %v3172, %v289
      %3207 = vst.msk [vmem:[%s224] sm:$0xff] %vm290, %v3175
      %3208 = vst.msk [vmem:[%s224 + $0x8] sm:$0xff] %vm290, %v3176
      %3209 = vst.msk [vmem:[%s224 + $0x10] sm:$0xff] %vm290, %v3177
      %3210 = vst.msk [vmem:[%s224 + $0x18] sm:$0xff] %vm290, %v3178
      %3211 = vst.msk [vmem:[%s224 + $0x20] sm:$0xff] %vm290, %v3179
      %3212 = vst.msk [vmem:[%s224 + $0x28] sm:$0xff] %vm290, %v3180
      %3213 = vst.msk [vmem:[%s224 + $0x30] sm:$0xff] %vm290, %v3181
      %3214 = vst.msk [vmem:[%s224 + $0x38] sm:$0xff] %vm290, %v3182
      %3215 = vst.msk [vmem:[%s224 + $0x40] sm:$0xff] %vm290, %v3183
      %3216 = vst.msk [vmem:[%s224 + $0x48] sm:$0xff] %vm290, %v3184
      %3217 = vst.msk [vmem:[%s224 + $0x50] sm:$0xff] %vm290, %v3185
      %3218 = vst.msk [vmem:[%s224 + $0x58] sm:$0xff] %vm290, %v3186
      %3219 = vst.msk [vmem:[%s224 + $0x60] sm:$0xff] %vm290, %v3187
      %3220 = vst.msk [vmem:[%s224 + $0x68] sm:$0xff] %vm290, %v3188
      %3221 = vst.msk [vmem:[%s224 + $0x70] sm:$0xff] %vm290, %v3189
      %3222 = vst.msk [vmem:[%s224 + $0x78] sm:$0xff] %vm290, %v3190
      %3223 = vst.msk [vmem:[%s224 + $0x80] sm:$0xff] %vm290, %v3191
      %3224 = vst.msk [vmem:[%s224 + $0x88] sm:$0xff] %vm290, %v3192
      %3225 = vst.msk [vmem:[%s224 + $0x90] sm:$0xff] %vm290, %v3193
      %3226 = vst.msk [vmem:[%s224 + $0x98] sm:$0xff] %vm290, %v3194
      %3227 = vst.msk [vmem:[%s224 + $0xa0] sm:$0xff] %vm290, %v3195
      %3228 = vst.msk [vmem:[%s224 + $0xa8] sm:$0xff] %vm290, %v3196
      %3229 = vst.msk [vmem:[%s224 + $0xb0] sm:$0xff] %vm290, %v3197
      %3230 = vst.msk [vmem:[%s224 + $0xb8] sm:$0xff] %vm290, %v3198
      %3231 = vst.msk [vmem:[%s224 + $0xc0] sm:$0xff] %vm290, %v3199
      %3232 = vst.msk [vmem:[%s224 + $0xc8] sm:$0xff] %vm290, %v3200
      %3233 = vst.msk [vmem:[%s224 + $0xd0] sm:$0xff] %vm290, %v3201
      %3234 = vst.msk [vmem:[%s224 + $0xd8] sm:$0xff] %vm290, %v3202
      %3235 = vst.msk [vmem:[%s224 + $0xe0] sm:$0xff] %vm290, %v3203
      %3236 = vst.msk [vmem:[%s224 + $0xe8] sm:$0xff] %vm290, %v3204
      %3237 = vst.msk [vmem:[%s224 + $0xf0] sm:$0xff] %vm290, %v3205
      %3238 = vst.msk [vmem:[%s224 + $0xf8] sm:$0xff] %vm290, %v3206
      %p3239 = scmp.lt.s32.totalorder %s16, 1
      %s3240 = scalar_select %p3239, %s16, 1
      %s3241 = smul.addr %s3240, 32
      %s3242 = smul.addr %s3241, 8
      %s3243 = scalar_lea.vmem %s5, %s3242
      // Predicated region
      $region41: #{tpu_custom_call.1} parent=39 // pred_check
        %p3244 = pneg %p144
      $region42: #{tpu_custom_call.1} parent=39 // pred_check_branch
        %3246 = sbr.rel (%p3244) target = $region44
      $region43: #{tpu_custom_call.1} parent=39 // pred_region
        _
      $region44: #{tpu_custom_call.1} parent=39 // pred_fallthru
        _
    $region40: #{tpu_custom_call.1} parent=5 // pred_fallthru
      _
    %p3247 = scmp.le.s32.totalorder 2, %s11
    // Predicated region
    $region45: #{tpu_custom_call.1} parent=5 // pred_check
      %p3248 = pneg %p3247
    $region46: #{tpu_custom_call.1} parent=5 // pred_check_branch
      %3250 = sbr.rel (%p3248) target = $region48
    $region47: #{tpu_custom_call.1} parent=5 // pred_region
      %s3251 = ssub.s32 %s11, 2
      // Predicated region
      $region49: #{tpu_custom_call.1} parent=47 // pred_check
        %p3252 = pneg %p150
      $region50: #{tpu_custom_call.1} parent=47 // pred_check_branch
        %3254 = sbr.rel (%p3252) target = $region52
      $region51: #{tpu_custom_call.1} parent=47 // pred_region
        %p3255 = scmp.lt.s32.totalorder %s17, 1
        %s3256 = scalar_select %p3255, %s17, 1
        %s3257 = smul.addr %s3256, 32
        %s3258 = smul.addr %s3257, 8
        %s3259 = scalar_lea.vmem %s5, %s3258
      $region52: #{tpu_custom_call.1} parent=47 // pred_fallthru
        _
    $region48: #{tpu_custom_call.1} parent=5 // pred_fallthru
      _
  $region6: #{tpu_custom_call.1} parent=0 // loop_footer
    %s15 = sadd.s32 1, %s11
  $region7: #{tpu_custom_call.1} parent=0 // loop_footer_branch
    %10 = sbr.rel target = $region3
  $region8: #{tpu_custom_call.1} parent=0 // loop_exit
    _

</llo_original>
